<compile_context>
chip_gen: v7x
topology: tpu7x:2x2x1
jax: 0.10.0
libtpu: 0.0.40
codegen_flags: <defaults>
</compile_context>

<pallas_src>
import numpy as np
import jax
import jax.numpy as jnp
from jax import lax
from jax.experimental import pallas as pl
from jax.experimental.pallas import tpu as pltpu


# ----------------------------------------------------------------------------------
# Pallas kernel: fused bilinear-x2 + SAME-pad + 3x3 conv (3 K=3*Cin matmuls) + ReLU
# ----------------------------------------------------------------------------------
def _upsample_conv_relu_kernel(x_ref, w_ref, o_ref, tap_ref):
    """One batch image per grid step.

    x_ref:   (1, H, W, Cin)        float32   low-res input block
    w_ref:   (3, 3*Cin, Cout)      bfloat16  weights, row-tap major (ki, (kj,cin))
    o_ref:   (1, 2H, 2W, Cout)     float32   final output block (raster order)
    tap_ref: (2H+2, 2W, 3*Cin)     bfloat16  scratch: column taps, zero row borders
    """
    _, H, W, Cin = x_ref.shape
    Cout = o_ref.shape[-1]
    Ho, Wo = 2 * H, 2 * W

    x = x_ref[0]                                           # (H, W, Cin) f32

    # ---- bilinear x2 along rows (f32): interleave = pure leading-dim merge. ----
    prev_r = jnp.concatenate([x[:1], x[:H - 1]], axis=0)
    next_r = jnp.concatenate([x[1:], x[H - 1:]], axis=0)
    even_r = 0.75 * x + 0.25 * prev_r                      # upsampled row 2a
    odd_r = 0.75 * x + 0.25 * next_r                       # upsampled row 2a+1
    xr = jnp.stack([even_r, odd_r], axis=1).reshape(Ho, W, Cin)

    # ---- bilinear x2 along cols (f32), then interleave the two column phases
    # ---- in VMEM (single sublane shuffle) -> full upsampled image U, cast bf16.
    prev_c = jnp.concatenate([xr[:, :1], xr[:, :W - 1]], axis=1)
    next_c = jnp.concatenate([xr[:, 1:], xr[:, W - 1:]], axis=1)
    ecol = 0.75 * xr + 0.25 * prev_c                       # output cols 2b
    ocol = 0.75 * xr + 0.25 * next_c                       # output cols 2b+1
    u = jnp.stack([ecol, ocol], axis=2).reshape(Ho, Wo, Cin).astype(jnp.bfloat16)

    # ---- fill tap scratch: [U(:, j-1) | U(:, j) | U(:, j+1)], zero SAME padding.
    zrow = jnp.zeros((1, Wo, 3 * Cin), jnp.bfloat16)
    tap_ref[0:1] = zrow                                    # row halo (top)
    tap_ref[Ho + 1:Ho + 2] = zrow                          # row halo (bottom)
    zcol = jnp.zeros((Ho, 1, Cin), jnp.bfloat16)
    tap_ref[1:Ho + 1, :, 0 * Cin:1 * Cin] = jnp.concatenate([zcol, u[:, :Wo - 1]], axis=1)
    tap_ref[1:Ho + 1, :, 1 * Cin:2 * Cin] = u
    tap_ref[1:Ho + 1, :, 2 * Cin:3 * Cin] = jnp.concatenate([u[:, 1:], zcol], axis=1)

    # ---- 3 accumulating MXU matmuls: M = Ho*Wo, K = 3*Cin, N = Cout (f32 acc).
    # (Ho*Wo leading-dim merge is layout-free when Wo % 8 == 0.)
    acc = jnp.dot(tap_ref[0:Ho].reshape(Ho * Wo, 3 * Cin), w_ref[0],
                  preferred_element_type=jnp.float32)
    acc = acc + jnp.dot(tap_ref[1:Ho + 1].reshape(Ho * Wo, 3 * Cin), w_ref[1],
                        preferred_element_type=jnp.float32)
    acc = acc + jnp.dot(tap_ref[2:Ho + 2].reshape(Ho * Wo, 3 * Cin), w_ref[2],
                        preferred_element_type=jnp.float32)

    # ---- ReLU + store: result is already in raster (i, j) order. ----
    o_ref[...] = jnp.maximum(acc, 0.0).reshape(1, Ho, Wo, Cout)


# ----------------------------------------------------------------------------------
# Wrapper
# ----------------------------------------------------------------------------------
@jax.jit
def upsample_conv_relu(x, w_hwio):
    """UpSampleConvReLU forward (scale_factor=2, stride=1):
    bilinear x2 (align_corners=False) -> conv3x3(pad=1, bias=False) -> ReLU.
    x: (B, H, W, Cin) NHWC float32;  w_hwio: (3, 3, Cin, Cout) float32."""
    B, H, W, Cin = x.shape
    Cout = w_hwio.shape[-1]
    Ho, Wo = 2 * H, 2 * W
    w_mat = w_hwio.reshape(3, 3 * Cin, Cout).astype(jnp.bfloat16)

    return pl.pallas_call(
        _upsample_conv_relu_kernel,
        out_shape=jax.ShapeDtypeStruct((B, Ho, Wo, Cout), jnp.float32),
        grid=(B,),                                   # batch: pipelined + megacore axis
        in_specs=[
            pl.BlockSpec((1, H, W, Cin), lambda b: (b, 0, 0, 0)),
            pl.BlockSpec((3, 3 * Cin, Cout), lambda b: (0, 0, 0)),   # weights resident
        ],
        out_specs=pl.BlockSpec((1, Ho, Wo, Cout), lambda b: (b, 0, 0, 0)),
        scratch_shapes=[pltpu.VMEM((Ho + 2, Wo, 3 * Cin), jnp.bfloat16)],
        compiler_params=pltpu.CompilerParams(
            dimension_semantics=("parallel",),
            vmem_limit_bytes=32 * 1024 * 1024,       # safe on v5e/v6e/v7x; blocks are ~1.5 MiB
        ),
    )(x, w_mat)


# ----------------------------------------------------------------------------------
# Pure-JAX reference (exact bilinear x2 + lax.conv) for the correctness check
# ----------------------------------------------------------------------------------
def _upsample2_along(x, axis):
    n = x.shape[axis]
    first = lax.slice_in_dim(x, 0, 1, axis=axis)
    last = lax.slice_in_dim(x, n - 1, n, axis=axis)
    prev = jnp.concatenate([first, lax.slice_in_dim(x, 0, n - 1, axis=axis)], axis=axis)
    nxt = jnp.concatenate([lax.slice_in_dim(x, 1, n, axis=axis), last], axis=axis)
    even = 0.75 * x + 0.25 * prev
    odd = 0.75 * x + 0.25 * nxt
    out = jnp.stack([even, odd], axis=axis + 1)
    return out.reshape(x.shape[:axis] + (2 * n,) + x.shape[axis + 1:])


def upsample_conv_relu_ref(x, w_hwio):
    up = _upsample2_along(_upsample2_along(x, 1), 2)
    y = lax.conv_general_dilated(
        up, w_hwio, (1, 1), 'SAME',
        dimension_numbers=('NHWC', 'HWIO', 'NHWC'),
        precision=lax.Precision.HIGHEST)
    return jnp.maximum(y, 0.0)


if __name__ == "__main__":
    key = jax.random.PRNGKey(0)
    kx, kw = jax.random.split(key)
    B, H, W, Cin, Cout = 2, 8, 8, 128, 128
    x = jax.random.normal(kx, (B, H, W, Cin), jnp.float32)
    w = jax.random.normal(kw, (3, 3, Cin, Cout), jnp.float32) / np.sqrt(9 * Cin)

    out = jax.block_until_ready(upsample_conv_relu(x, w))
    assert out.shape == (B, 2 * H, 2 * W, Cout) and out.dtype == jnp.float32

    ref = jax.block_until_ready(upsample_conv_relu_ref(x, w))
    np.testing.assert_allclose(np.asarray(out), np.asarray(ref), rtol=5e-2, atol=5e-2)

    print("KERNEL_OK")
</pallas_src>

<mosaic_0001>
module attributes {stable_mosaic.version = 11 : i64} {
  func.func @_upsample_conv_relu_kernel(%arg0: i32, %arg1: memref<1x8x8x128xf32, #tpu.memory_space<vmem>>, %arg2: memref<3x384x128xbf16, #tpu.memory_space<vmem>>, %arg3: memref<1x16x16x128xf32, #tpu.memory_space<vmem>>, %arg4: memref<18x16x384xbf16, #tpu.memory_space<vmem>>) attributes {dimension_semantics = [#tpu.dimension_semantics<parallel>], iteration_bounds = array<i64: 2>, scalar_prefetch = 0 : i64, scratch_operands = 1 : i64, tpu.core_type = #tpu.core_type<tc>, window_params = [{transform_indices = @transform_0, window_bounds = array<i64: 1, 8, 8, 128>}, {pipeline_mode = #tpu.pipeline_mode<synchronous>, transform_indices = @transform_1, window_bounds = array<i64: 3, 384, 128>}, {transform_indices = @transform_2, window_bounds = array<i64: 1, 16, 16, 128>}]} {
    %c0 = arith.constant 0 : index
    %c0_0 = arith.constant 0 : index
    %c0_1 = arith.constant 0 : index
    %c0_2 = arith.constant 0 : index
    %0 = vector.load %arg1[%c0, %c0_0, %c0_1, %c0_2] : memref<1x8x8x128xf32, #tpu.memory_space<vmem>>, vector<1x8x8x128xf32>
    %1 = vector.shape_cast %0 : vector<1x8x8x128xf32> to vector<8x8x128xf32>
    %2 = vector.extract_strided_slice %1 {offsets = [0, 0, 0], sizes = [1, 8, 128], strides = [1, 1, 1]} : vector<8x8x128xf32> to vector<1x8x128xf32>
    %3 = vector.extract_strided_slice %1 {offsets = [0, 0, 0], sizes = [7, 8, 128], strides = [1, 1, 1]} : vector<8x8x128xf32> to vector<7x8x128xf32>
    %4 = tpu.concatenate %2, %3 in 0 : vector<1x8x128xf32>, vector<7x8x128xf32> -> vector<8x8x128xf32>
    %5 = vector.extract_strided_slice %1 {offsets = [1, 0, 0], sizes = [7, 8, 128], strides = [1, 1, 1]} : vector<8x8x128xf32> to vector<7x8x128xf32>
    %6 = vector.extract_strided_slice %1 {offsets = [7, 0, 0], sizes = [1, 8, 128], strides = [1, 1, 1]} : vector<8x8x128xf32> to vector<1x8x128xf32>
    %7 = tpu.concatenate %5, %6 in 0 : vector<7x8x128xf32>, vector<1x8x128xf32> -> vector<8x8x128xf32>
    %cst = arith.constant 7.500000e-01 : f32
    %8 = vector.broadcast %cst : f32 to vector<8x8x128xf32>
    %9 = arith.mulf %8, %1 : vector<8x8x128xf32>
    %cst_3 = arith.constant 2.500000e-01 : f32
    %10 = vector.broadcast %cst_3 : f32 to vector<8x8x128xf32>
    %11 = arith.mulf %10, %4 : vector<8x8x128xf32>
    %12 = arith.addf %9, %11 : vector<8x8x128xf32>
    %cst_4 = arith.constant 7.500000e-01 : f32
    %13 = vector.broadcast %cst_4 : f32 to vector<8x8x128xf32>
    %14 = arith.mulf %13, %1 : vector<8x8x128xf32>
    %cst_5 = arith.constant 2.500000e-01 : f32
    %15 = vector.broadcast %cst_5 : f32 to vector<8x8x128xf32>
    %16 = arith.mulf %15, %7 : vector<8x8x128xf32>
    %17 = arith.addf %14, %16 : vector<8x8x128xf32>
    %18 = vector.shape_cast %12 : vector<8x8x128xf32> to vector<8x1x8x128xf32>
    %19 = vector.shape_cast %17 : vector<8x8x128xf32> to vector<8x1x8x128xf32>
    %20 = tpu.concatenate %18, %19 in 1 : vector<8x1x8x128xf32>, vector<8x1x8x128xf32> -> vector<8x2x8x128xf32>
    %21 = vector.shape_cast %20 : vector<8x2x8x128xf32> to vector<16x8x128xf32>
    %22 = vector.extract_strided_slice %21 {offsets = [0, 0, 0], sizes = [16, 1, 128], strides = [1, 1, 1]} : vector<16x8x128xf32> to vector<16x1x128xf32>
    %23 = vector.extract_strided_slice %21 {offsets = [0, 0, 0], sizes = [16, 7, 128], strides = [1, 1, 1]} : vector<16x8x128xf32> to vector<16x7x128xf32>
    %24 = tpu.concatenate %22, %23 in 1 : vector<16x1x128xf32>, vector<16x7x128xf32> -> vector<16x8x128xf32>
    %25 = vector.extract_strided_slice %21 {offsets = [0, 1, 0], sizes = [16, 7, 128], strides = [1, 1, 1]} : vector<16x8x128xf32> to vector<16x7x128xf32>
    %26 = vector.extract_strided_slice %21 {offsets = [0, 7, 0], sizes = [16, 1, 128], strides = [1, 1, 1]} : vector<16x8x128xf32> to vector<16x1x128xf32>
    %27 = tpu.concatenate %25, %26 in 1 : vector<16x7x128xf32>, vector<16x1x128xf32> -> vector<16x8x128xf32>
    %cst_6 = arith.constant 7.500000e-01 : f32
    %28 = vector.broadcast %cst_6 : f32 to vector<16x8x128xf32>
    %29 = arith.mulf %28, %21 : vector<16x8x128xf32>
    %cst_7 = arith.constant 2.500000e-01 : f32
    %30 = vector.broadcast %cst_7 : f32 to vector<16x8x128xf32>
    %31 = arith.mulf %30, %24 : vector<16x8x128xf32>
    %32 = arith.addf %29, %31 : vector<16x8x128xf32>
    %cst_8 = arith.constant 7.500000e-01 : f32
    %33 = vector.broadcast %cst_8 : f32 to vector<16x8x128xf32>
    %34 = arith.mulf %33, %21 : vector<16x8x128xf32>
    %cst_9 = arith.constant 2.500000e-01 : f32
    %35 = vector.broadcast %cst_9 : f32 to vector<16x8x128xf32>
    %36 = arith.mulf %35, %27 : vector<16x8x128xf32>
    %37 = arith.addf %34, %36 : vector<16x8x128xf32>
    %38 = vector.shape_cast %32 : vector<16x8x128xf32> to vector<16x8x1x128xf32>
    %39 = vector.shape_cast %37 : vector<16x8x128xf32> to vector<16x8x1x128xf32>
    %40 = tpu.concatenate %38, %39 in 2 : vector<16x8x1x128xf32>, vector<16x8x1x128xf32> -> vector<16x8x2x128xf32>
    %41 = vector.shape_cast %40 : vector<16x8x2x128xf32> to vector<16x16x128xf32>
    %42 = arith.truncf %41 : vector<16x16x128xf32> to vector<16x16x128xbf16>
    %cst_10 = arith.constant 0.000000e+00 : bf16
    %43 = vector.broadcast %cst_10 : bf16 to vector<1x16x384xbf16>
    %c0_11 = arith.constant 0 : index
    %c0_12 = arith.constant 0 : index
    %c0_13 = arith.constant 0 : index
    %44 = vector.load %arg4[%c0_11, %c0_12, %c0_13] : memref<18x16x384xbf16, #tpu.memory_space<vmem>>, vector<1x16x384xbf16>
    tpu.vector_store %arg4[%c0_11, %c0_12, %c0_13], %43 {strides = array<i32>} : memref<18x16x384xbf16, #tpu.memory_space<vmem>>, vector<1x16x384xbf16>,
    %c17 = arith.constant 17 : index
    %c0_14 = arith.constant 0 : index
    %c0_15 = arith.constant 0 : index
    %45 = vector.load %arg4[%c17, %c0_14, %c0_15] : memref<18x16x384xbf16, #tpu.memory_space<vmem>>, vector<1x16x384xbf16>
    tpu.vector_store %arg4[%c17, %c0_14, %c0_15], %43 {strides = array<i32>} : memref<18x16x384xbf16, #tpu.memory_space<vmem>>, vector<1x16x384xbf16>,
    %cst_16 = arith.constant 0.000000e+00 : bf16
    %46 = vector.broadcast %cst_16 : bf16 to vector<16x1x128xbf16>
    %47 = vector.extract_strided_slice %42 {offsets = [0, 0, 0], sizes = [16, 15, 128], strides = [1, 1, 1]} : vector<16x16x128xbf16> to vector<16x15x128xbf16>
    %48 = tpu.concatenate %46, %47 in 1 : vector<16x1x128xbf16>, vector<16x15x128xbf16> -> vector<16x16x128xbf16>
    %c1 = arith.constant 1 : index
    %c0_17 = arith.constant 0 : index
    %c0_18 = arith.constant 0 : index
    %49 = vector.load %arg4[%c1, %c0_17, %c0_18] : memref<18x16x384xbf16, #tpu.memory_space<vmem>>, vector<16x16x128xbf16>
    tpu.vector_store %arg4[%c1, %c0_17, %c0_18], %48 {strides = array<i32>} : memref<18x16x384xbf16, #tpu.memory_space<vmem>>, vector<16x16x128xbf16>,
    %c1_19 = arith.constant 1 : index
    %c0_20 = arith.constant 0 : index
    %c128 = arith.constant 128 : index
    %50 = vector.load %arg4[%c1_19, %c0_20, %c128] : memref<18x16x384xbf16, #tpu.memory_space<vmem>>, vector<16x16x128xbf16>
    tpu.vector_store %arg4[%c1_19, %c0_20, %c128], %42 {strides = array<i32>} : memref<18x16x384xbf16, #tpu.memory_space<vmem>>, vector<16x16x128xbf16>,
    %51 = vector.extract_strided_slice %42 {offsets = [0, 1, 0], sizes = [16, 15, 128], strides = [1, 1, 1]} : vector<16x16x128xbf16> to vector<16x15x128xbf16>
    %52 = tpu.concatenate %51, %46 in 1 : vector<16x15x128xbf16>, vector<16x1x128xbf16> -> vector<16x16x128xbf16>
    %c1_21 = arith.constant 1 : index
    %c0_22 = arith.constant 0 : index
    %c256 = arith.constant 256 : index
    %53 = vector.load %arg4[%c1_21, %c0_22, %c256] : memref<18x16x384xbf16, #tpu.memory_space<vmem>>, vector<16x16x128xbf16>
    tpu.vector_store %arg4[%c1_21, %c0_22, %c256], %52 {strides = array<i32>} : memref<18x16x384xbf16, #tpu.memory_space<vmem>>, vector<16x16x128xbf16>,
    %c0_23 = arith.constant 0 : index
    %c0_24 = arith.constant 0 : index
    %c0_25 = arith.constant 0 : index
    %54 = vector.load %arg4[%c0_23, %c0_24, %c0_25] : memref<18x16x384xbf16, #tpu.memory_space<vmem>>, vector<16x16x384xbf16>
    %55 = vector.shape_cast %54 : vector<16x16x384xbf16> to vector<256x384xbf16>
    %c0_26 = arith.constant 0 : index
    %c0_27 = arith.constant 0 : index
    %c0_28 = arith.constant 0 : index
    %56 = vector.load %arg2[%c0_26, %c0_27, %c0_28] : memref<3x384x128xbf16, #tpu.memory_space<vmem>>, vector<1x384x128xbf16>
    %57 = vector.shape_cast %56 : vector<1x384x128xbf16> to vector<384x128xbf16>
    %cst_29 = arith.constant dense<0.000000e+00> : vector<256x128xf32>
    %58 = tpu.matmul %55, %57, %cst_29 {dimension_numbers = #tpu.dot_dimension_numbers<[1], [0], [0], [1], [0, 0, 1, 1], [], []>} : vector<256x384xbf16>, vector<384x128xbf16>, vector<256x128xf32> -> vector<256x128xf32>
    %c1_30 = arith.constant 1 : index
    %c0_31 = arith.constant 0 : index
    %c0_32 = arith.constant 0 : index
    %59 = vector.load %arg4[%c1_30, %c0_31, %c0_32] : memref<18x16x384xbf16, #tpu.memory_space<vmem>>, vector<16x16x384xbf16>
    %60 = vector.shape_cast %59 : vector<16x16x384xbf16> to vector<256x384xbf16>
    %c1_33 = arith.constant 1 : index
    %c0_34 = arith.constant 0 : index
    %c0_35 = arith.constant 0 : index
    %61 = vector.load %arg2[%c1_33, %c0_34, %c0_35] : memref<3x384x128xbf16, #tpu.memory_space<vmem>>, vector<1x384x128xbf16>
    %62 = vector.shape_cast %61 : vector<1x384x128xbf16> to vector<384x128xbf16>
    %cst_36 = arith.constant dense<0.000000e+00> : vector<256x128xf32>
    %63 = tpu.matmul %60, %62, %cst_36 {dimension_numbers = #tpu.dot_dimension_numbers<[1], [0], [0], [1], [0, 0, 1, 1], [], []>} : vector<256x384xbf16>, vector<384x128xbf16>, vector<256x128xf32> -> vector<256x128xf32>
    %64 = arith.addf %58, %63 : vector<256x128xf32>
    %c2 = arith.constant 2 : index
    %c0_37 = arith.constant 0 : index
    %c0_38 = arith.constant 0 : index
    %65 = vector.load %arg4[%c2, %c0_37, %c0_38] : memref<18x16x384xbf16, #tpu.memory_space<vmem>>, vector<16x16x384xbf16>
    %66 = vector.shape_cast %65 : vector<16x16x384xbf16> to vector<256x384xbf16>
    %c2_39 = arith.constant 2 : index
    %c0_40 = arith.constant 0 : index
    %c0_41 = arith.constant 0 : index
    %67 = vector.load %arg2[%c2_39, %c0_40, %c0_41] : memref<3x384x128xbf16, #tpu.memory_space<vmem>>, vector<1x384x128xbf16>
    %68 = vector.shape_cast %67 : vector<1x384x128xbf16> to vector<384x128xbf16>
    %cst_42 = arith.constant dense<0.000000e+00> : vector<256x128xf32>
    %69 = tpu.matmul %66, %68, %cst_42 {dimension_numbers = #tpu.dot_dimension_numbers<[1], [0], [0], [1], [0, 0, 1, 1], [], []>} : vector<256x384xbf16>, vector<384x128xbf16>, vector<256x128xf32> -> vector<256x128xf32>
    %70 = arith.addf %64, %69 : vector<256x128xf32>
    %cst_43 = arith.constant 0.000000e+00 : f32
    %71 = vector.broadcast %cst_43 : f32 to vector<256x128xf32>
    %72 = arith.maximumf %70, %71 : vector<256x128xf32>
    %73 = vector.shape_cast %72 : vector<256x128xf32> to vector<1x16x16x128xf32>
    %c0_44 = arith.constant 0 : index
    %c0_45 = arith.constant 0 : index
    %c0_46 = arith.constant 0 : index
    %c0_47 = arith.constant 0 : index
    %74 = vector.load %arg3[%c0_44, %c0_45, %c0_46, %c0_47] : memref<1x16x16x128xf32, #tpu.memory_space<vmem>>, vector<1x16x16x128xf32>
    tpu.vector_store %arg3[%c0_44, %c0_45, %c0_46, %c0_47], %73 {strides = array<i32>} : memref<1x16x16x128xf32, #tpu.memory_space<vmem>>, vector<1x16x16x128xf32>,
    return
  }
  func.func @transform_0(%arg0: i32) -> (i32, i32, i32, i32) {
    %c0_i32 = arith.constant 0 : i32
    %c0_i32_0 = arith.constant 0 : i32
    %c0_i32_1 = arith.constant 0 : i32
    %c0_i32_2 = arith.constant 0 : i32
    return %arg0, %c0_i32, %c0_i32_0, %c0_i32_1 : i32, i32, i32, i32
  }
  func.func @transform_1(%arg0: i32) -> (i32, i32, i32) {
    %c0_i32 = arith.constant 0 : i32
    %c0_i32_0 = arith.constant 0 : i32
    %c0_i32_1 = arith.constant 0 : i32
    %c0_i32_2 = arith.constant 0 : i32
    return %c0_i32, %c0_i32_0, %c0_i32_1 : i32, i32, i32
  }
  func.func @transform_2(%arg0: i32) -> (i32, i32, i32, i32) {
    %c0_i32 = arith.constant 0 : i32
    %c0_i32_0 = arith.constant 0 : i32
    %c0_i32_1 = arith.constant 0 : i32
    %c0_i32_2 = arith.constant 0 : i32
    return %arg0, %c0_i32, %c0_i32_0, %c0_i32_1 : i32, i32, i32, i32
  }
}

</mosaic_0001>

<llo_original>
// kernel: upsample_conv_relu.1
$region0: #{upsample_conv_relu.1}
  #allocation0 [shape = 'u32[]', space=smem, size = 0x4, offset = 0x4, fixed_abs, tag = 'smem constant byte address 0x4 - core index']
  #allocation1 [shape = 'u32[144,128]{1,0:T(1,128)}', space=vmem, size = 0x12000, scoped, tag = 'internal scratch']
  #allocation2 [shape = 'bf16[18,16,384]{2,1,0:T(16,128)(2,1)}', space=vmem, size = 0x36000, scoped, tag = 'scratch operand']
  %s0 = inlined_call_operand.vmem [shape: f32[2,8,8,128], index: 0, kind: input, shape index: {}]
  %s1 = inlined_call_operand.vmem [shape: bf16[3,384,128], index: 1, kind: input, shape index: {}]
  %s2 = inlined_call_operand.hbm [shape: f32[2,16,16,128], index: 2, kind: output, shape index: {}]
  %s3 = sld [smem:[#allocation0]]
  $region41: #{upsample_conv_relu.1} parent=0
    _
  %s5 = ssub.s32 1, %s3
  %s6 = scalar_select 0, %s5, %s3
  $region1: #{upsample_conv_relu.1} parent=0
    #allocation3 [shape = 'u8[262144]{0}', space=vmem, size = 0x40000, scoped, tag = 'output window, operand 0']
    #allocation4 [shape = 's32[2]{0}', space=sflag, size = 0x8, scoped, tag = 'scoped memory for upsample_conv_relu.1']
    %7 = vsyncpa [#allocation4], 0
    %s8 = scalar_lea.sflag [#allocation4], 1
    %9 = vsyncpa %s8, 0
    loop: start=0, step=1, limit=4
    $region2: #{upsample_conv_relu.1} parent=1 // loop_pre_header
      _
    $region3: #{upsample_conv_relu.1} parent=1 // loop_header
      %s11 = sphi 0, %s15
      %p12 = scmp.ge.s32.totalorder %s11, 4
      %s21 = sphi 0, %s23
      %s24 = sphi 0, %s21
      %s25 = sphi 0, %s24
      %s41 = sphi 0, %s25
      %s45 = sphi 0, %s45
      %s47 = sphi 0, %s45
      %s48 = sphi 0, %s47
      %s62 = sphi 0, %s48
      %s68 = sphi 0, %s70
      %s71 = sphi 0, %s68
      %s72 = sphi 0, %s71
      %s88 = sphi 0, %s72
    $region4: #{upsample_conv_relu.1} parent=1 // loop_header_branch
      %14 = sbr.rel (%p12) target = $region8
    $region5: #{upsample_conv_relu.1} parent=1 // loop_body
      %s16 = ssub.s32 %s11, 1
      %s17 = ssub.s32 %s11, 2
      %s18 = sadd.s32 %s11, 1
      %s19 = ssub.s32 %s11, %s18
      %p20 = scmp.eq.s32.totalorder %s19, 0
      %s22 = sadd.s32 %s21, 1
      %s23 = scalar_select %p20, %s21, %s22
      %p26 = pneg %p20
      %p27 = scmp.eq.s32.totalorder %s11, 1
      %p28 = por %p26, %p27
      %p29 = scmp.ne.s32.totalorder %s21, %s24
      %p30 = scmp.eq.s32.totalorder %s11, 0
      %p31 = por %p29, %p30
      %p32 = scmp.ne.s32.totalorder %s21, %s24
      %p33 = scmp.eq.s32.totalorder %s16, 1
      %p34 = por %p32, %p33
      %p35 = scmp.ne.s32.totalorder %s24, %s25
      %p36 = scmp.eq.s32.totalorder %s16, 0
      %p37 = por %p35, %p36
      %p38 = scmp.ne.s32.totalorder %s24, %s25
      %p39 = scmp.eq.s32.totalorder %s17, 1
      %p40 = por %p38, %p39
      %p42 = scmp.ne.s32.totalorder %s25, %s41
      %p43 = scmp.eq.s32.totalorder %s17, 0
      %p44 = por %p42, %p43
      %s46 = sadd.s32 %s45, 1
      %p49 = scmp.eq.s32.totalorder %s11, 1
      %p50 = scmp.ne.s32.totalorder %s45, %s47
      %p51 = scmp.eq.s32.totalorder %s11, 0
      %p52 = por %p50, %p51
      %p53 = scmp.ne.s32.totalorder %s45, %s47
      %p54 = scmp.eq.s32.totalorder %s16, 1
      %p55 = por %p53, %p54
      %p56 = scmp.ne.s32.totalorder %s47, %s48
      %p57 = scmp.eq.s32.totalorder %s16, 0
      %p58 = por %p56, %p57
      %p59 = scmp.ne.s32.totalorder %s47, %s48
      %p60 = scmp.eq.s32.totalorder %s17, 1
      %p61 = por %p59, %p60
      %p63 = scmp.ne.s32.totalorder %s48, %s62
      %p64 = scmp.eq.s32.totalorder %s17, 0
      %p65 = por %p63, %p64
      %s66 = ssub.s32 %s11, %s18
      %p67 = scmp.eq.s32.totalorder %s66, 0
      %s69 = sadd.s32 %s68, 1
      %s70 = scalar_select %p67, %s68, %s69
      %p73 = pneg %p67
      %p74 = scmp.eq.s32.totalorder %s11, 1
      %p75 = por %p73, %p74
      %p76 = scmp.ne.s32.totalorder %s68, %s71
      %p77 = scmp.eq.s32.totalorder %s11, 0
      %p78 = por %p76, %p77
      %p79 = scmp.ne.s32.totalorder %s68, %s71
      %p80 = scmp.eq.s32.totalorder %s16, 1
      %p81 = por %p79, %p80
      %p82 = scmp.ne.s32.totalorder %s71, %s72
      %p83 = scmp.eq.s32.totalorder %s16, 0
      %p84 = por %p82, %p83
      %p85 = scmp.ne.s32.totalorder %s71, %s72
      %p86 = scmp.eq.s32.totalorder %s17, 1
      %p87 = por %p85, %p86
      %p89 = scmp.ne.s32.totalorder %s72, %s88
      %p90 = scmp.eq.s32.totalorder %s17, 0
      %p91 = por %p89, %p90
      %p92 = scmp.le.s32.totalorder 1, %s11
      %p93 = scmp.lt.s32.totalorder %s11, 3
      %p94 = pnand %p92, %p93
      %p95 = pneg %p94
      // Predicated region
      $region9: #{upsample_conv_relu.1} parent=5 // pred_check
        _
      $region10: #{upsample_conv_relu.1} parent=5 // pred_check_branch
        %97 = sbr.rel (%p94) target = $region12
      $region11: #{upsample_conv_relu.1} parent=5 // pred_region
        %s98 = ssub.s32 %s11, 1
        // Predicated region
        $region13: #{upsample_conv_relu.1} parent=11 // pred_check
          %p99 = pneg %p58
        $region14: #{upsample_conv_relu.1} parent=11 // pred_check_branch
          %101 = sbr.rel (%p99) target = $region16
        $region15: #{upsample_conv_relu.1} parent=11 // pred_region
          _
        $region16: #{upsample_conv_relu.1} parent=11 // pred_fallthru
          _
      $region12: #{upsample_conv_relu.1} parent=5 // pred_fallthru
        _
      %p102 = scmp.lt.s32.totalorder %s11, 2
      // Predicated region
      $region17: #{upsample_conv_relu.1} parent=5 // pred_check
        %p103 = pneg %p102
      $region18: #{upsample_conv_relu.1} parent=5 // pred_check_branch
        %105 = sbr.rel (%p103) target = $region20
      $region19: #{upsample_conv_relu.1} parent=5 // pred_region
        // Predicated region
        $region21: #{upsample_conv_relu.1} parent=19 // pred_check
          %p106 = pneg %p31
        $region22: #{upsample_conv_relu.1} parent=19 // pred_check_branch
          %108 = sbr.rel (%p106) target = $region24
        $region23: #{upsample_conv_relu.1} parent=19 // pred_region
          %p109 = scmp.lt.s32.totalorder %s11, 1
          %s110 = scalar_select %p109, %s11, 1
          %s111 = smul.addr %s110, 8
          %s112 = smul.addr %s111, 8
          %s113 = scalar_lea.vmem %s0, %s112
        $region24: #{upsample_conv_relu.1} parent=19 // pred_fallthru
          _
      $region20: #{upsample_conv_relu.1} parent=5 // pred_fallthru
        _
      %p114 = scmp.le.s32.totalorder 1, %s11
      %p115 = scmp.lt.s32.totalorder %s11, 3
      %p116 = pnand %p114, %p115
      %p117 = pneg %p116
      // Predicated region
      $region25: #{upsample_conv_relu.1} parent=5 // pred_check
        _
      $region26: #{upsample_conv_relu.1} parent=5 // pred_check_branch
        %119 = sbr.rel (%p116) target = $region28
      $region27: #{upsample_conv_relu.1} parent=5 // pred_region
        %s120 = ssub.s32 %s11, 1
        %p121 = scmp.lt.s32.totalorder %s16, 1
        %s122 = scalar_select %p121, %s16, 1
        %s123 = smul.addr %s122, 8
        %s124 = smul.addr %s123, 8
        %s125 = scalar_lea.vmem %s0, %s124
        %p126 = pneg %p37
        %p127 = pneg %p34
        %p128 = pneg %p58
        %p129 = pneg %p55
        %p130 = pneg %p84
        %p131 = pneg %p81
        %s132 = sand.u32 %s71, 1
        %s133 = scalar_lea.sflag [#allocation4], %s132
        %s134 = sand.u32 %s71, 1
        %s135 = smul.addr %s134, 256
        %s136 = scalar_lea.vmem [#allocation3], %s135
        %p137 = scmp.lt.s32.totalorder %s16, 1
        %s138 = scalar_select %p137, %s16, 1
        %s139 = smul.addr %s138, 8
        %s140 = smul.addr %s139, 8
        %s141 = scalar_lea.vmem %s0, %s140
        %v143 = vld [vmem:[%s141] sm:$0xff]
        %v144 = vld [vmem:[%s141 + $0x8] sm:$0xff]
        %v145 = vld [vmem:[%s141 + $0x10] sm:$0xff]
        %v146 = vld [vmem:[%s141 + $0x18] sm:$0xff]
        %v147 = vld [vmem:[%s141 + $0x20] sm:$0xff]
        %v148 = vld [vmem:[%s141 + $0x28] sm:$0xff]
        %v149 = vld [vmem:[%s141 + $0x30] sm:$0xff]
        %v150 = vld [vmem:[%s141 + $0x38] sm:$0xff]
        %v151 = vmul.f32 %v143, 0.75
        %v152 = vmul.f32 %v144, 0.75
        %v153 = vmul.f32 %v145, 0.75
        %v154 = vmul.f32 %v146, 0.75
        %v155 = vmul.f32 %v147, 0.75
        %v156 = vmul.f32 %v148, 0.75
        %v157 = vmul.f32 %v149, 0.75
        %v158 = vmul.f32 %v150, 0.75
        %v159 = vmul.f32 %v143, 0.25
        %v160 = vmul.f32 %v144, 0.25
        %v161 = vmul.f32 %v145, 0.25
        %v162 = vmul.f32 %v146, 0.25
        %v163 = vmul.f32 %v147, 0.25
        %v164 = vmul.f32 %v148, 0.25
        %v165 = vmul.f32 %v149, 0.25
        %v166 = vadd.f32 %v151, %v159
        %v167 = vadd.f32 %v152, %v159
        %v168 = vadd.f32 %v153, %v160
        %v169 = vadd.f32 %v154, %v161
        %v170 = vadd.f32 %v155, %v162
        %v171 = vadd.f32 %v156, %v163
        %v172 = vadd.f32 %v157, %v164
        %v173 = vadd.f32 %v158, %v165
        %v174 = vmul.f32 %v150, 0.25
        %v175 = vadd.f32 %v151, %v160
        %v176 = vadd.f32 %v152, %v161
        %v177 = vadd.f32 %v153, %v162
        %v178 = vadd.f32 %v154, %v163
        %v179 = vadd.f32 %v155, %v164
        %v180 = vadd.f32 %v156, %v165
        %v181 = vadd.f32 %v157, %v174
        %v182 = vadd.f32 %v158, %v174
        %v199 = vrot.slane %v166, 7
        %v200 = vrot.slane %v175, 7
        %v201 = vrot.slane %v167, 7
        %v202 = vrot.slane %v176, 7
        %v203 = vrot.slane %v168, 7
        %v204 = vrot.slane %v177, 7
        %v205 = vrot.slane %v169, 7
        %v206 = vrot.slane %v178, 7
        %v207 = vrot.slane %v170, 7
        %v208 = vrot.slane %v179, 7
        %v209 = vrot.slane %v171, 7
        %v210 = vrot.slane %v180, 7
        %v211 = vrot.slane %v172, 7
        %v212 = vrot.slane %v181, 7
        %v213 = vrot.slane %v173, 7
        %v214 = vrot.slane %v182, 7
        %vm231 = vcmask 1040384
        %v232 = vsel %vm231, %v166, %v199
        %v233 = vsel %vm231, %v175, %v200
        %v234 = vsel %vm231, %v167, %v201
        %v235 = vsel %vm231, %v176, %v202
        %v236 = vsel %vm231, %v168, %v203
        %v237 = vsel %vm231, %v177, %v204
        %v238 = vsel %vm231, %v169, %v205
        %v239 = vsel %vm231, %v178, %v206
        %v240 = vsel %vm231, %v170, %v207
        %v241 = vsel %vm231, %v179, %v208
        %v242 = vsel %vm231, %v171, %v209
        %v243 = vsel %vm231, %v180, %v210
        %v244 = vsel %vm231, %v172, %v211
        %v245 = vsel %vm231, %v181, %v212
        %v246 = vsel %vm231, %v173, %v213
        %v247 = vsel %vm231, %v182, %v214
        %v248 = vrot.slane %v166, 1
        %v249 = vrot.slane %v175, 1
        %v250 = vrot.slane %v167, 1
        %v251 = vrot.slane %v176, 1
        %v252 = vrot.slane %v168, 1
        %v253 = vrot.slane %v177, 1
        %v254 = vrot.slane %v169, 1
        %v255 = vrot.slane %v178, 1
        %v256 = vrot.slane %v170, 1
        %v257 = vrot.slane %v179, 1
        %v258 = vrot.slane %v171, 1
        %v259 = vrot.slane %v180, 1
        %v260 = vrot.slane %v172, 1
        %v261 = vrot.slane %v181, 1
        %v262 = vrot.slane %v173, 1
        %v263 = vrot.slane %v182, 1
        %vm280 = vcmask 1046528
        %v281 = vsel %vm280, %v248, %v166
        %v282 = vsel %vm280, %v249, %v175
        %v283 = vsel %vm280, %v250, %v167
        %v284 = vsel %vm280, %v251, %v176
        %v285 = vsel %vm280, %v252, %v168
        %v286 = vsel %vm280, %v253, %v177
        %v287 = vsel %vm280, %v254, %v169
        %v288 = vsel %vm280, %v255, %v178
        %v289 = vsel %vm280, %v256, %v170
        %v290 = vsel %vm280, %v257, %v179
        %v291 = vsel %vm280, %v258, %v171
        %v292 = vsel %vm280, %v259, %v180
        %v293 = vsel %vm280, %v260, %v172
        %v294 = vsel %vm280, %v261, %v181
        %v295 = vsel %vm280, %v262, %v173
        %v296 = vsel %vm280, %v263, %v182
        %v297 = vmul.f32 %v166, 0.75
        %v298 = vmul.f32 %v175, 0.75
        %v299 = vmul.f32 %v167, 0.75
        %v300 = vmul.f32 %v176, 0.75
        %v301 = vmul.f32 %v168, 0.75
        %v302 = vmul.f32 %v177, 0.75
        %v303 = vmul.f32 %v169, 0.75
        %v304 = vmul.f32 %v178, 0.75
        %v305 = vmul.f32 %v170, 0.75
        %v306 = vmul.f32 %v179, 0.75
        %v307 = vmul.f32 %v171, 0.75
        %v308 = vmul.f32 %v180, 0.75
        %v309 = vmul.f32 %v172, 0.75
        %v310 = vmul.f32 %v181, 0.75
        %v311 = vmul.f32 %v173, 0.75
        %v312 = vmul.f32 %v182, 0.75
        %v313 = vmul.f32 %v232, 0.25
        %v314 = vmul.f32 %v233, 0.25
        %v315 = vmul.f32 %v234, 0.25
        %v316 = vmul.f32 %v235, 0.25
        %v317 = vmul.f32 %v236, 0.25
        %v318 = vmul.f32 %v237, 0.25
        %v319 = vmul.f32 %v238, 0.25
        %v320 = vmul.f32 %v239, 0.25
        %v321 = vmul.f32 %v240, 0.25
        %v322 = vmul.f32 %v241, 0.25
        %v323 = vmul.f32 %v242, 0.25
        %v324 = vmul.f32 %v243, 0.25
        %v325 = vmul.f32 %v244, 0.25
        %v326 = vmul.f32 %v245, 0.25
        %v327 = vmul.f32 %v246, 0.25
        %v328 = vmul.f32 %v247, 0.25
        %v329 = vadd.f32 %v297, %v313
        %v330 = vadd.f32 %v298, %v314
        %v331 = vadd.f32 %v299, %v315
        %v332 = vadd.f32 %v300, %v316
        %v333 = vadd.f32 %v301, %v317
        %v334 = vadd.f32 %v302, %v318
        %v335 = vadd.f32 %v303, %v319
        %v336 = vadd.f32 %v304, %v320
        %v337 = vadd.f32 %v305, %v321
        %v338 = vadd.f32 %v306, %v322
        %v339 = vadd.f32 %v307, %v323
        %v340 = vadd.f32 %v308, %v324
        %v341 = vadd.f32 %v309, %v325
        %v342 = vadd.f32 %v310, %v326
        %v343 = vadd.f32 %v311, %v327
        %v344 = vadd.f32 %v312, %v328
        %v345 = vmul.f32 %v281, 0.25
        %v346 = vmul.f32 %v282, 0.25
        %v347 = vmul.f32 %v283, 0.25
        %v348 = vmul.f32 %v284, 0.25
        %v349 = vmul.f32 %v285, 0.25
        %v350 = vmul.f32 %v286, 0.25
        %v351 = vmul.f32 %v287, 0.25
        %v352 = vmul.f32 %v288, 0.25
        %v353 = vmul.f32 %v289, 0.25
        %v354 = vmul.f32 %v290, 0.25
        %v355 = vmul.f32 %v291, 0.25
        %v356 = vmul.f32 %v292, 0.25
        %v357 = vmul.f32 %v293, 0.25
        %v358 = vmul.f32 %v294, 0.25
        %v359 = vmul.f32 %v295, 0.25
        %v360 = vmul.f32 %v296, 0.25
        %v361 = vadd.f32 %v297, %v345
        %v362 = vadd.f32 %v298, %v346
        %v363 = vadd.f32 %v299, %v347
        %v364 = vadd.f32 %v300, %v348
        %v365 = vadd.f32 %v301, %v349
        %v366 = vadd.f32 %v302, %v350
        %v367 = vadd.f32 %v303, %v351
        %v368 = vadd.f32 %v304, %v352
        %v369 = vadd.f32 %v305, %v353
        %v370 = vadd.f32 %v306, %v354
        %v371 = vadd.f32 %v307, %v355
        %v372 = vadd.f32 %v308, %v356
        %v373 = vadd.f32 %v309, %v357
        %v374 = vadd.f32 %v310, %v358
        %v375 = vadd.f32 %v311, %v359
        %v376 = vadd.f32 %v312, %v360
        %v393 = vcombine.high %v329, %v329
        %v395 = vunpack.c.l.s4 1966171168
        %v396 = vunpack.c.0.s8 %v395
        %v397 = vlaneseq
        %v398 = vshrl.u32 %v397, 7
        %v399 = vsub.s32 %v396, %v398
        %v400 = vrot.slane %v329, %v399
        %v402 = vunpack.c.l.s4 1966171168
        %v403 = vunpack.c.0.s8 %v402
        %v404 = vlaneseq
        %v405 = vshrl.u32 %v404, 7
        %v406 = vsub.s32 %v403, %v405
        %v407 = vrot.slane %v393, %v406
        %v408 = vcombine.high %v400, %v400
        %v409 = vcombine.high %v407, %v407
        %v411 = vunpack.c.l.s4 1966171168
        %v412 = vunpack.c.0.s8 %v411
        %v413 = vlaneseq
        %v414 = vshrl.u32 %v413, 7
        %v415 = vsub.s32 %v412, %v414
        %v416 = vrot.slane %v400, %v415
        %v418 = vunpack.c.l.s4 1966171168
        %v419 = vunpack.c.0.s8 %v418
        %v420 = vlaneseq
        %v421 = vshrl.u32 %v420, 7
        %v422 = vsub.s32 %v419, %v421
        %v423 = vrot.slane %v407, %v422
        %v425 = vunpack.c.l.s4 1966171168
        %v426 = vunpack.c.0.s8 %v425
        %v427 = vlaneseq
        %v428 = vshrl.u32 %v427, 7
        %v429 = vsub.s32 %v426, %v428
        %v430 = vrot.slane %v408, %v429
        %v432 = vunpack.c.l.s4 1966171168
        %v433 = vunpack.c.0.s8 %v432
        %v434 = vlaneseq
        %v435 = vshrl.u32 %v434, 7
        %v436 = vsub.s32 %v433, %v435
        %v437 = vrot.slane %v409, %v436
        %v438 = vcombine.high %v416, %v416
        %v439 = vcombine.high %v423, %v423
        %v440 = vcombine.high %v430, %v430
        %v441 = vcombine.high %v437, %v437
        %v442 = vcombine.high %v330, %v330
        %v444 = vunpack.c.l.s4 1966171168
        %v445 = vunpack.c.0.s8 %v444
        %v446 = vlaneseq
        %v447 = vshrl.u32 %v446, 7
        %v448 = vsub.s32 %v445, %v447
        %v449 = vrot.slane %v330, %v448
        %v451 = vunpack.c.l.s4 1966171168
        %v452 = vunpack.c.0.s8 %v451
        %v453 = vlaneseq
        %v454 = vshrl.u32 %v453, 7
        %v455 = vsub.s32 %v452, %v454
        %v456 = vrot.slane %v442, %v455
        %v457 = vcombine.high %v449, %v449
        %v458 = vcombine.high %v456, %v456
        %v460 = vunpack.c.l.s4 1966171168
        %v461 = vunpack.c.0.s8 %v460
        %v462 = vlaneseq
        %v463 = vshrl.u32 %v462, 7
        %v464 = vsub.s32 %v461, %v463
        %v465 = vrot.slane %v449, %v464
        %v467 = vunpack.c.l.s4 1966171168
        %v468 = vunpack.c.0.s8 %v467
        %v469 = vlaneseq
        %v470 = vshrl.u32 %v469, 7
        %v471 = vsub.s32 %v468, %v470
        %v472 = vrot.slane %v456, %v471
        %v474 = vunpack.c.l.s4 1966171168
        %v475 = vunpack.c.0.s8 %v474
        %v476 = vlaneseq
        %v477 = vshrl.u32 %v476, 7
        %v478 = vsub.s32 %v475, %v477
        %v479 = vrot.slane %v457, %v478
        %v481 = vunpack.c.l.s4 1966171168
        %v482 = vunpack.c.0.s8 %v481
        %v483 = vlaneseq
        %v484 = vshrl.u32 %v483, 7
        %v485 = vsub.s32 %v482, %v484
        %v486 = vrot.slane %v458, %v485
        %v487 = vcombine.high %v465, %v465
        %v488 = vcombine.high %v472, %v472
        %v489 = vcombine.high %v479, %v479
        %v490 = vcombine.high %v486, %v486
        %v491 = vcombine.high %v331, %v331
        %v493 = vunpack.c.l.s4 1966171168
        %v494 = vunpack.c.0.s8 %v493
        %v495 = vlaneseq
        %v496 = vshrl.u32 %v495, 7
        %v497 = vsub.s32 %v494, %v496
        %v498 = vrot.slane %v331, %v497
        %v500 = vunpack.c.l.s4 1966171168
        %v501 = vunpack.c.0.s8 %v500
        %v502 = vlaneseq
        %v503 = vshrl.u32 %v502, 7
        %v504 = vsub.s32 %v501, %v503
        %v505 = vrot.slane %v491, %v504
        %v506 = vcombine.high %v498, %v498
        %v507 = vcombine.high %v505, %v505
        %v509 = vunpack.c.l.s4 1966171168
        %v510 = vunpack.c.0.s8 %v509
        %v511 = vlaneseq
        %v512 = vshrl.u32 %v511, 7
        %v513 = vsub.s32 %v510, %v512
        %v514 = vrot.slane %v498, %v513
        %v516 = vunpack.c.l.s4 1966171168
        %v517 = vunpack.c.0.s8 %v516
        %v518 = vlaneseq
        %v519 = vshrl.u32 %v518, 7
        %v520 = vsub.s32 %v517, %v519
        %v521 = vrot.slane %v505, %v520
        %v523 = vunpack.c.l.s4 1966171168
        %v524 = vunpack.c.0.s8 %v523
        %v525 = vlaneseq
        %v526 = vshrl.u32 %v525, 7
        %v527 = vsub.s32 %v524, %v526
        %v528 = vrot.slane %v506, %v527
        %v530 = vunpack.c.l.s4 1966171168
        %v531 = vunpack.c.0.s8 %v530
        %v532 = vlaneseq
        %v533 = vshrl.u32 %v532, 7
        %v534 = vsub.s32 %v531, %v533
        %v535 = vrot.slane %v507, %v534
        %v536 = vcombine.high %v514, %v514
        %v537 = vcombine.high %v521, %v521
        %v538 = vcombine.high %v528, %v528
        %v539 = vcombine.high %v535, %v535
        %v540 = vcombine.high %v332, %v332
        %v542 = vunpack.c.l.s4 1966171168
        %v543 = vunpack.c.0.s8 %v542
        %v544 = vlaneseq
        %v545 = vshrl.u32 %v544, 7
        %v546 = vsub.s32 %v543, %v545
        %v547 = vrot.slane %v332, %v546
        %v549 = vunpack.c.l.s4 1966171168
        %v550 = vunpack.c.0.s8 %v549
        %v551 = vlaneseq
        %v552 = vshrl.u32 %v551, 7
        %v553 = vsub.s32 %v550, %v552
        %v554 = vrot.slane %v540, %v553
        %v555 = vcombine.high %v547, %v547
        %v556 = vcombine.high %v554, %v554
        %v558 = vunpack.c.l.s4 1966171168
        %v559 = vunpack.c.0.s8 %v558
        %v560 = vlaneseq
        %v561 = vshrl.u32 %v560, 7
        %v562 = vsub.s32 %v559, %v561
        %v563 = vrot.slane %v547, %v562
        %v565 = vunpack.c.l.s4 1966171168
        %v566 = vunpack.c.0.s8 %v565
        %v567 = vlaneseq
        %v568 = vshrl.u32 %v567, 7
        %v569 = vsub.s32 %v566, %v568
        %v570 = vrot.slane %v554, %v569
        %v572 = vunpack.c.l.s4 1966171168
        %v573 = vunpack.c.0.s8 %v572
        %v574 = vlaneseq
        %v575 = vshrl.u32 %v574, 7
        %v576 = vsub.s32 %v573, %v575
        %v577 = vrot.slane %v555, %v576
        %v579 = vunpack.c.l.s4 1966171168
        %v580 = vunpack.c.0.s8 %v579
        %v581 = vlaneseq
        %v582 = vshrl.u32 %v581, 7
        %v583 = vsub.s32 %v580, %v582
        %v584 = vrot.slane %v556, %v583
        %v585 = vcombine.high %v563, %v563
        %v586 = vcombine.high %v570, %v570
        %v587 = vcombine.high %v577, %v577
        %v588 = vcombine.high %v584, %v584
        %v589 = vcombine.high %v333, %v333
        %v591 = vunpack.c.l.s4 1966171168
        %v592 = vunpack.c.0.s8 %v591
        %v593 = vlaneseq
        %v594 = vshrl.u32 %v593, 7
        %v595 = vsub.s32 %v592, %v594
        %v596 = vrot.slane %v333, %v595
        %v598 = vunpack.c.l.s4 1966171168
        %v599 = vunpack.c.0.s8 %v598
        %v600 = vlaneseq
        %v601 = vshrl.u32 %v600, 7
        %v602 = vsub.s32 %v599, %v601
        %v603 = vrot.slane %v589, %v602
        %v604 = vcombine.high %v596, %v596
        %v605 = vcombine.high %v603, %v603
        %v607 = vunpack.c.l.s4 1966171168
        %v608 = vunpack.c.0.s8 %v607
        %v609 = vlaneseq
        %v610 = vshrl.u32 %v609, 7
        %v611 = vsub.s32 %v608, %v610
        %v612 = vrot.slane %v596, %v611
        %v614 = vunpack.c.l.s4 1966171168
        %v615 = vunpack.c.0.s8 %v614
        %v616 = vlaneseq
        %v617 = vshrl.u32 %v616, 7
        %v618 = vsub.s32 %v615, %v617
        %v619 = vrot.slane %v603, %v618
        %v621 = vunpack.c.l.s4 1966171168
        %v622 = vunpack.c.0.s8 %v621
        %v623 = vlaneseq
        %v624 = vshrl.u32 %v623, 7
        %v625 = vsub.s32 %v622, %v624
        %v626 = vrot.slane %v604, %v625
        %v628 = vunpack.c.l.s4 1966171168
        %v629 = vunpack.c.0.s8 %v628
        %v630 = vlaneseq
        %v631 = vshrl.u32 %v630, 7
        %v632 = vsub.s32 %v629, %v631
        %v633 = vrot.slane %v605, %v632
        %v634 = vcombine.high %v612, %v612
        %v635 = vcombine.high %v619, %v619
        %v636 = vcombine.high %v626, %v626
        %v637 = vcombine.high %v633, %v633
        %v638 = vcombine.high %v334, %v334
        %v640 = vunpack.c.l.s4 1966171168
        %v641 = vunpack.c.0.s8 %v640
        %v642 = vlaneseq
        %v643 = vshrl.u32 %v642, 7
        %v644 = vsub.s32 %v641, %v643
        %v645 = vrot.slane %v334, %v644
        %v647 = vunpack.c.l.s4 1966171168
        %v648 = vunpack.c.0.s8 %v647
        %v649 = vlaneseq
        %v650 = vshrl.u32 %v649, 7
        %v651 = vsub.s32 %v648, %v650
        %v652 = vrot.slane %v638, %v651
        %v653 = vcombine.high %v645, %v645
        %v654 = vcombine.high %v652, %v652
        %v656 = vunpack.c.l.s4 1966171168
        %v657 = vunpack.c.0.s8 %v656
        %v658 = vlaneseq
        %v659 = vshrl.u32 %v658, 7
        %v660 = vsub.s32 %v657, %v659
        %v661 = vrot.slane %v645, %v660
        %v663 = vunpack.c.l.s4 1966171168
        %v664 = vunpack.c.0.s8 %v663
        %v665 = vlaneseq
        %v666 = vshrl.u32 %v665, 7
        %v667 = vsub.s32 %v664, %v666
        %v668 = vrot.slane %v652, %v667
        %v670 = vunpack.c.l.s4 1966171168
        %v671 = vunpack.c.0.s8 %v670
        %v672 = vlaneseq
        %v673 = vshrl.u32 %v672, 7
        %v674 = vsub.s32 %v671, %v673
        %v675 = vrot.slane %v653, %v674
        %v677 = vunpack.c.l.s4 1966171168
        %v678 = vunpack.c.0.s8 %v677
        %v679 = vlaneseq
        %v680 = vshrl.u32 %v679, 7
        %v681 = vsub.s32 %v678, %v680
        %v682 = vrot.slane %v654, %v681
        %v683 = vcombine.high %v661, %v661
        %v684 = vcombine.high %v668, %v668
        %v685 = vcombine.high %v675, %v675
        %v686 = vcombine.high %v682, %v682
        %v687 = vcombine.high %v335, %v335
        %v689 = vunpack.c.l.s4 1966171168
        %v690 = vunpack.c.0.s8 %v689
        %v691 = vlaneseq
        %v692 = vshrl.u32 %v691, 7
        %v693 = vsub.s32 %v690, %v692
        %v694 = vrot.slane %v335, %v693
        %v696 = vunpack.c.l.s4 1966171168
        %v697 = vunpack.c.0.s8 %v696
        %v698 = vlaneseq
        %v699 = vshrl.u32 %v698, 7
        %v700 = vsub.s32 %v697, %v699
        %v701 = vrot.slane %v687, %v700
        %v702 = vcombine.high %v694, %v694
        %v703 = vcombine.high %v701, %v701
        %v705 = vunpack.c.l.s4 1966171168
        %v706 = vunpack.c.0.s8 %v705
        %v707 = vlaneseq
        %v708 = vshrl.u32 %v707, 7
        %v709 = vsub.s32 %v706, %v708
        %v710 = vrot.slane %v694, %v709
        %v712 = vunpack.c.l.s4 1966171168
        %v713 = vunpack.c.0.s8 %v712
        %v714 = vlaneseq
        %v715 = vshrl.u32 %v714, 7
        %v716 = vsub.s32 %v713, %v715
        %v717 = vrot.slane %v701, %v716
        %v719 = vunpack.c.l.s4 1966171168
        %v720 = vunpack.c.0.s8 %v719
        %v721 = vlaneseq
        %v722 = vshrl.u32 %v721, 7
        %v723 = vsub.s32 %v720, %v722
        %v724 = vrot.slane %v702, %v723
        %v726 = vunpack.c.l.s4 1966171168
        %v727 = vunpack.c.0.s8 %v726
        %v728 = vlaneseq
        %v729 = vshrl.u32 %v728, 7
        %v730 = vsub.s32 %v727, %v729
        %v731 = vrot.slane %v703, %v730
        %v732 = vcombine.high %v710, %v710
        %v733 = vcombine.high %v717, %v717
        %v734 = vcombine.high %v724, %v724
        %v735 = vcombine.high %v731, %v731
        %v736 = vcombine.high %v336, %v336
        %v738 = vunpack.c.l.s4 1966171168
        %v739 = vunpack.c.0.s8 %v738
        %v740 = vlaneseq
        %v741 = vshrl.u32 %v740, 7
        %v742 = vsub.s32 %v739, %v741
        %v743 = vrot.slane %v336, %v742
        %v745 = vunpack.c.l.s4 1966171168
        %v746 = vunpack.c.0.s8 %v745
        %v747 = vlaneseq
        %v748 = vshrl.u32 %v747, 7
        %v749 = vsub.s32 %v746, %v748
        %v750 = vrot.slane %v736, %v749
        %v751 = vcombine.high %v743, %v743
        %v752 = vcombine.high %v750, %v750
        %v754 = vunpack.c.l.s4 1966171168
        %v755 = vunpack.c.0.s8 %v754
        %v756 = vlaneseq
        %v757 = vshrl.u32 %v756, 7
        %v758 = vsub.s32 %v755, %v757
        %v759 = vrot.slane %v743, %v758
        %v761 = vunpack.c.l.s4 1966171168
        %v762 = vunpack.c.0.s8 %v761
        %v763 = vlaneseq
        %v764 = vshrl.u32 %v763, 7
        %v765 = vsub.s32 %v762, %v764
        %v766 = vrot.slane %v750, %v765
        %v768 = vunpack.c.l.s4 1966171168
        %v769 = vunpack.c.0.s8 %v768
        %v770 = vlaneseq
        %v771 = vshrl.u32 %v770, 7
        %v772 = vsub.s32 %v769, %v771
        %v773 = vrot.slane %v751, %v772
        %v775 = vunpack.c.l.s4 1966171168
        %v776 = vunpack.c.0.s8 %v775
        %v777 = vlaneseq
        %v778 = vshrl.u32 %v777, 7
        %v779 = vsub.s32 %v776, %v778
        %v780 = vrot.slane %v752, %v779
        %v781 = vcombine.high %v759, %v759
        %v782 = vcombine.high %v766, %v766
        %v783 = vcombine.high %v773, %v773
        %v784 = vcombine.high %v780, %v780
        %v785 = vcombine.high %v337, %v337
        %v787 = vunpack.c.l.s4 1966171168
        %v788 = vunpack.c.0.s8 %v787
        %v789 = vlaneseq
        %v790 = vshrl.u32 %v789, 7
        %v791 = vsub.s32 %v788, %v790
        %v792 = vrot.slane %v337, %v791
        %v794 = vunpack.c.l.s4 1966171168
        %v795 = vunpack.c.0.s8 %v794
        %v796 = vlaneseq
        %v797 = vshrl.u32 %v796, 7
        %v798 = vsub.s32 %v795, %v797
        %v799 = vrot.slane %v785, %v798
        %v800 = vcombine.high %v792, %v792
        %v801 = vcombine.high %v799, %v799
        %v803 = vunpack.c.l.s4 1966171168
        %v804 = vunpack.c.0.s8 %v803
        %v805 = vlaneseq
        %v806 = vshrl.u32 %v805, 7
        %v807 = vsub.s32 %v804, %v806
        %v808 = vrot.slane %v792, %v807
        %v810 = vunpack.c.l.s4 1966171168
        %v811 = vunpack.c.0.s8 %v810
        %v812 = vlaneseq
        %v813 = vshrl.u32 %v812, 7
        %v814 = vsub.s32 %v811, %v813
        %v815 = vrot.slane %v799, %v814
        %v817 = vunpack.c.l.s4 1966171168
        %v818 = vunpack.c.0.s8 %v817
        %v819 = vlaneseq
        %v820 = vshrl.u32 %v819, 7
        %v821 = vsub.s32 %v818, %v820
        %v822 = vrot.slane %v800, %v821
        %v824 = vunpack.c.l.s4 1966171168
        %v825 = vunpack.c.0.s8 %v824
        %v826 = vlaneseq
        %v827 = vshrl.u32 %v826, 7
        %v828 = vsub.s32 %v825, %v827
        %v829 = vrot.slane %v801, %v828
        %v830 = vcombine.high %v808, %v808
        %v831 = vcombine.high %v815, %v815
        %v832 = vcombine.high %v822, %v822
        %v833 = vcombine.high %v829, %v829
        %v834 = vcombine.high %v338, %v338
        %v836 = vunpack.c.l.s4 1966171168
        %v837 = vunpack.c.0.s8 %v836
        %v838 = vlaneseq
        %v839 = vshrl.u32 %v838, 7
        %v840 = vsub.s32 %v837, %v839
        %v841 = vrot.slane %v338, %v840
        %v843 = vunpack.c.l.s4 1966171168
        %v844 = vunpack.c.0.s8 %v843
        %v845 = vlaneseq
        %v846 = vshrl.u32 %v845, 7
        %v847 = vsub.s32 %v844, %v846
        %v848 = vrot.slane %v834, %v847
        %v849 = vcombine.high %v841, %v841
        %v850 = vcombine.high %v848, %v848
        %v852 = vunpack.c.l.s4 1966171168
        %v853 = vunpack.c.0.s8 %v852
        %v854 = vlaneseq
        %v855 = vshrl.u32 %v854, 7
        %v856 = vsub.s32 %v853, %v855
        %v857 = vrot.slane %v841, %v856
        %v859 = vunpack.c.l.s4 1966171168
        %v860 = vunpack.c.0.s8 %v859
        %v861 = vlaneseq
        %v862 = vshrl.u32 %v861, 7
        %v863 = vsub.s32 %v860, %v862
        %v864 = vrot.slane %v848, %v863
        %v866 = vunpack.c.l.s4 1966171168
        %v867 = vunpack.c.0.s8 %v866
        %v868 = vlaneseq
        %v869 = vshrl.u32 %v868, 7
        %v870 = vsub.s32 %v867, %v869
        %v871 = vrot.slane %v849, %v870
        %v873 = vunpack.c.l.s4 1966171168
        %v874 = vunpack.c.0.s8 %v873
        %v875 = vlaneseq
        %v876 = vshrl.u32 %v875, 7
        %v877 = vsub.s32 %v874, %v876
        %v878 = vrot.slane %v850, %v877
        %v879 = vcombine.high %v857, %v857
        %v880 = vcombine.high %v864, %v864
        %v881 = vcombine.high %v871, %v871
        %v882 = vcombine.high %v878, %v878
        %v883 = vcombine.high %v339, %v339
        %v885 = vunpack.c.l.s4 1966171168
        %v886 = vunpack.c.0.s8 %v885
        %v887 = vlaneseq
        %v888 = vshrl.u32 %v887, 7
        %v889 = vsub.s32 %v886, %v888
        %v890 = vrot.slane %v339, %v889
        %v892 = vunpack.c.l.s4 1966171168
        %v893 = vunpack.c.0.s8 %v892
        %v894 = vlaneseq
        %v895 = vshrl.u32 %v894, 7
        %v896 = vsub.s32 %v893, %v895
        %v897 = vrot.slane %v883, %v896
        %v898 = vcombine.high %v890, %v890
        %v899 = vcombine.high %v897, %v897
        %v901 = vunpack.c.l.s4 1966171168
        %v902 = vunpack.c.0.s8 %v901
        %v903 = vlaneseq
        %v904 = vshrl.u32 %v903, 7
        %v905 = vsub.s32 %v902, %v904
        %v906 = vrot.slane %v890, %v905
        %v908 = vunpack.c.l.s4 1966171168
        %v909 = vunpack.c.0.s8 %v908
        %v910 = vlaneseq
        %v911 = vshrl.u32 %v910, 7
        %v912 = vsub.s32 %v909, %v911
        %v913 = vrot.slane %v897, %v912
        %v915 = vunpack.c.l.s4 1966171168
        %v916 = vunpack.c.0.s8 %v915
        %v917 = vlaneseq
        %v918 = vshrl.u32 %v917, 7
        %v919 = vsub.s32 %v916, %v918
        %v920 = vrot.slane %v898, %v919
        %v922 = vunpack.c.l.s4 1966171168
        %v923 = vunpack.c.0.s8 %v922
        %v924 = vlaneseq
        %v925 = vshrl.u32 %v924, 7
        %v926 = vsub.s32 %v923, %v925
        %v927 = vrot.slane %v899, %v926
        %v928 = vcombine.high %v906, %v906
        %v929 = vcombine.high %v913, %v913
        %v930 = vcombine.high %v920, %v920
        %v931 = vcombine.high %v927, %v927
        %v932 = vcombine.high %v340, %v340
        %v934 = vunpack.c.l.s4 1966171168
        %v935 = vunpack.c.0.s8 %v934
        %v936 = vlaneseq
        %v937 = vshrl.u32 %v936, 7
        %v938 = vsub.s32 %v935, %v937
        %v939 = vrot.slane %v340, %v938
        %v941 = vunpack.c.l.s4 1966171168
        %v942 = vunpack.c.0.s8 %v941
        %v943 = vlaneseq
        %v944 = vshrl.u32 %v943, 7
        %v945 = vsub.s32 %v942, %v944
        %v946 = vrot.slane %v932, %v945
        %v947 = vcombine.high %v939, %v939
        %v948 = vcombine.high %v946, %v946
        %v950 = vunpack.c.l.s4 1966171168
        %v951 = vunpack.c.0.s8 %v950
        %v952 = vlaneseq
        %v953 = vshrl.u32 %v952, 7
        %v954 = vsub.s32 %v951, %v953
        %v955 = vrot.slane %v939, %v954
        %v957 = vunpack.c.l.s4 1966171168
        %v958 = vunpack.c.0.s8 %v957
        %v959 = vlaneseq
        %v960 = vshrl.u32 %v959, 7
        %v961 = vsub.s32 %v958, %v960
        %v962 = vrot.slane %v946, %v961
        %v964 = vunpack.c.l.s4 1966171168
        %v965 = vunpack.c.0.s8 %v964
        %v966 = vlaneseq
        %v967 = vshrl.u32 %v966, 7
        %v968 = vsub.s32 %v965, %v967
        %v969 = vrot.slane %v947, %v968
        %v971 = vunpack.c.l.s4 1966171168
        %v972 = vunpack.c.0.s8 %v971
        %v973 = vlaneseq
        %v974 = vshrl.u32 %v973, 7
        %v975 = vsub.s32 %v972, %v974
        %v976 = vrot.slane %v948, %v975
        %v977 = vcombine.high %v955, %v955
        %v978 = vcombine.high %v962, %v962
        %v979 = vcombine.high %v969, %v969
        %v980 = vcombine.high %v976, %v976
        %v981 = vcombine.high %v341, %v341
        %v983 = vunpack.c.l.s4 1966171168
        %v984 = vunpack.c.0.s8 %v983
        %v985 = vlaneseq
        %v986 = vshrl.u32 %v985, 7
        %v987 = vsub.s32 %v984, %v986
        %v988 = vrot.slane %v341, %v987
        %v990 = vunpack.c.l.s4 1966171168
        %v991 = vunpack.c.0.s8 %v990
        %v992 = vlaneseq
        %v993 = vshrl.u32 %v992, 7
        %v994 = vsub.s32 %v991, %v993
        %v995 = vrot.slane %v981, %v994
        %v996 = vcombine.high %v988, %v988
        %v997 = vcombine.high %v995, %v995
        %v999 = vunpack.c.l.s4 1966171168
        %v1000 = vunpack.c.0.s8 %v999
        %v1001 = vlaneseq
        %v1002 = vshrl.u32 %v1001, 7
        %v1003 = vsub.s32 %v1000, %v1002
        %v1004 = vrot.slane %v988, %v1003
        %v1006 = vunpack.c.l.s4 1966171168
        %v1007 = vunpack.c.0.s8 %v1006
        %v1008 = vlaneseq
        %v1009 = vshrl.u32 %v1008, 7
        %v1010 = vsub.s32 %v1007, %v1009
        %v1011 = vrot.slane %v995, %v1010
        %v1013 = vunpack.c.l.s4 1966171168
        %v1014 = vunpack.c.0.s8 %v1013
        %v1015 = vlaneseq
        %v1016 = vshrl.u32 %v1015, 7
        %v1017 = vsub.s32 %v1014, %v1016
        %v1018 = vrot.slane %v996, %v1017
        %v1020 = vunpack.c.l.s4 1966171168
        %v1021 = vunpack.c.0.s8 %v1020
        %v1022 = vlaneseq
        %v1023 = vshrl.u32 %v1022, 7
        %v1024 = vsub.s32 %v1021, %v1023
        %v1025 = vrot.slane %v997, %v1024
        %v1026 = vcombine.high %v1004, %v1004
        %v1027 = vcombine.high %v1011, %v1011
        %v1028 = vcombine.high %v1018, %v1018
        %v1029 = vcombine.high %v1025, %v1025
        %v1030 = vcombine.high %v342, %v342
        %v1032 = vunpack.c.l.s4 1966171168
        %v1033 = vunpack.c.0.s8 %v1032
        %v1034 = vlaneseq
        %v1035 = vshrl.u32 %v1034, 7
        %v1036 = vsub.s32 %v1033, %v1035
        %v1037 = vrot.slane %v342, %v1036
        %v1039 = vunpack.c.l.s4 1966171168
        %v1040 = vunpack.c.0.s8 %v1039
        %v1041 = vlaneseq
        %v1042 = vshrl.u32 %v1041, 7
        %v1043 = vsub.s32 %v1040, %v1042
        %v1044 = vrot.slane %v1030, %v1043
        %v1045 = vcombine.high %v1037, %v1037
        %v1046 = vcombine.high %v1044, %v1044
        %v1048 = vunpack.c.l.s4 1966171168
        %v1049 = vunpack.c.0.s8 %v1048
        %v1050 = vlaneseq
        %v1051 = vshrl.u32 %v1050, 7
        %v1052 = vsub.s32 %v1049, %v1051
        %v1053 = vrot.slane %v1037, %v1052
        %v1055 = vunpack.c.l.s4 1966171168
        %v1056 = vunpack.c.0.s8 %v1055
        %v1057 = vlaneseq
        %v1058 = vshrl.u32 %v1057, 7
        %v1059 = vsub.s32 %v1056, %v1058
        %v1060 = vrot.slane %v1044, %v1059
        %v1062 = vunpack.c.l.s4 1966171168
        %v1063 = vunpack.c.0.s8 %v1062
        %v1064 = vlaneseq
        %v1065 = vshrl.u32 %v1064, 7
        %v1066 = vsub.s32 %v1063, %v1065
        %v1067 = vrot.slane %v1045, %v1066
        %v1069 = vunpack.c.l.s4 1966171168
        %v1070 = vunpack.c.0.s8 %v1069
        %v1071 = vlaneseq
        %v1072 = vshrl.u32 %v1071, 7
        %v1073 = vsub.s32 %v1070, %v1072
        %v1074 = vrot.slane %v1046, %v1073
        %v1075 = vcombine.high %v1053, %v1053
        %v1076 = vcombine.high %v1060, %v1060
        %v1077 = vcombine.high %v1067, %v1067
        %v1078 = vcombine.high %v1074, %v1074
        %v1079 = vcombine.high %v343, %v343
        %v1081 = vunpack.c.l.s4 1966171168
        %v1082 = vunpack.c.0.s8 %v1081
        %v1083 = vlaneseq
        %v1084 = vshrl.u32 %v1083, 7
        %v1085 = vsub.s32 %v1082, %v1084
        %v1086 = vrot.slane %v343, %v1085
        %v1088 = vunpack.c.l.s4 1966171168
        %v1089 = vunpack.c.0.s8 %v1088
        %v1090 = vlaneseq
        %v1091 = vshrl.u32 %v1090, 7
        %v1092 = vsub.s32 %v1089, %v1091
        %v1093 = vrot.slane %v1079, %v1092
        %v1094 = vcombine.high %v1086, %v1086
        %v1095 = vcombine.high %v1093, %v1093
        %v1097 = vunpack.c.l.s4 1966171168
        %v1098 = vunpack.c.0.s8 %v1097
        %v1099 = vlaneseq
        %v1100 = vshrl.u32 %v1099, 7
        %v1101 = vsub.s32 %v1098, %v1100
        %v1102 = vrot.slane %v1086, %v1101
        %v1104 = vunpack.c.l.s4 1966171168
        %v1105 = vunpack.c.0.s8 %v1104
        %v1106 = vlaneseq
        %v1107 = vshrl.u32 %v1106, 7
        %v1108 = vsub.s32 %v1105, %v1107
        %v1109 = vrot.slane %v1093, %v1108
        %v1111 = vunpack.c.l.s4 1966171168
        %v1112 = vunpack.c.0.s8 %v1111
        %v1113 = vlaneseq
        %v1114 = vshrl.u32 %v1113, 7
        %v1115 = vsub.s32 %v1112, %v1114
        %v1116 = vrot.slane %v1094, %v1115
        %v1118 = vunpack.c.l.s4 1966171168
        %v1119 = vunpack.c.0.s8 %v1118
        %v1120 = vlaneseq
        %v1121 = vshrl.u32 %v1120, 7
        %v1122 = vsub.s32 %v1119, %v1121
        %v1123 = vrot.slane %v1095, %v1122
        %v1124 = vcombine.high %v1102, %v1102
        %v1125 = vcombine.high %v1109, %v1109
        %v1126 = vcombine.high %v1116, %v1116
        %v1127 = vcombine.high %v1123, %v1123
        %v1128 = vcombine.high %v344, %v344
        %v1130 = vunpack.c.l.s4 1966171168
        %v1131 = vunpack.c.0.s8 %v1130
        %v1132 = vlaneseq
        %v1133 = vshrl.u32 %v1132, 7
        %v1134 = vsub.s32 %v1131, %v1133
        %v1135 = vrot.slane %v344, %v1134
        %v1137 = vunpack.c.l.s4 1966171168
        %v1138 = vunpack.c.0.s8 %v1137
        %v1139 = vlaneseq
        %v1140 = vshrl.u32 %v1139, 7
        %v1141 = vsub.s32 %v1138, %v1140
        %v1142 = vrot.slane %v1128, %v1141
        %v1143 = vcombine.high %v1135, %v1135
        %v1144 = vcombine.high %v1142, %v1142
        %v1146 = vunpack.c.l.s4 1966171168
        %v1147 = vunpack.c.0.s8 %v1146
        %v1148 = vlaneseq
        %v1149 = vshrl.u32 %v1148, 7
        %v1150 = vsub.s32 %v1147, %v1149
        %v1151 = vrot.slane %v1135, %v1150
        %v1153 = vunpack.c.l.s4 1966171168
        %v1154 = vunpack.c.0.s8 %v1153
        %v1155 = vlaneseq
        %v1156 = vshrl.u32 %v1155, 7
        %v1157 = vsub.s32 %v1154, %v1156
        %v1158 = vrot.slane %v1142, %v1157
        %v1160 = vunpack.c.l.s4 1966171168
        %v1161 = vunpack.c.0.s8 %v1160
        %v1162 = vlaneseq
        %v1163 = vshrl.u32 %v1162, 7
        %v1164 = vsub.s32 %v1161, %v1163
        %v1165 = vrot.slane %v1143, %v1164
        %v1167 = vunpack.c.l.s4 1966171168
        %v1168 = vunpack.c.0.s8 %v1167
        %v1169 = vlaneseq
        %v1170 = vshrl.u32 %v1169, 7
        %v1171 = vsub.s32 %v1168, %v1170
        %v1172 = vrot.slane %v1144, %v1171
        %v1173 = vcombine.high %v1151, %v1151
        %v1174 = vcombine.high %v1158, %v1158
        %v1175 = vcombine.high %v1165, %v1165
        %v1176 = vcombine.high %v1172, %v1172
        %v1321 = vcombine.high %v361, %v361
        %v1323 = vunpack.c.l.s4 1966171168
        %v1324 = vunpack.c.0.s8 %v1323
        %v1325 = vlaneseq
        %v1326 = vshrl.u32 %v1325, 7
        %v1327 = vsub.s32 %v1324, %v1326
        %v1328 = vrot.slane %v361, %v1327
        %v1330 = vunpack.c.l.s4 1966171168
        %v1331 = vunpack.c.0.s8 %v1330
        %v1332 = vlaneseq
        %v1333 = vshrl.u32 %v1332, 7
        %v1334 = vsub.s32 %v1331, %v1333
        %v1335 = vrot.slane %v1321, %v1334
        %v1336 = vcombine.high %v1328, %v1328
        %v1337 = vcombine.high %v1335, %v1335
        %v1339 = vunpack.c.l.s4 1966171168
        %v1340 = vunpack.c.0.s8 %v1339
        %v1341 = vlaneseq
        %v1342 = vshrl.u32 %v1341, 7
        %v1343 = vsub.s32 %v1340, %v1342
        %v1344 = vrot.slane %v1328, %v1343
        %v1346 = vunpack.c.l.s4 1966171168
        %v1347 = vunpack.c.0.s8 %v1346
        %v1348 = vlaneseq
        %v1349 = vshrl.u32 %v1348, 7
        %v1350 = vsub.s32 %v1347, %v1349
        %v1351 = vrot.slane %v1335, %v1350
        %v1353 = vunpack.c.l.s4 1966171168
        %v1354 = vunpack.c.0.s8 %v1353
        %v1355 = vlaneseq
        %v1356 = vshrl.u32 %v1355, 7
        %v1357 = vsub.s32 %v1354, %v1356
        %v1358 = vrot.slane %v1336, %v1357
        %v1360 = vunpack.c.l.s4 1966171168
        %v1361 = vunpack.c.0.s8 %v1360
        %v1362 = vlaneseq
        %v1363 = vshrl.u32 %v1362, 7
        %v1364 = vsub.s32 %v1361, %v1363
        %v1365 = vrot.slane %v1337, %v1364
        %v1366 = vcombine.high %v1344, %v1344
        %v1367 = vcombine.high %v1351, %v1351
        %v1368 = vcombine.high %v1358, %v1358
        %v1369 = vcombine.high %v1365, %v1365
        %v1370 = vcombine.high %v362, %v362
        %v1372 = vunpack.c.l.s4 1966171168
        %v1373 = vunpack.c.0.s8 %v1372
        %v1374 = vlaneseq
        %v1375 = vshrl.u32 %v1374, 7
        %v1376 = vsub.s32 %v1373, %v1375
        %v1377 = vrot.slane %v362, %v1376
        %v1379 = vunpack.c.l.s4 1966171168
        %v1380 = vunpack.c.0.s8 %v1379
        %v1381 = vlaneseq
        %v1382 = vshrl.u32 %v1381, 7
        %v1383 = vsub.s32 %v1380, %v1382
        %v1384 = vrot.slane %v1370, %v1383
        %v1385 = vcombine.high %v1377, %v1377
        %v1386 = vcombine.high %v1384, %v1384
        %v1388 = vunpack.c.l.s4 1966171168
        %v1389 = vunpack.c.0.s8 %v1388
        %v1390 = vlaneseq
        %v1391 = vshrl.u32 %v1390, 7
        %v1392 = vsub.s32 %v1389, %v1391
        %v1393 = vrot.slane %v1377, %v1392
        %v1395 = vunpack.c.l.s4 1966171168
        %v1396 = vunpack.c.0.s8 %v1395
        %v1397 = vlaneseq
        %v1398 = vshrl.u32 %v1397, 7
        %v1399 = vsub.s32 %v1396, %v1398
        %v1400 = vrot.slane %v1384, %v1399
        %v1402 = vunpack.c.l.s4 1966171168
        %v1403 = vunpack.c.0.s8 %v1402
        %v1404 = vlaneseq
        %v1405 = vshrl.u32 %v1404, 7
        %v1406 = vsub.s32 %v1403, %v1405
        %v1407 = vrot.slane %v1385, %v1406
        %v1409 = vunpack.c.l.s4 1966171168
        %v1410 = vunpack.c.0.s8 %v1409
        %v1411 = vlaneseq
        %v1412 = vshrl.u32 %v1411, 7
        %v1413 = vsub.s32 %v1410, %v1412
        %v1414 = vrot.slane %v1386, %v1413
        %v1415 = vcombine.high %v1393, %v1393
        %v1416 = vcombine.high %v1400, %v1400
        %v1417 = vcombine.high %v1407, %v1407
        %v1418 = vcombine.high %v1414, %v1414
        %v1419 = vcombine.high %v363, %v363
        %v1421 = vunpack.c.l.s4 1966171168
        %v1422 = vunpack.c.0.s8 %v1421
        %v1423 = vlaneseq
        %v1424 = vshrl.u32 %v1423, 7
        %v1425 = vsub.s32 %v1422, %v1424
        %v1426 = vrot.slane %v363, %v1425
        %v1428 = vunpack.c.l.s4 1966171168
        %v1429 = vunpack.c.0.s8 %v1428
        %v1430 = vlaneseq
        %v1431 = vshrl.u32 %v1430, 7
        %v1432 = vsub.s32 %v1429, %v1431
        %v1433 = vrot.slane %v1419, %v1432
        %v1434 = vcombine.high %v1426, %v1426
        %v1435 = vcombine.high %v1433, %v1433
        %v1437 = vunpack.c.l.s4 1966171168
        %v1438 = vunpack.c.0.s8 %v1437
        %v1439 = vlaneseq
        %v1440 = vshrl.u32 %v1439, 7
        %v1441 = vsub.s32 %v1438, %v1440
        %v1442 = vrot.slane %v1426, %v1441
        %v1444 = vunpack.c.l.s4 1966171168
        %v1445 = vunpack.c.0.s8 %v1444
        %v1446 = vlaneseq
        %v1447 = vshrl.u32 %v1446, 7
        %v1448 = vsub.s32 %v1445, %v1447
        %v1449 = vrot.slane %v1433, %v1448
        %v1451 = vunpack.c.l.s4 1966171168
        %v1452 = vunpack.c.0.s8 %v1451
        %v1453 = vlaneseq
        %v1454 = vshrl.u32 %v1453, 7
        %v1455 = vsub.s32 %v1452, %v1454
        %v1456 = vrot.slane %v1434, %v1455
        %v1458 = vunpack.c.l.s4 1966171168
        %v1459 = vunpack.c.0.s8 %v1458
        %v1460 = vlaneseq
        %v1461 = vshrl.u32 %v1460, 7
        %v1462 = vsub.s32 %v1459, %v1461
        %v1463 = vrot.slane %v1435, %v1462
        %v1464 = vcombine.high %v1442, %v1442
        %v1465 = vcombine.high %v1449, %v1449
        %v1466 = vcombine.high %v1456, %v1456
        %v1467 = vcombine.high %v1463, %v1463
        %v1468 = vcombine.high %v364, %v364
        %v1470 = vunpack.c.l.s4 1966171168
        %v1471 = vunpack.c.0.s8 %v1470
        %v1472 = vlaneseq
        %v1473 = vshrl.u32 %v1472, 7
        %v1474 = vsub.s32 %v1471, %v1473
        %v1475 = vrot.slane %v364, %v1474
        %v1477 = vunpack.c.l.s4 1966171168
        %v1478 = vunpack.c.0.s8 %v1477
        %v1479 = vlaneseq
        %v1480 = vshrl.u32 %v1479, 7
        %v1481 = vsub.s32 %v1478, %v1480
        %v1482 = vrot.slane %v1468, %v1481
        %v1483 = vcombine.high %v1475, %v1475
        %v1484 = vcombine.high %v1482, %v1482
        %v1486 = vunpack.c.l.s4 1966171168
        %v1487 = vunpack.c.0.s8 %v1486
        %v1488 = vlaneseq
        %v1489 = vshrl.u32 %v1488, 7
        %v1490 = vsub.s32 %v1487, %v1489
        %v1491 = vrot.slane %v1475, %v1490
        %v1493 = vunpack.c.l.s4 1966171168
        %v1494 = vunpack.c.0.s8 %v1493
        %v1495 = vlaneseq
        %v1496 = vshrl.u32 %v1495, 7
        %v1497 = vsub.s32 %v1494, %v1496
        %v1498 = vrot.slane %v1482, %v1497
        %v1500 = vunpack.c.l.s4 1966171168
        %v1501 = vunpack.c.0.s8 %v1500
        %v1502 = vlaneseq
        %v1503 = vshrl.u32 %v1502, 7
        %v1504 = vsub.s32 %v1501, %v1503
        %v1505 = vrot.slane %v1483, %v1504
        %v1507 = vunpack.c.l.s4 1966171168
        %v1508 = vunpack.c.0.s8 %v1507
        %v1509 = vlaneseq
        %v1510 = vshrl.u32 %v1509, 7
        %v1511 = vsub.s32 %v1508, %v1510
        %v1512 = vrot.slane %v1484, %v1511
        %v1513 = vcombine.high %v1491, %v1491
        %v1514 = vcombine.high %v1498, %v1498
        %v1515 = vcombine.high %v1505, %v1505
        %v1516 = vcombine.high %v1512, %v1512
        %v1517 = vcombine.high %v365, %v365
        %v1519 = vunpack.c.l.s4 1966171168
        %v1520 = vunpack.c.0.s8 %v1519
        %v1521 = vlaneseq
        %v1522 = vshrl.u32 %v1521, 7
        %v1523 = vsub.s32 %v1520, %v1522
        %v1524 = vrot.slane %v365, %v1523
        %v1526 = vunpack.c.l.s4 1966171168
        %v1527 = vunpack.c.0.s8 %v1526
        %v1528 = vlaneseq
        %v1529 = vshrl.u32 %v1528, 7
        %v1530 = vsub.s32 %v1527, %v1529
        %v1531 = vrot.slane %v1517, %v1530
        %v1532 = vcombine.high %v1524, %v1524
        %v1533 = vcombine.high %v1531, %v1531
        %v1535 = vunpack.c.l.s4 1966171168
        %v1536 = vunpack.c.0.s8 %v1535
        %v1537 = vlaneseq
        %v1538 = vshrl.u32 %v1537, 7
        %v1539 = vsub.s32 %v1536, %v1538
        %v1540 = vrot.slane %v1524, %v1539
        %v1542 = vunpack.c.l.s4 1966171168
        %v1543 = vunpack.c.0.s8 %v1542
        %v1544 = vlaneseq
        %v1545 = vshrl.u32 %v1544, 7
        %v1546 = vsub.s32 %v1543, %v1545
        %v1547 = vrot.slane %v1531, %v1546
        %v1549 = vunpack.c.l.s4 1966171168
        %v1550 = vunpack.c.0.s8 %v1549
        %v1551 = vlaneseq
        %v1552 = vshrl.u32 %v1551, 7
        %v1553 = vsub.s32 %v1550, %v1552
        %v1554 = vrot.slane %v1532, %v1553
        %v1556 = vunpack.c.l.s4 1966171168
        %v1557 = vunpack.c.0.s8 %v1556
        %v1558 = vlaneseq
        %v1559 = vshrl.u32 %v1558, 7
        %v1560 = vsub.s32 %v1557, %v1559
        %v1561 = vrot.slane %v1533, %v1560
        %v1562 = vcombine.high %v1540, %v1540
        %v1563 = vcombine.high %v1547, %v1547
        %v1564 = vcombine.high %v1554, %v1554
        %v1565 = vcombine.high %v1561, %v1561
        %v1566 = vcombine.high %v366, %v366
        %v1568 = vunpack.c.l.s4 1966171168
        %v1569 = vunpack.c.0.s8 %v1568
        %v1570 = vlaneseq
        %v1571 = vshrl.u32 %v1570, 7
        %v1572 = vsub.s32 %v1569, %v1571
        %v1573 = vrot.slane %v366, %v1572
        %v1575 = vunpack.c.l.s4 1966171168
        %v1576 = vunpack.c.0.s8 %v1575
        %v1577 = vlaneseq
        %v1578 = vshrl.u32 %v1577, 7
        %v1579 = vsub.s32 %v1576, %v1578
        %v1580 = vrot.slane %v1566, %v1579
        %v1581 = vcombine.high %v1573, %v1573
        %v1582 = vcombine.high %v1580, %v1580
        %v1584 = vunpack.c.l.s4 1966171168
        %v1585 = vunpack.c.0.s8 %v1584
        %v1586 = vlaneseq
        %v1587 = vshrl.u32 %v1586, 7
        %v1588 = vsub.s32 %v1585, %v1587
        %v1589 = vrot.slane %v1573, %v1588
        %v1591 = vunpack.c.l.s4 1966171168
        %v1592 = vunpack.c.0.s8 %v1591
        %v1593 = vlaneseq
        %v1594 = vshrl.u32 %v1593, 7
        %v1595 = vsub.s32 %v1592, %v1594
        %v1596 = vrot.slane %v1580, %v1595
        %v1598 = vunpack.c.l.s4 1966171168
        %v1599 = vunpack.c.0.s8 %v1598
        %v1600 = vlaneseq
        %v1601 = vshrl.u32 %v1600, 7
        %v1602 = vsub.s32 %v1599, %v1601
        %v1603 = vrot.slane %v1581, %v1602
        %v1605 = vunpack.c.l.s4 1966171168
        %v1606 = vunpack.c.0.s8 %v1605
        %v1607 = vlaneseq
        %v1608 = vshrl.u32 %v1607, 7
        %v1609 = vsub.s32 %v1606, %v1608
        %v1610 = vrot.slane %v1582, %v1609
        %v1611 = vcombine.high %v1589, %v1589
        %v1612 = vcombine.high %v1596, %v1596
        %v1613 = vcombine.high %v1603, %v1603
        %v1614 = vcombine.high %v1610, %v1610
        %v1615 = vcombine.high %v367, %v367
        %v1617 = vunpack.c.l.s4 1966171168
        %v1618 = vunpack.c.0.s8 %v1617
        %v1619 = vlaneseq
        %v1620 = vshrl.u32 %v1619, 7
        %v1621 = vsub.s32 %v1618, %v1620
        %v1622 = vrot.slane %v367, %v1621
        %v1624 = vunpack.c.l.s4 1966171168
        %v1625 = vunpack.c.0.s8 %v1624
        %v1626 = vlaneseq
        %v1627 = vshrl.u32 %v1626, 7
        %v1628 = vsub.s32 %v1625, %v1627
        %v1629 = vrot.slane %v1615, %v1628
        %v1630 = vcombine.high %v1622, %v1622
        %v1631 = vcombine.high %v1629, %v1629
        %v1633 = vunpack.c.l.s4 1966171168
        %v1634 = vunpack.c.0.s8 %v1633
        %v1635 = vlaneseq
        %v1636 = vshrl.u32 %v1635, 7
        %v1637 = vsub.s32 %v1634, %v1636
        %v1638 = vrot.slane %v1622, %v1637
        %v1640 = vunpack.c.l.s4 1966171168
        %v1641 = vunpack.c.0.s8 %v1640
        %v1642 = vlaneseq
        %v1643 = vshrl.u32 %v1642, 7
        %v1644 = vsub.s32 %v1641, %v1643
        %v1645 = vrot.slane %v1629, %v1644
        %v1647 = vunpack.c.l.s4 1966171168
        %v1648 = vunpack.c.0.s8 %v1647
        %v1649 = vlaneseq
        %v1650 = vshrl.u32 %v1649, 7
        %v1651 = vsub.s32 %v1648, %v1650
        %v1652 = vrot.slane %v1630, %v1651
        %v1654 = vunpack.c.l.s4 1966171168
        %v1655 = vunpack.c.0.s8 %v1654
        %v1656 = vlaneseq
        %v1657 = vshrl.u32 %v1656, 7
        %v1658 = vsub.s32 %v1655, %v1657
        %v1659 = vrot.slane %v1631, %v1658
        %v1660 = vcombine.high %v1638, %v1638
        %v1661 = vcombine.high %v1645, %v1645
        %v1662 = vcombine.high %v1652, %v1652
        %v1663 = vcombine.high %v1659, %v1659
        %v1664 = vcombine.high %v368, %v368
        %v1666 = vunpack.c.l.s4 1966171168
        %v1667 = vunpack.c.0.s8 %v1666
        %v1668 = vlaneseq
        %v1669 = vshrl.u32 %v1668, 7
        %v1670 = vsub.s32 %v1667, %v1669
        %v1671 = vrot.slane %v368, %v1670
        %v1673 = vunpack.c.l.s4 1966171168
        %v1674 = vunpack.c.0.s8 %v1673
        %v1675 = vlaneseq
        %v1676 = vshrl.u32 %v1675, 7
        %v1677 = vsub.s32 %v1674, %v1676
        %v1678 = vrot.slane %v1664, %v1677
        %v1679 = vcombine.high %v1671, %v1671
        %v1680 = vcombine.high %v1678, %v1678
        %v1682 = vunpack.c.l.s4 1966171168
        %v1683 = vunpack.c.0.s8 %v1682
        %v1684 = vlaneseq
        %v1685 = vshrl.u32 %v1684, 7
        %v1686 = vsub.s32 %v1683, %v1685
        %v1687 = vrot.slane %v1671, %v1686
        %v1689 = vunpack.c.l.s4 1966171168
        %v1690 = vunpack.c.0.s8 %v1689
        %v1691 = vlaneseq
        %v1692 = vshrl.u32 %v1691, 7
        %v1693 = vsub.s32 %v1690, %v1692
        %v1694 = vrot.slane %v1678, %v1693
        %v1696 = vunpack.c.l.s4 1966171168
        %v1697 = vunpack.c.0.s8 %v1696
        %v1698 = vlaneseq
        %v1699 = vshrl.u32 %v1698, 7
        %v1700 = vsub.s32 %v1697, %v1699
        %v1701 = vrot.slane %v1679, %v1700
        %v1703 = vunpack.c.l.s4 1966171168
        %v1704 = vunpack.c.0.s8 %v1703
        %v1705 = vlaneseq
        %v1706 = vshrl.u32 %v1705, 7
        %v1707 = vsub.s32 %v1704, %v1706
        %v1708 = vrot.slane %v1680, %v1707
        %v1709 = vcombine.high %v1687, %v1687
        %v1710 = vcombine.high %v1694, %v1694
        %v1711 = vcombine.high %v1701, %v1701
        %v1712 = vcombine.high %v1708, %v1708
        %v1713 = vcombine.high %v369, %v369
        %v1715 = vunpack.c.l.s4 1966171168
        %v1716 = vunpack.c.0.s8 %v1715
        %v1717 = vlaneseq
        %v1718 = vshrl.u32 %v1717, 7
        %v1719 = vsub.s32 %v1716, %v1718
        %v1720 = vrot.slane %v369, %v1719
        %v1722 = vunpack.c.l.s4 1966171168
        %v1723 = vunpack.c.0.s8 %v1722
        %v1724 = vlaneseq
        %v1725 = vshrl.u32 %v1724, 7
        %v1726 = vsub.s32 %v1723, %v1725
        %v1727 = vrot.slane %v1713, %v1726
        %v1728 = vcombine.high %v1720, %v1720
        %v1729 = vcombine.high %v1727, %v1727
        %v1731 = vunpack.c.l.s4 1966171168
        %v1732 = vunpack.c.0.s8 %v1731
        %v1733 = vlaneseq
        %v1734 = vshrl.u32 %v1733, 7
        %v1735 = vsub.s32 %v1732, %v1734
        %v1736 = vrot.slane %v1720, %v1735
        %v1738 = vunpack.c.l.s4 1966171168
        %v1739 = vunpack.c.0.s8 %v1738
        %v1740 = vlaneseq
        %v1741 = vshrl.u32 %v1740, 7
        %v1742 = vsub.s32 %v1739, %v1741
        %v1743 = vrot.slane %v1727, %v1742
        %v1745 = vunpack.c.l.s4 1966171168
        %v1746 = vunpack.c.0.s8 %v1745
        %v1747 = vlaneseq
        %v1748 = vshrl.u32 %v1747, 7
        %v1749 = vsub.s32 %v1746, %v1748
        %v1750 = vrot.slane %v1728, %v1749
        %v1752 = vunpack.c.l.s4 1966171168
        %v1753 = vunpack.c.0.s8 %v1752
        %v1754 = vlaneseq
        %v1755 = vshrl.u32 %v1754, 7
        %v1756 = vsub.s32 %v1753, %v1755
        %v1757 = vrot.slane %v1729, %v1756
        %v1758 = vcombine.high %v1736, %v1736
        %v1759 = vcombine.high %v1743, %v1743
        %v1760 = vcombine.high %v1750, %v1750
        %v1761 = vcombine.high %v1757, %v1757
        %v1762 = vcombine.high %v370, %v370
        %v1764 = vunpack.c.l.s4 1966171168
        %v1765 = vunpack.c.0.s8 %v1764
        %v1766 = vlaneseq
        %v1767 = vshrl.u32 %v1766, 7
        %v1768 = vsub.s32 %v1765, %v1767
        %v1769 = vrot.slane %v370, %v1768
        %v1771 = vunpack.c.l.s4 1966171168
        %v1772 = vunpack.c.0.s8 %v1771
        %v1773 = vlaneseq
        %v1774 = vshrl.u32 %v1773, 7
        %v1775 = vsub.s32 %v1772, %v1774
        %v1776 = vrot.slane %v1762, %v1775
        %v1777 = vcombine.high %v1769, %v1769
        %v1778 = vcombine.high %v1776, %v1776
        %v1780 = vunpack.c.l.s4 1966171168
        %v1781 = vunpack.c.0.s8 %v1780
        %v1782 = vlaneseq
        %v1783 = vshrl.u32 %v1782, 7
        %v1784 = vsub.s32 %v1781, %v1783
        %v1785 = vrot.slane %v1769, %v1784
        %v1787 = vunpack.c.l.s4 1966171168
        %v1788 = vunpack.c.0.s8 %v1787
        %v1789 = vlaneseq
        %v1790 = vshrl.u32 %v1789, 7
        %v1791 = vsub.s32 %v1788, %v1790
        %v1792 = vrot.slane %v1776, %v1791
        %v1794 = vunpack.c.l.s4 1966171168
        %v1795 = vunpack.c.0.s8 %v1794
        %v1796 = vlaneseq
        %v1797 = vshrl.u32 %v1796, 7
        %v1798 = vsub.s32 %v1795, %v1797
        %v1799 = vrot.slane %v1777, %v1798
        %v1801 = vunpack.c.l.s4 1966171168
        %v1802 = vunpack.c.0.s8 %v1801
        %v1803 = vlaneseq
        %v1804 = vshrl.u32 %v1803, 7
        %v1805 = vsub.s32 %v1802, %v1804
        %v1806 = vrot.slane %v1778, %v1805
        %v1807 = vcombine.high %v1785, %v1785
        %v1808 = vcombine.high %v1792, %v1792
        %v1809 = vcombine.high %v1799, %v1799
        %v1810 = vcombine.high %v1806, %v1806
        %v1811 = vcombine.high %v371, %v371
        %v1813 = vunpack.c.l.s4 1966171168
        %v1814 = vunpack.c.0.s8 %v1813
        %v1815 = vlaneseq
        %v1816 = vshrl.u32 %v1815, 7
        %v1817 = vsub.s32 %v1814, %v1816
        %v1818 = vrot.slane %v371, %v1817
        %v1820 = vunpack.c.l.s4 1966171168
        %v1821 = vunpack.c.0.s8 %v1820
        %v1822 = vlaneseq
        %v1823 = vshrl.u32 %v1822, 7
        %v1824 = vsub.s32 %v1821, %v1823
        %v1825 = vrot.slane %v1811, %v1824
        %v1826 = vcombine.high %v1818, %v1818
        %v1827 = vcombine.high %v1825, %v1825
        %v1829 = vunpack.c.l.s4 1966171168
        %v1830 = vunpack.c.0.s8 %v1829
        %v1831 = vlaneseq
        %v1832 = vshrl.u32 %v1831, 7
        %v1833 = vsub.s32 %v1830, %v1832
        %v1834 = vrot.slane %v1818, %v1833
        %v1836 = vunpack.c.l.s4 1966171168
        %v1837 = vunpack.c.0.s8 %v1836
        %v1838 = vlaneseq
        %v1839 = vshrl.u32 %v1838, 7
        %v1840 = vsub.s32 %v1837, %v1839
        %v1841 = vrot.slane %v1825, %v1840
        %v1843 = vunpack.c.l.s4 1966171168
        %v1844 = vunpack.c.0.s8 %v1843
        %v1845 = vlaneseq
        %v1846 = vshrl.u32 %v1845, 7
        %v1847 = vsub.s32 %v1844, %v1846
        %v1848 = vrot.slane %v1826, %v1847
        %v1850 = vunpack.c.l.s4 1966171168
        %v1851 = vunpack.c.0.s8 %v1850
        %v1852 = vlaneseq
        %v1853 = vshrl.u32 %v1852, 7
        %v1854 = vsub.s32 %v1851, %v1853
        %v1855 = vrot.slane %v1827, %v1854
        %v1856 = vcombine.high %v1834, %v1834
        %v1857 = vcombine.high %v1841, %v1841
        %v1858 = vcombine.high %v1848, %v1848
        %v1859 = vcombine.high %v1855, %v1855
        %v1860 = vcombine.high %v372, %v372
        %v1862 = vunpack.c.l.s4 1966171168
        %v1863 = vunpack.c.0.s8 %v1862
        %v1864 = vlaneseq
        %v1865 = vshrl.u32 %v1864, 7
        %v1866 = vsub.s32 %v1863, %v1865
        %v1867 = vrot.slane %v372, %v1866
        %v1869 = vunpack.c.l.s4 1966171168
        %v1870 = vunpack.c.0.s8 %v1869
        %v1871 = vlaneseq
        %v1872 = vshrl.u32 %v1871, 7
        %v1873 = vsub.s32 %v1870, %v1872
        %v1874 = vrot.slane %v1860, %v1873
        %v1875 = vcombine.high %v1867, %v1867
        %v1876 = vcombine.high %v1874, %v1874
        %v1878 = vunpack.c.l.s4 1966171168
        %v1879 = vunpack.c.0.s8 %v1878
        %v1880 = vlaneseq
        %v1881 = vshrl.u32 %v1880, 7
        %v1882 = vsub.s32 %v1879, %v1881
        %v1883 = vrot.slane %v1867, %v1882
        %v1885 = vunpack.c.l.s4 1966171168
        %v1886 = vunpack.c.0.s8 %v1885
        %v1887 = vlaneseq
        %v1888 = vshrl.u32 %v1887, 7
        %v1889 = vsub.s32 %v1886, %v1888
        %v1890 = vrot.slane %v1874, %v1889
        %v1892 = vunpack.c.l.s4 1966171168
        %v1893 = vunpack.c.0.s8 %v1892
        %v1894 = vlaneseq
        %v1895 = vshrl.u32 %v1894, 7
        %v1896 = vsub.s32 %v1893, %v1895
        %v1897 = vrot.slane %v1875, %v1896
        %v1899 = vunpack.c.l.s4 1966171168
        %v1900 = vunpack.c.0.s8 %v1899
        %v1901 = vlaneseq
        %v1902 = vshrl.u32 %v1901, 7
        %v1903 = vsub.s32 %v1900, %v1902
        %v1904 = vrot.slane %v1876, %v1903
        %v1905 = vcombine.high %v1883, %v1883
        %v1906 = vcombine.high %v1890, %v1890
        %v1907 = vcombine.high %v1897, %v1897
        %v1908 = vcombine.high %v1904, %v1904
        %v1909 = vcombine.high %v373, %v373
        %v1911 = vunpack.c.l.s4 1966171168
        %v1912 = vunpack.c.0.s8 %v1911
        %v1913 = vlaneseq
        %v1914 = vshrl.u32 %v1913, 7
        %v1915 = vsub.s32 %v1912, %v1914
        %v1916 = vrot.slane %v373, %v1915
        %v1918 = vunpack.c.l.s4 1966171168
        %v1919 = vunpack.c.0.s8 %v1918
        %v1920 = vlaneseq
        %v1921 = vshrl.u32 %v1920, 7
        %v1922 = vsub.s32 %v1919, %v1921
        %v1923 = vrot.slane %v1909, %v1922
        %v1924 = vcombine.high %v1916, %v1916
        %v1925 = vcombine.high %v1923, %v1923
        %v1927 = vunpack.c.l.s4 1966171168
        %v1928 = vunpack.c.0.s8 %v1927
        %v1929 = vlaneseq
        %v1930 = vshrl.u32 %v1929, 7
        %v1931 = vsub.s32 %v1928, %v1930
        %v1932 = vrot.slane %v1916, %v1931
        %v1934 = vunpack.c.l.s4 1966171168
        %v1935 = vunpack.c.0.s8 %v1934
        %v1936 = vlaneseq
        %v1937 = vshrl.u32 %v1936, 7
        %v1938 = vsub.s32 %v1935, %v1937
        %v1939 = vrot.slane %v1923, %v1938
        %v1941 = vunpack.c.l.s4 1966171168
        %v1942 = vunpack.c.0.s8 %v1941
        %v1943 = vlaneseq
        %v1944 = vshrl.u32 %v1943, 7
        %v1945 = vsub.s32 %v1942, %v1944
        %v1946 = vrot.slane %v1924, %v1945
        %v1948 = vunpack.c.l.s4 1966171168
        %v1949 = vunpack.c.0.s8 %v1948
        %v1950 = vlaneseq
        %v1951 = vshrl.u32 %v1950, 7
        %v1952 = vsub.s32 %v1949, %v1951
        %v1953 = vrot.slane %v1925, %v1952
        %v1954 = vcombine.high %v1932, %v1932
        %v1955 = vcombine.high %v1939, %v1939
        %v1956 = vcombine.high %v1946, %v1946
        %v1957 = vcombine.high %v1953, %v1953
        %v1958 = vcombine.high %v374, %v374
        %v1960 = vunpack.c.l.s4 1966171168
        %v1961 = vunpack.c.0.s8 %v1960
        %v1962 = vlaneseq
        %v1963 = vshrl.u32 %v1962, 7
        %v1964 = vsub.s32 %v1961, %v1963
        %v1965 = vrot.slane %v374, %v1964
        %v1967 = vunpack.c.l.s4 1966171168
        %v1968 = vunpack.c.0.s8 %v1967
        %v1969 = vlaneseq
        %v1970 = vshrl.u32 %v1969, 7
        %v1971 = vsub.s32 %v1968, %v1970
        %v1972 = vrot.slane %v1958, %v1971
        %v1973 = vcombine.high %v1965, %v1965
        %v1974 = vcombine.high %v1972, %v1972
        %v1976 = vunpack.c.l.s4 1966171168
        %v1977 = vunpack.c.0.s8 %v1976
        %v1978 = vlaneseq
        %v1979 = vshrl.u32 %v1978, 7
        %v1980 = vsub.s32 %v1977, %v1979
        %v1981 = vrot.slane %v1965, %v1980
        %v1983 = vunpack.c.l.s4 1966171168
        %v1984 = vunpack.c.0.s8 %v1983
        %v1985 = vlaneseq
        %v1986 = vshrl.u32 %v1985, 7
        %v1987 = vsub.s32 %v1984, %v1986
        %v1988 = vrot.slane %v1972, %v1987
        %v1990 = vunpack.c.l.s4 1966171168
        %v1991 = vunpack.c.0.s8 %v1990
        %v1992 = vlaneseq
        %v1993 = vshrl.u32 %v1992, 7
        %v1994 = vsub.s32 %v1991, %v1993
        %v1995 = vrot.slane %v1973, %v1994
        %v1997 = vunpack.c.l.s4 1966171168
        %v1998 = vunpack.c.0.s8 %v1997
        %v1999 = vlaneseq
        %v2000 = vshrl.u32 %v1999, 7
        %v2001 = vsub.s32 %v1998, %v2000
        %v2002 = vrot.slane %v1974, %v2001
        %v2003 = vcombine.high %v1981, %v1981
        %v2004 = vcombine.high %v1988, %v1988
        %v2005 = vcombine.high %v1995, %v1995
        %v2006 = vcombine.high %v2002, %v2002
        %v2007 = vcombine.high %v375, %v375
        %v2009 = vunpack.c.l.s4 1966171168
        %v2010 = vunpack.c.0.s8 %v2009
        %v2011 = vlaneseq
        %v2012 = vshrl.u32 %v2011, 7
        %v2013 = vsub.s32 %v2010, %v2012
        %v2014 = vrot.slane %v375, %v2013
        %v2016 = vunpack.c.l.s4 1966171168
        %v2017 = vunpack.c.0.s8 %v2016
        %v2018 = vlaneseq
        %v2019 = vshrl.u32 %v2018, 7
        %v2020 = vsub.s32 %v2017, %v2019
        %v2021 = vrot.slane %v2007, %v2020
        %v2022 = vcombine.high %v2014, %v2014
        %v2023 = vcombine.high %v2021, %v2021
        %v2025 = vunpack.c.l.s4 1966171168
        %v2026 = vunpack.c.0.s8 %v2025
        %v2027 = vlaneseq
        %v2028 = vshrl.u32 %v2027, 7
        %v2029 = vsub.s32 %v2026, %v2028
        %v2030 = vrot.slane %v2014, %v2029
        %v2032 = vunpack.c.l.s4 1966171168
        %v2033 = vunpack.c.0.s8 %v2032
        %v2034 = vlaneseq
        %v2035 = vshrl.u32 %v2034, 7
        %v2036 = vsub.s32 %v2033, %v2035
        %v2037 = vrot.slane %v2021, %v2036
        %v2039 = vunpack.c.l.s4 1966171168
        %v2040 = vunpack.c.0.s8 %v2039
        %v2041 = vlaneseq
        %v2042 = vshrl.u32 %v2041, 7
        %v2043 = vsub.s32 %v2040, %v2042
        %v2044 = vrot.slane %v2022, %v2043
        %v2046 = vunpack.c.l.s4 1966171168
        %v2047 = vunpack.c.0.s8 %v2046
        %v2048 = vlaneseq
        %v2049 = vshrl.u32 %v2048, 7
        %v2050 = vsub.s32 %v2047, %v2049
        %v2051 = vrot.slane %v2023, %v2050
        %v2052 = vcombine.high %v2030, %v2030
        %v2053 = vcombine.high %v2037, %v2037
        %v2054 = vcombine.high %v2044, %v2044
        %v2055 = vcombine.high %v2051, %v2051
        %v2056 = vcombine.high %v376, %v376
        %v2058 = vunpack.c.l.s4 1966171168
        %v2059 = vunpack.c.0.s8 %v2058
        %v2060 = vlaneseq
        %v2061 = vshrl.u32 %v2060, 7
        %v2062 = vsub.s32 %v2059, %v2061
        %v2063 = vrot.slane %v376, %v2062
        %v2065 = vunpack.c.l.s4 1966171168
        %v2066 = vunpack.c.0.s8 %v2065
        %v2067 = vlaneseq
        %v2068 = vshrl.u32 %v2067, 7
        %v2069 = vsub.s32 %v2066, %v2068
        %v2070 = vrot.slane %v2056, %v2069
        %v2071 = vcombine.high %v2063, %v2063
        %v2072 = vcombine.high %v2070, %v2070
        %v2074 = vunpack.c.l.s4 1966171168
        %v2075 = vunpack.c.0.s8 %v2074
        %v2076 = vlaneseq
        %v2077 = vshrl.u32 %v2076, 7
        %v2078 = vsub.s32 %v2075, %v2077
        %v2079 = vrot.slane %v2063, %v2078
        %v2081 = vunpack.c.l.s4 1966171168
        %v2082 = vunpack.c.0.s8 %v2081
        %v2083 = vlaneseq
        %v2084 = vshrl.u32 %v2083, 7
        %v2085 = vsub.s32 %v2082, %v2084
        %v2086 = vrot.slane %v2070, %v2085
        %v2088 = vunpack.c.l.s4 1966171168
        %v2089 = vunpack.c.0.s8 %v2088
        %v2090 = vlaneseq
        %v2091 = vshrl.u32 %v2090, 7
        %v2092 = vsub.s32 %v2089, %v2091
        %v2093 = vrot.slane %v2071, %v2092
        %v2095 = vunpack.c.l.s4 1966171168
        %v2096 = vunpack.c.0.s8 %v2095
        %v2097 = vlaneseq
        %v2098 = vshrl.u32 %v2097, 7
        %v2099 = vsub.s32 %v2096, %v2098
        %v2100 = vrot.slane %v2072, %v2099
        %v2101 = vcombine.high %v2079, %v2079
        %v2102 = vcombine.high %v2086, %v2086
        %v2103 = vcombine.high %v2093, %v2093
        %v2104 = vcombine.high %v2100, %v2100
        %v2105 = vlaneseq
        %v2106 = vshrl.u32 %v2105, 7
        %v2107 = vsub.s32 0, %v2106
        %v2108 = vrot.slane %v1344, %v2107
        %v2109 = vlaneseq
        %v2110 = vshrl.u32 %v2109, 7
        %v2111 = vsub.s32 0, %v2110
        %v2112 = vrot.slane %v1358, %v2111
        %v2113 = vlaneseq
        %v2114 = vshrl.u32 %v2113, 7
        %v2115 = vsub.s32 0, %v2114
        %v2116 = vrot.slane %v1366, %v2115
        %v2117 = vlaneseq
        %v2118 = vshrl.u32 %v2117, 7
        %v2119 = vsub.s32 0, %v2118
        %v2120 = vrot.slane %v1368, %v2119
        %v2121 = vlaneseq
        %v2122 = vshrl.u32 %v2121, 7
        %v2123 = vsub.s32 0, %v2122
        %v2124 = vrot.slane %v1351, %v2123
        %v2125 = vlaneseq
        %v2126 = vshrl.u32 %v2125, 7
        %v2127 = vsub.s32 0, %v2126
        %v2128 = vrot.slane %v1365, %v2127
        %v2129 = vlaneseq
        %v2130 = vshrl.u32 %v2129, 7
        %v2131 = vsub.s32 0, %v2130
        %v2132 = vrot.slane %v1367, %v2131
        %v2133 = vlaneseq
        %v2134 = vshrl.u32 %v2133, 7
        %v2135 = vsub.s32 0, %v2134
        %v2136 = vrot.slane %v1369, %v2135
        %v2137 = vlaneseq
        %v2138 = vshrl.u32 %v2137, 7
        %v2139 = vsub.s32 0, %v2138
        %v2140 = vrot.slane %v1393, %v2139
        %v2141 = vlaneseq
        %v2142 = vshrl.u32 %v2141, 7
        %v2143 = vsub.s32 0, %v2142
        %v2144 = vrot.slane %v1407, %v2143
        %v2145 = vlaneseq
        %v2146 = vshrl.u32 %v2145, 7
        %v2147 = vsub.s32 0, %v2146
        %v2148 = vrot.slane %v1415, %v2147
        %v2149 = vlaneseq
        %v2150 = vshrl.u32 %v2149, 7
        %v2151 = vsub.s32 0, %v2150
        %v2152 = vrot.slane %v1417, %v2151
        %v2153 = vlaneseq
        %v2154 = vshrl.u32 %v2153, 7
        %v2155 = vsub.s32 0, %v2154
        %v2156 = vrot.slane %v1400, %v2155
        %v2157 = vlaneseq
        %v2158 = vshrl.u32 %v2157, 7
        %v2159 = vsub.s32 0, %v2158
        %v2160 = vrot.slane %v1414, %v2159
        %v2161 = vlaneseq
        %v2162 = vshrl.u32 %v2161, 7
        %v2163 = vsub.s32 0, %v2162
        %v2164 = vrot.slane %v1416, %v2163
        %v2165 = vlaneseq
        %v2166 = vshrl.u32 %v2165, 7
        %v2167 = vsub.s32 0, %v2166
        %v2168 = vrot.slane %v1418, %v2167
        %v2169 = vlaneseq
        %v2170 = vshrl.u32 %v2169, 7
        %v2171 = vsub.s32 0, %v2170
        %v2172 = vrot.slane %v1442, %v2171
        %v2173 = vlaneseq
        %v2174 = vshrl.u32 %v2173, 7
        %v2175 = vsub.s32 0, %v2174
        %v2176 = vrot.slane %v1456, %v2175
        %v2177 = vlaneseq
        %v2178 = vshrl.u32 %v2177, 7
        %v2179 = vsub.s32 0, %v2178
        %v2180 = vrot.slane %v1464, %v2179
        %v2181 = vlaneseq
        %v2182 = vshrl.u32 %v2181, 7
        %v2183 = vsub.s32 0, %v2182
        %v2184 = vrot.slane %v1466, %v2183
        %v2185 = vlaneseq
        %v2186 = vshrl.u32 %v2185, 7
        %v2187 = vsub.s32 0, %v2186
        %v2188 = vrot.slane %v1449, %v2187
        %v2189 = vlaneseq
        %v2190 = vshrl.u32 %v2189, 7
        %v2191 = vsub.s32 0, %v2190
        %v2192 = vrot.slane %v1463, %v2191
        %v2193 = vlaneseq
        %v2194 = vshrl.u32 %v2193, 7
        %v2195 = vsub.s32 0, %v2194
        %v2196 = vrot.slane %v1465, %v2195
        %v2197 = vlaneseq
        %v2198 = vshrl.u32 %v2197, 7
        %v2199 = vsub.s32 0, %v2198
        %v2200 = vrot.slane %v1467, %v2199
        %v2201 = vlaneseq
        %v2202 = vshrl.u32 %v2201, 7
        %v2203 = vsub.s32 0, %v2202
        %v2204 = vrot.slane %v1491, %v2203
        %v2205 = vlaneseq
        %v2206 = vshrl.u32 %v2205, 7
        %v2207 = vsub.s32 0, %v2206
        %v2208 = vrot.slane %v1505, %v2207
        %v2209 = vlaneseq
        %v2210 = vshrl.u32 %v2209, 7
        %v2211 = vsub.s32 0, %v2210
        %v2212 = vrot.slane %v1513, %v2211
        %v2213 = vlaneseq
        %v2214 = vshrl.u32 %v2213, 7
        %v2215 = vsub.s32 0, %v2214
        %v2216 = vrot.slane %v1515, %v2215
        %v2217 = vlaneseq
        %v2218 = vshrl.u32 %v2217, 7
        %v2219 = vsub.s32 0, %v2218
        %v2220 = vrot.slane %v1498, %v2219
        %v2221 = vlaneseq
        %v2222 = vshrl.u32 %v2221, 7
        %v2223 = vsub.s32 0, %v2222
        %v2224 = vrot.slane %v1512, %v2223
        %v2225 = vlaneseq
        %v2226 = vshrl.u32 %v2225, 7
        %v2227 = vsub.s32 0, %v2226
        %v2228 = vrot.slane %v1514, %v2227
        %v2229 = vlaneseq
        %v2230 = vshrl.u32 %v2229, 7
        %v2231 = vsub.s32 0, %v2230
        %v2232 = vrot.slane %v1516, %v2231
        %v2233 = vlaneseq
        %v2234 = vshrl.u32 %v2233, 7
        %v2235 = vsub.s32 0, %v2234
        %v2236 = vrot.slane %v1540, %v2235
        %v2237 = vlaneseq
        %v2238 = vshrl.u32 %v2237, 7
        %v2239 = vsub.s32 0, %v2238
        %v2240 = vrot.slane %v1554, %v2239
        %v2241 = vlaneseq
        %v2242 = vshrl.u32 %v2241, 7
        %v2243 = vsub.s32 0, %v2242
        %v2244 = vrot.slane %v1562, %v2243
        %v2245 = vlaneseq
        %v2246 = vshrl.u32 %v2245, 7
        %v2247 = vsub.s32 0, %v2246
        %v2248 = vrot.slane %v1564, %v2247
        %v2249 = vlaneseq
        %v2250 = vshrl.u32 %v2249, 7
        %v2251 = vsub.s32 0, %v2250
        %v2252 = vrot.slane %v1547, %v2251
        %v2253 = vlaneseq
        %v2254 = vshrl.u32 %v2253, 7
        %v2255 = vsub.s32 0, %v2254
        %v2256 = vrot.slane %v1561, %v2255
        %v2257 = vlaneseq
        %v2258 = vshrl.u32 %v2257, 7
        %v2259 = vsub.s32 0, %v2258
        %v2260 = vrot.slane %v1563, %v2259
        %v2261 = vlaneseq
        %v2262 = vshrl.u32 %v2261, 7
        %v2263 = vsub.s32 0, %v2262
        %v2264 = vrot.slane %v1565, %v2263
        %v2265 = vlaneseq
        %v2266 = vshrl.u32 %v2265, 7
        %v2267 = vsub.s32 0, %v2266
        %v2268 = vrot.slane %v1589, %v2267
        %v2269 = vlaneseq
        %v2270 = vshrl.u32 %v2269, 7
        %v2271 = vsub.s32 0, %v2270
        %v2272 = vrot.slane %v1603, %v2271
        %v2273 = vlaneseq
        %v2274 = vshrl.u32 %v2273, 7
        %v2275 = vsub.s32 0, %v2274
        %v2276 = vrot.slane %v1611, %v2275
        %v2277 = vlaneseq
        %v2278 = vshrl.u32 %v2277, 7
        %v2279 = vsub.s32 0, %v2278
        %v2280 = vrot.slane %v1613, %v2279
        %v2281 = vlaneseq
        %v2282 = vshrl.u32 %v2281, 7
        %v2283 = vsub.s32 0, %v2282
        %v2284 = vrot.slane %v1596, %v2283
        %v2285 = vlaneseq
        %v2286 = vshrl.u32 %v2285, 7
        %v2287 = vsub.s32 0, %v2286
        %v2288 = vrot.slane %v1610, %v2287
        %v2289 = vlaneseq
        %v2290 = vshrl.u32 %v2289, 7
        %v2291 = vsub.s32 0, %v2290
        %v2292 = vrot.slane %v1612, %v2291
        %v2293 = vlaneseq
        %v2294 = vshrl.u32 %v2293, 7
        %v2295 = vsub.s32 0, %v2294
        %v2296 = vrot.slane %v1614, %v2295
        %v2297 = vlaneseq
        %v2298 = vshrl.u32 %v2297, 7
        %v2299 = vsub.s32 0, %v2298
        %v2300 = vrot.slane %v1638, %v2299
        %v2301 = vlaneseq
        %v2302 = vshrl.u32 %v2301, 7
        %v2303 = vsub.s32 0, %v2302
        %v2304 = vrot.slane %v1652, %v2303
        %v2305 = vlaneseq
        %v2306 = vshrl.u32 %v2305, 7
        %v2307 = vsub.s32 0, %v2306
        %v2308 = vrot.slane %v1660, %v2307
        %v2309 = vlaneseq
        %v2310 = vshrl.u32 %v2309, 7
        %v2311 = vsub.s32 0, %v2310
        %v2312 = vrot.slane %v1662, %v2311
        %v2313 = vlaneseq
        %v2314 = vshrl.u32 %v2313, 7
        %v2315 = vsub.s32 0, %v2314
        %v2316 = vrot.slane %v1645, %v2315
        %v2317 = vlaneseq
        %v2318 = vshrl.u32 %v2317, 7
        %v2319 = vsub.s32 0, %v2318
        %v2320 = vrot.slane %v1659, %v2319
        %v2321 = vlaneseq
        %v2322 = vshrl.u32 %v2321, 7
        %v2323 = vsub.s32 0, %v2322
        %v2324 = vrot.slane %v1661, %v2323
        %v2325 = vlaneseq
        %v2326 = vshrl.u32 %v2325, 7
        %v2327 = vsub.s32 0, %v2326
        %v2328 = vrot.slane %v1663, %v2327
        %v2329 = vlaneseq
        %v2330 = vshrl.u32 %v2329, 7
        %v2331 = vsub.s32 0, %v2330
        %v2332 = vrot.slane %v1687, %v2331
        %v2333 = vlaneseq
        %v2334 = vshrl.u32 %v2333, 7
        %v2335 = vsub.s32 0, %v2334
        %v2336 = vrot.slane %v1701, %v2335
        %v2337 = vlaneseq
        %v2338 = vshrl.u32 %v2337, 7
        %v2339 = vsub.s32 0, %v2338
        %v2340 = vrot.slane %v1709, %v2339
        %v2341 = vlaneseq
        %v2342 = vshrl.u32 %v2341, 7
        %v2343 = vsub.s32 0, %v2342
        %v2344 = vrot.slane %v1711, %v2343
        %v2345 = vlaneseq
        %v2346 = vshrl.u32 %v2345, 7
        %v2347 = vsub.s32 0, %v2346
        %v2348 = vrot.slane %v1694, %v2347
        %v2349 = vlaneseq
        %v2350 = vshrl.u32 %v2349, 7
        %v2351 = vsub.s32 0, %v2350
        %v2352 = vrot.slane %v1708, %v2351
        %v2353 = vlaneseq
        %v2354 = vshrl.u32 %v2353, 7
        %v2355 = vsub.s32 0, %v2354
        %v2356 = vrot.slane %v1710, %v2355
        %v2357 = vlaneseq
        %v2358 = vshrl.u32 %v2357, 7
        %v2359 = vsub.s32 0, %v2358
        %v2360 = vrot.slane %v1712, %v2359
        %v2361 = vlaneseq
        %v2362 = vshrl.u32 %v2361, 7
        %v2363 = vsub.s32 0, %v2362
        %v2364 = vrot.slane %v1736, %v2363
        %v2365 = vlaneseq
        %v2366 = vshrl.u32 %v2365, 7
        %v2367 = vsub.s32 0, %v2366
        %v2368 = vrot.slane %v1750, %v2367
        %v2369 = vlaneseq
        %v2370 = vshrl.u32 %v2369, 7
        %v2371 = vsub.s32 0, %v2370
        %v2372 = vrot.slane %v1758, %v2371
        %v2373 = vlaneseq
        %v2374 = vshrl.u32 %v2373, 7
        %v2375 = vsub.s32 0, %v2374
        %v2376 = vrot.slane %v1760, %v2375
        %v2377 = vlaneseq
        %v2378 = vshrl.u32 %v2377, 7
        %v2379 = vsub.s32 0, %v2378
        %v2380 = vrot.slane %v1743, %v2379
        %v2381 = vlaneseq
        %v2382 = vshrl.u32 %v2381, 7
        %v2383 = vsub.s32 0, %v2382
        %v2384 = vrot.slane %v1757, %v2383
        %v2385 = vlaneseq
        %v2386 = vshrl.u32 %v2385, 7
        %v2387 = vsub.s32 0, %v2386
        %v2388 = vrot.slane %v1759, %v2387
        %v2389 = vlaneseq
        %v2390 = vshrl.u32 %v2389, 7
        %v2391 = vsub.s32 0, %v2390
        %v2392 = vrot.slane %v1761, %v2391
        %v2393 = vlaneseq
        %v2394 = vshrl.u32 %v2393, 7
        %v2395 = vsub.s32 0, %v2394
        %v2396 = vrot.slane %v1785, %v2395
        %v2397 = vlaneseq
        %v2398 = vshrl.u32 %v2397, 7
        %v2399 = vsub.s32 0, %v2398
        %v2400 = vrot.slane %v1799, %v2399
        %v2401 = vlaneseq
        %v2402 = vshrl.u32 %v2401, 7
        %v2403 = vsub.s32 0, %v2402
        %v2404 = vrot.slane %v1807, %v2403
        %v2405 = vlaneseq
        %v2406 = vshrl.u32 %v2405, 7
        %v2407 = vsub.s32 0, %v2406
        %v2408 = vrot.slane %v1809, %v2407
        %v2409 = vlaneseq
        %v2410 = vshrl.u32 %v2409, 7
        %v2411 = vsub.s32 0, %v2410
        %v2412 = vrot.slane %v1792, %v2411
        %v2413 = vlaneseq
        %v2414 = vshrl.u32 %v2413, 7
        %v2415 = vsub.s32 0, %v2414
        %v2416 = vrot.slane %v1806, %v2415
        %v2417 = vlaneseq
        %v2418 = vshrl.u32 %v2417, 7
        %v2419 = vsub.s32 0, %v2418
        %v2420 = vrot.slane %v1808, %v2419
        %v2421 = vlaneseq
        %v2422 = vshrl.u32 %v2421, 7
        %v2423 = vsub.s32 0, %v2422
        %v2424 = vrot.slane %v1810, %v2423
        %v2425 = vlaneseq
        %v2426 = vshrl.u32 %v2425, 7
        %v2427 = vsub.s32 0, %v2426
        %v2428 = vrot.slane %v1834, %v2427
        %v2429 = vlaneseq
        %v2430 = vshrl.u32 %v2429, 7
        %v2431 = vsub.s32 0, %v2430
        %v2432 = vrot.slane %v1848, %v2431
        %v2433 = vlaneseq
        %v2434 = vshrl.u32 %v2433, 7
        %v2435 = vsub.s32 0, %v2434
        %v2436 = vrot.slane %v1856, %v2435
        %v2437 = vlaneseq
        %v2438 = vshrl.u32 %v2437, 7
        %v2439 = vsub.s32 0, %v2438
        %v2440 = vrot.slane %v1858, %v2439
        %v2441 = vlaneseq
        %v2442 = vshrl.u32 %v2441, 7
        %v2443 = vsub.s32 0, %v2442
        %v2444 = vrot.slane %v1841, %v2443
        %v2445 = vlaneseq
        %v2446 = vshrl.u32 %v2445, 7
        %v2447 = vsub.s32 0, %v2446
        %v2448 = vrot.slane %v1855, %v2447
        %v2449 = vlaneseq
        %v2450 = vshrl.u32 %v2449, 7
        %v2451 = vsub.s32 0, %v2450
        %v2452 = vrot.slane %v1857, %v2451
        %v2453 = vlaneseq
        %v2454 = vshrl.u32 %v2453, 7
        %v2455 = vsub.s32 0, %v2454
        %v2456 = vrot.slane %v1859, %v2455
        %v2457 = vlaneseq
        %v2458 = vshrl.u32 %v2457, 7
        %v2459 = vsub.s32 0, %v2458
        %v2460 = vrot.slane %v1883, %v2459
        %v2461 = vlaneseq
        %v2462 = vshrl.u32 %v2461, 7
        %v2463 = vsub.s32 0, %v2462
        %v2464 = vrot.slane %v1897, %v2463
        %v2465 = vlaneseq
        %v2466 = vshrl.u32 %v2465, 7
        %v2467 = vsub.s32 0, %v2466
        %v2468 = vrot.slane %v1905, %v2467
        %v2469 = vlaneseq
        %v2470 = vshrl.u32 %v2469, 7
        %v2471 = vsub.s32 0, %v2470
        %v2472 = vrot.slane %v1907, %v2471
        %v2473 = vlaneseq
        %v2474 = vshrl.u32 %v2473, 7
        %v2475 = vsub.s32 0, %v2474
        %v2476 = vrot.slane %v1890, %v2475
        %v2477 = vlaneseq
        %v2478 = vshrl.u32 %v2477, 7
        %v2479 = vsub.s32 0, %v2478
        %v2480 = vrot.slane %v1904, %v2479
        %v2481 = vlaneseq
        %v2482 = vshrl.u32 %v2481, 7
        %v2483 = vsub.s32 0, %v2482
        %v2484 = vrot.slane %v1906, %v2483
        %v2485 = vlaneseq
        %v2486 = vshrl.u32 %v2485, 7
        %v2487 = vsub.s32 0, %v2486
        %v2488 = vrot.slane %v1908, %v2487
        %v2489 = vlaneseq
        %v2490 = vshrl.u32 %v2489, 7
        %v2491 = vsub.s32 0, %v2490
        %v2492 = vrot.slane %v1932, %v2491
        %v2493 = vlaneseq
        %v2494 = vshrl.u32 %v2493, 7
        %v2495 = vsub.s32 0, %v2494
        %v2496 = vrot.slane %v1946, %v2495
        %v2497 = vlaneseq
        %v2498 = vshrl.u32 %v2497, 7
        %v2499 = vsub.s32 0, %v2498
        %v2500 = vrot.slane %v1954, %v2499
        %v2501 = vlaneseq
        %v2502 = vshrl.u32 %v2501, 7
        %v2503 = vsub.s32 0, %v2502
        %v2504 = vrot.slane %v1956, %v2503
        %v2505 = vlaneseq
        %v2506 = vshrl.u32 %v2505, 7
        %v2507 = vsub.s32 0, %v2506
        %v2508 = vrot.slane %v1939, %v2507
        %v2509 = vlaneseq
        %v2510 = vshrl.u32 %v2509, 7
        %v2511 = vsub.s32 0, %v2510
        %v2512 = vrot.slane %v1953, %v2511
        %v2513 = vlaneseq
        %v2514 = vshrl.u32 %v2513, 7
        %v2515 = vsub.s32 0, %v2514
        %v2516 = vrot.slane %v1955, %v2515
        %v2517 = vlaneseq
        %v2518 = vshrl.u32 %v2517, 7
        %v2519 = vsub.s32 0, %v2518
        %v2520 = vrot.slane %v1957, %v2519
        %v2521 = vlaneseq
        %v2522 = vshrl.u32 %v2521, 7
        %v2523 = vsub.s32 0, %v2522
        %v2524 = vrot.slane %v1981, %v2523
        %v2525 = vlaneseq
        %v2526 = vshrl.u32 %v2525, 7
        %v2527 = vsub.s32 0, %v2526
        %v2528 = vrot.slane %v1995, %v2527
        %v2529 = vlaneseq
        %v2530 = vshrl.u32 %v2529, 7
        %v2531 = vsub.s32 0, %v2530
        %v2532 = vrot.slane %v2003, %v2531
        %v2533 = vlaneseq
        %v2534 = vshrl.u32 %v2533, 7
        %v2535 = vsub.s32 0, %v2534
        %v2536 = vrot.slane %v2005, %v2535
        %v2537 = vlaneseq
        %v2538 = vshrl.u32 %v2537, 7
        %v2539 = vsub.s32 0, %v2538
        %v2540 = vrot.slane %v1988, %v2539
        %v2541 = vlaneseq
        %v2542 = vshrl.u32 %v2541, 7
        %v2543 = vsub.s32 0, %v2542
        %v2544 = vrot.slane %v2002, %v2543
        %v2545 = vlaneseq
        %v2546 = vshrl.u32 %v2545, 7
        %v2547 = vsub.s32 0, %v2546
        %v2548 = vrot.slane %v2004, %v2547
        %v2549 = vlaneseq
        %v2550 = vshrl.u32 %v2549, 7
        %v2551 = vsub.s32 0, %v2550
        %v2552 = vrot.slane %v2006, %v2551
        %v2553 = vlaneseq
        %v2554 = vshrl.u32 %v2553, 7
        %v2555 = vsub.s32 0, %v2554
        %v2556 = vrot.slane %v2030, %v2555
        %v2557 = vlaneseq
        %v2558 = vshrl.u32 %v2557, 7
        %v2559 = vsub.s32 0, %v2558
        %v2560 = vrot.slane %v2044, %v2559
        %v2561 = vlaneseq
        %v2562 = vshrl.u32 %v2561, 7
        %v2563 = vsub.s32 0, %v2562
        %v2564 = vrot.slane %v2052, %v2563
        %v2565 = vlaneseq
        %v2566 = vshrl.u32 %v2565, 7
        %v2567 = vsub.s32 0, %v2566
        %v2568 = vrot.slane %v2054, %v2567
        %v2569 = vlaneseq
        %v2570 = vshrl.u32 %v2569, 7
        %v2571 = vsub.s32 0, %v2570
        %v2572 = vrot.slane %v2037, %v2571
        %v2573 = vlaneseq
        %v2574 = vshrl.u32 %v2573, 7
        %v2575 = vsub.s32 0, %v2574
        %v2576 = vrot.slane %v2051, %v2575
        %v2577 = vlaneseq
        %v2578 = vshrl.u32 %v2577, 7
        %v2579 = vsub.s32 0, %v2578
        %v2580 = vrot.slane %v2053, %v2579
        %v2581 = vlaneseq
        %v2582 = vshrl.u32 %v2581, 7
        %v2583 = vsub.s32 0, %v2582
        %v2584 = vrot.slane %v2055, %v2583
        %v2585 = vlaneseq
        %v2586 = vshrl.u32 %v2585, 7
        %v2587 = vsub.s32 0, %v2586
        %v2588 = vrot.slane %v2079, %v2587
        %v2589 = vlaneseq
        %v2590 = vshrl.u32 %v2589, 7
        %v2591 = vsub.s32 0, %v2590
        %v2592 = vrot.slane %v2093, %v2591
        %v2593 = vlaneseq
        %v2594 = vshrl.u32 %v2593, 7
        %v2595 = vsub.s32 0, %v2594
        %v2596 = vrot.slane %v2101, %v2595
        %v2597 = vlaneseq
        %v2598 = vshrl.u32 %v2597, 7
        %v2599 = vsub.s32 0, %v2598
        %v2600 = vrot.slane %v2103, %v2599
        %v2601 = vlaneseq
        %v2602 = vshrl.u32 %v2601, 7
        %v2603 = vsub.s32 0, %v2602
        %v2604 = vrot.slane %v2086, %v2603
        %v2605 = vlaneseq
        %v2606 = vshrl.u32 %v2605, 7
        %v2607 = vsub.s32 0, %v2606
        %v2608 = vrot.slane %v2100, %v2607
        %v2609 = vlaneseq
        %v2610 = vshrl.u32 %v2609, 7
        %v2611 = vsub.s32 0, %v2610
        %v2612 = vrot.slane %v2102, %v2611
        %v2613 = vlaneseq
        %v2614 = vshrl.u32 %v2613, 7
        %v2615 = vsub.s32 0, %v2614
        %v2616 = vrot.slane %v2104, %v2615
        %v2745 = vsel %vm231, %v416, %v2108
        %v2746 = vsel %vm231, %v430, %v2112
        %v2747 = vsel %vm231, %v438, %v2116
        %v2748 = vsel %vm231, %v440, %v2120
        %v2749 = vsel %vm231, %v423, %v2124
        %v2750 = vsel %vm231, %v437, %v2128
        %v2751 = vsel %vm231, %v439, %v2132
        %v2752 = vsel %vm231, %v441, %v2136
        %v2753 = vsel %vm231, %v465, %v2140
        %v2754 = vsel %vm231, %v479, %v2144
        %v2755 = vsel %vm231, %v487, %v2148
        %v2756 = vsel %vm231, %v489, %v2152
        %v2757 = vsel %vm231, %v472, %v2156
        %v2758 = vsel %vm231, %v486, %v2160
        %v2759 = vsel %vm231, %v488, %v2164
        %v2760 = vsel %vm231, %v490, %v2168
        %v2761 = vsel %vm231, %v514, %v2172
        %v2762 = vsel %vm231, %v528, %v2176
        %v2763 = vsel %vm231, %v536, %v2180
        %v2764 = vsel %vm231, %v538, %v2184
        %v2765 = vsel %vm231, %v521, %v2188
        %v2766 = vsel %vm231, %v535, %v2192
        %v2767 = vsel %vm231, %v537, %v2196
        %v2768 = vsel %vm231, %v539, %v2200
        %v2769 = vsel %vm231, %v563, %v2204
        %v2770 = vsel %vm231, %v577, %v2208
        %v2771 = vsel %vm231, %v585, %v2212
        %v2772 = vsel %vm231, %v587, %v2216
        %v2773 = vsel %vm231, %v570, %v2220
        %v2774 = vsel %vm231, %v584, %v2224
        %v2775 = vsel %vm231, %v586, %v2228
        %v2776 = vsel %vm231, %v588, %v2232
        %v2777 = vsel %vm231, %v612, %v2236
        %v2778 = vsel %vm231, %v626, %v2240
        %v2779 = vsel %vm231, %v634, %v2244
        %v2780 = vsel %vm231, %v636, %v2248
        %v2781 = vsel %vm231, %v619, %v2252
        %v2782 = vsel %vm231, %v633, %v2256
        %v2783 = vsel %vm231, %v635, %v2260
        %v2784 = vsel %vm231, %v637, %v2264
        %v2785 = vsel %vm231, %v661, %v2268
        %v2786 = vsel %vm231, %v675, %v2272
        %v2787 = vsel %vm231, %v683, %v2276
        %v2788 = vsel %vm231, %v685, %v2280
        %v2789 = vsel %vm231, %v668, %v2284
        %v2790 = vsel %vm231, %v682, %v2288
        %v2791 = vsel %vm231, %v684, %v2292
        %v2792 = vsel %vm231, %v686, %v2296
        %v2793 = vsel %vm231, %v710, %v2300
        %v2794 = vsel %vm231, %v724, %v2304
        %v2795 = vsel %vm231, %v732, %v2308
        %v2796 = vsel %vm231, %v734, %v2312
        %v2797 = vsel %vm231, %v717, %v2316
        %v2798 = vsel %vm231, %v731, %v2320
        %v2799 = vsel %vm231, %v733, %v2324
        %v2800 = vsel %vm231, %v735, %v2328
        %v2801 = vsel %vm231, %v759, %v2332
        %v2802 = vsel %vm231, %v773, %v2336
        %v2803 = vsel %vm231, %v781, %v2340
        %v2804 = vsel %vm231, %v783, %v2344
        %v2805 = vsel %vm231, %v766, %v2348
        %v2806 = vsel %vm231, %v780, %v2352
        %v2807 = vsel %vm231, %v782, %v2356
        %v2808 = vsel %vm231, %v784, %v2360
        %v2809 = vsel %vm231, %v808, %v2364
        %v2810 = vsel %vm231, %v822, %v2368
        %v2811 = vsel %vm231, %v830, %v2372
        %v2812 = vsel %vm231, %v832, %v2376
        %v2813 = vsel %vm231, %v815, %v2380
        %v2814 = vsel %vm231, %v829, %v2384
        %v2815 = vsel %vm231, %v831, %v2388
        %v2816 = vsel %vm231, %v833, %v2392
        %v2817 = vsel %vm231, %v857, %v2396
        %v2818 = vsel %vm231, %v871, %v2400
        %v2819 = vsel %vm231, %v879, %v2404
        %v2820 = vsel %vm231, %v881, %v2408
        %v2821 = vsel %vm231, %v864, %v2412
        %v2822 = vsel %vm231, %v878, %v2416
        %v2823 = vsel %vm231, %v880, %v2420
        %v2824 = vsel %vm231, %v882, %v2424
        %v2825 = vsel %vm231, %v906, %v2428
        %v2826 = vsel %vm231, %v920, %v2432
        %v2827 = vsel %vm231, %v928, %v2436
        %v2828 = vsel %vm231, %v930, %v2440
        %v2829 = vsel %vm231, %v913, %v2444
        %v2830 = vsel %vm231, %v927, %v2448
        %v2831 = vsel %vm231, %v929, %v2452
        %v2832 = vsel %vm231, %v931, %v2456
        %v2833 = vsel %vm231, %v955, %v2460
        %v2834 = vsel %vm231, %v969, %v2464
        %v2835 = vsel %vm231, %v977, %v2468
        %v2836 = vsel %vm231, %v979, %v2472
        %v2837 = vsel %vm231, %v962, %v2476
        %v2838 = vsel %vm231, %v976, %v2480
        %v2839 = vsel %vm231, %v978, %v2484
        %v2840 = vsel %vm231, %v980, %v2488
        %v2841 = vsel %vm231, %v1004, %v2492
        %v2842 = vsel %vm231, %v1018, %v2496
        %v2843 = vsel %vm231, %v1026, %v2500
        %v2844 = vsel %vm231, %v1028, %v2504
        %v2845 = vsel %vm231, %v1011, %v2508
        %v2846 = vsel %vm231, %v1025, %v2512
        %v2847 = vsel %vm231, %v1027, %v2516
        %v2848 = vsel %vm231, %v1029, %v2520
        %v2849 = vsel %vm231, %v1053, %v2524
        %v2850 = vsel %vm231, %v1067, %v2528
        %v2851 = vsel %vm231, %v1075, %v2532
        %v2852 = vsel %vm231, %v1077, %v2536
        %v2853 = vsel %vm231, %v1060, %v2540
        %v2854 = vsel %vm231, %v1074, %v2544
        %v2855 = vsel %vm231, %v1076, %v2548
        %v2856 = vsel %vm231, %v1078, %v2552
        %v2857 = vsel %vm231, %v1102, %v2556
        %v2858 = vsel %vm231, %v1116, %v2560
        %v2859 = vsel %vm231, %v1124, %v2564
        %v2860 = vsel %vm231, %v1126, %v2568
        %v2861 = vsel %vm231, %v1109, %v2572
        %v2862 = vsel %vm231, %v1123, %v2576
        %v2863 = vsel %vm231, %v1125, %v2580
        %v2864 = vsel %vm231, %v1127, %v2584
        %v2865 = vsel %vm231, %v1151, %v2588
        %v2866 = vsel %vm231, %v1165, %v2592
        %v2867 = vsel %vm231, %v1173, %v2596
        %v2868 = vsel %vm231, %v1175, %v2600
        %v2869 = vsel %vm231, %v1158, %v2604
        %v2870 = vsel %vm231, %v1172, %v2608
        %v2871 = vsel %vm231, %v1174, %v2612
        %v2872 = vsel %vm231, %v1176, %v2616
        %v3001 = vcombine.low %v2745, %v2746
        %v3002 = vcombine.low %v2747, %v2748
        %v3004 = vunpack.c.l.s4 1983009808
        %v3005 = vunpack.c.0.s8 %v3004
        %v3006 = vlaneseq
        %v3007 = vshrl.u32 %v3006, 7
        %v3008 = vsub.s32 %v3005, %v3007
        %v3009 = vrot.slane %v3001, %v3008
        %v3011 = vunpack.c.l.s4 1983009808
        %v3012 = vunpack.c.0.s8 %v3011
        %v3013 = vlaneseq
        %v3014 = vshrl.u32 %v3013, 7
        %v3015 = vsub.s32 %v3012, %v3014
        %v3016 = vrot.slane %v3002, %v3015
        %v3017 = vcombine.low %v3009, %v3016
        %v3018 = vcombine.low %v2749, %v2750
        %v3019 = vcombine.low %v2751, %v2752
        %v3021 = vunpack.c.l.s4 1983009808
        %v3022 = vunpack.c.0.s8 %v3021
        %v3023 = vlaneseq
        %v3024 = vshrl.u32 %v3023, 7
        %v3025 = vsub.s32 %v3022, %v3024
        %v3026 = vrot.slane %v3018, %v3025
        %v3028 = vunpack.c.l.s4 1983009808
        %v3029 = vunpack.c.0.s8 %v3028
        %v3030 = vlaneseq
        %v3031 = vshrl.u32 %v3030, 7
        %v3032 = vsub.s32 %v3029, %v3031
        %v3033 = vrot.slane %v3019, %v3032
        %v3034 = vcombine.low %v3026, %v3033
        %v3035 = vcombine.low %v2753, %v2754
        %v3036 = vcombine.low %v2755, %v2756
        %v3038 = vunpack.c.l.s4 1983009808
        %v3039 = vunpack.c.0.s8 %v3038
        %v3040 = vlaneseq
        %v3041 = vshrl.u32 %v3040, 7
        %v3042 = vsub.s32 %v3039, %v3041
        %v3043 = vrot.slane %v3035, %v3042
        %v3045 = vunpack.c.l.s4 1983009808
        %v3046 = vunpack.c.0.s8 %v3045
        %v3047 = vlaneseq
        %v3048 = vshrl.u32 %v3047, 7
        %v3049 = vsub.s32 %v3046, %v3048
        %v3050 = vrot.slane %v3036, %v3049
        %v3051 = vcombine.low %v3043, %v3050
        %v3052 = vcombine.low %v2757, %v2758
        %v3053 = vcombine.low %v2759, %v2760
        %v3055 = vunpack.c.l.s4 1983009808
        %v3056 = vunpack.c.0.s8 %v3055
        %v3057 = vlaneseq
        %v3058 = vshrl.u32 %v3057, 7
        %v3059 = vsub.s32 %v3056, %v3058
        %v3060 = vrot.slane %v3052, %v3059
        %v3062 = vunpack.c.l.s4 1983009808
        %v3063 = vunpack.c.0.s8 %v3062
        %v3064 = vlaneseq
        %v3065 = vshrl.u32 %v3064, 7
        %v3066 = vsub.s32 %v3063, %v3065
        %v3067 = vrot.slane %v3053, %v3066
        %v3068 = vcombine.low %v3060, %v3067
        %v3069 = vcombine.low %v2761, %v2762
        %v3070 = vcombine.low %v2763, %v2764
        %v3072 = vunpack.c.l.s4 1983009808
        %v3073 = vunpack.c.0.s8 %v3072
        %v3074 = vlaneseq
        %v3075 = vshrl.u32 %v3074, 7
        %v3076 = vsub.s32 %v3073, %v3075
        %v3077 = vrot.slane %v3069, %v3076
        %v3079 = vunpack.c.l.s4 1983009808
        %v3080 = vunpack.c.0.s8 %v3079
        %v3081 = vlaneseq
        %v3082 = vshrl.u32 %v3081, 7
        %v3083 = vsub.s32 %v3080, %v3082
        %v3084 = vrot.slane %v3070, %v3083
        %v3085 = vcombine.low %v3077, %v3084
        %v3086 = vcombine.low %v2765, %v2766
        %v3087 = vcombine.low %v2767, %v2768
        %v3089 = vunpack.c.l.s4 1983009808
        %v3090 = vunpack.c.0.s8 %v3089
        %v3091 = vlaneseq
        %v3092 = vshrl.u32 %v3091, 7
        %v3093 = vsub.s32 %v3090, %v3092
        %v3094 = vrot.slane %v3086, %v3093
        %v3096 = vunpack.c.l.s4 1983009808
        %v3097 = vunpack.c.0.s8 %v3096
        %v3098 = vlaneseq
        %v3099 = vshrl.u32 %v3098, 7
        %v3100 = vsub.s32 %v3097, %v3099
        %v3101 = vrot.slane %v3087, %v3100
        %v3102 = vcombine.low %v3094, %v3101
        %v3103 = vcombine.low %v2769, %v2770
        %v3104 = vcombine.low %v2771, %v2772
        %v3106 = vunpack.c.l.s4 1983009808
        %v3107 = vunpack.c.0.s8 %v3106
        %v3108 = vlaneseq
        %v3109 = vshrl.u32 %v3108, 7
        %v3110 = vsub.s32 %v3107, %v3109
        %v3111 = vrot.slane %v3103, %v3110
        %v3113 = vunpack.c.l.s4 1983009808
        %v3114 = vunpack.c.0.s8 %v3113
        %v3115 = vlaneseq
        %v3116 = vshrl.u32 %v3115, 7
        %v3117 = vsub.s32 %v3114, %v3116
        %v3118 = vrot.slane %v3104, %v3117
        %v3119 = vcombine.low %v3111, %v3118
        %v3120 = vcombine.low %v2773, %v2774
        %v3121 = vcombine.low %v2775, %v2776
        %v3123 = vunpack.c.l.s4 1983009808
        %v3124 = vunpack.c.0.s8 %v3123
        %v3125 = vlaneseq
        %v3126 = vshrl.u32 %v3125, 7
        %v3127 = vsub.s32 %v3124, %v3126
        %v3128 = vrot.slane %v3120, %v3127
        %v3130 = vunpack.c.l.s4 1983009808
        %v3131 = vunpack.c.0.s8 %v3130
        %v3132 = vlaneseq
        %v3133 = vshrl.u32 %v3132, 7
        %v3134 = vsub.s32 %v3131, %v3133
        %v3135 = vrot.slane %v3121, %v3134
        %v3136 = vcombine.low %v3128, %v3135
        %v3137 = vcombine.low %v2777, %v2778
        %v3138 = vcombine.low %v2779, %v2780
        %v3140 = vunpack.c.l.s4 1983009808
        %v3141 = vunpack.c.0.s8 %v3140
        %v3142 = vlaneseq
        %v3143 = vshrl.u32 %v3142, 7
        %v3144 = vsub.s32 %v3141, %v3143
        %v3145 = vrot.slane %v3137, %v3144
        %v3147 = vunpack.c.l.s4 1983009808
        %v3148 = vunpack.c.0.s8 %v3147
        %v3149 = vlaneseq
        %v3150 = vshrl.u32 %v3149, 7
        %v3151 = vsub.s32 %v3148, %v3150
        %v3152 = vrot.slane %v3138, %v3151
        %v3153 = vcombine.low %v3145, %v3152
        %v3154 = vcombine.low %v2781, %v2782
        %v3155 = vcombine.low %v2783, %v2784
        %v3157 = vunpack.c.l.s4 1983009808
        %v3158 = vunpack.c.0.s8 %v3157
        %v3159 = vlaneseq
        %v3160 = vshrl.u32 %v3159, 7
        %v3161 = vsub.s32 %v3158, %v3160
        %v3162 = vrot.slane %v3154, %v3161
        %v3164 = vunpack.c.l.s4 1983009808
        %v3165 = vunpack.c.0.s8 %v3164
        %v3166 = vlaneseq
        %v3167 = vshrl.u32 %v3166, 7
        %v3168 = vsub.s32 %v3165, %v3167
        %v3169 = vrot.slane %v3155, %v3168
        %v3170 = vcombine.low %v3162, %v3169
        %v3171 = vcombine.low %v2785, %v2786
        %v3172 = vcombine.low %v2787, %v2788
        %v3174 = vunpack.c.l.s4 1983009808
        %v3175 = vunpack.c.0.s8 %v3174
        %v3176 = vlaneseq
        %v3177 = vshrl.u32 %v3176, 7
        %v3178 = vsub.s32 %v3175, %v3177
        %v3179 = vrot.slane %v3171, %v3178
        %v3181 = vunpack.c.l.s4 1983009808
        %v3182 = vunpack.c.0.s8 %v3181
        %v3183 = vlaneseq
        %v3184 = vshrl.u32 %v3183, 7
        %v3185 = vsub.s32 %v3182, %v3184
        %v3186 = vrot.slane %v3172, %v3185
        %v3187 = vcombine.low %v3179, %v3186
        %v3188 = vcombine.low %v2789, %v2790
        %v3189 = vcombine.low %v2791, %v2792
        %v3191 = vunpack.c.l.s4 1983009808
        %v3192 = vunpack.c.0.s8 %v3191
        %v3193 = vlaneseq
        %v3194 = vshrl.u32 %v3193, 7
        %v3195 = vsub.s32 %v3192, %v3194
        %v3196 = vrot.slane %v3188, %v3195
        %v3198 = vunpack.c.l.s4 1983009808
        %v3199 = vunpack.c.0.s8 %v3198
        %v3200 = vlaneseq
        %v3201 = vshrl.u32 %v3200, 7
        %v3202 = vsub.s32 %v3199, %v3201
        %v3203 = vrot.slane %v3189, %v3202
        %v3204 = vcombine.low %v3196, %v3203
        %v3205 = vcombine.low %v2793, %v2794
        %v3206 = vcombine.low %v2795, %v2796
        %v3208 = vunpack.c.l.s4 1983009808
        %v3209 = vunpack.c.0.s8 %v3208
        %v3210 = vlaneseq
        %v3211 = vshrl.u32 %v3210, 7
        %v3212 = vsub.s32 %v3209, %v3211
        %v3213 = vrot.slane %v3205, %v3212
        %v3215 = vunpack.c.l.s4 1983009808
        %v3216 = vunpack.c.0.s8 %v3215
        %v3217 = vlaneseq
        %v3218 = vshrl.u32 %v3217, 7
        %v3219 = vsub.s32 %v3216, %v3218
        %v3220 = vrot.slane %v3206, %v3219
        %v3221 = vcombine.low %v3213, %v3220
        %v3222 = vcombine.low %v2797, %v2798
        %v3223 = vcombine.low %v2799, %v2800
        %v3225 = vunpack.c.l.s4 1983009808
        %v3226 = vunpack.c.0.s8 %v3225
        %v3227 = vlaneseq
        %v3228 = vshrl.u32 %v3227, 7
        %v3229 = vsub.s32 %v3226, %v3228
        %v3230 = vrot.slane %v3222, %v3229
        %v3232 = vunpack.c.l.s4 1983009808
        %v3233 = vunpack.c.0.s8 %v3232
        %v3234 = vlaneseq
        %v3235 = vshrl.u32 %v3234, 7
        %v3236 = vsub.s32 %v3233, %v3235
        %v3237 = vrot.slane %v3223, %v3236
        %v3238 = vcombine.low %v3230, %v3237
        %v3239 = vcombine.low %v2801, %v2802
        %v3240 = vcombine.low %v2803, %v2804
        %v3242 = vunpack.c.l.s4 1983009808
        %v3243 = vunpack.c.0.s8 %v3242
        %v3244 = vlaneseq
        %v3245 = vshrl.u32 %v3244, 7
        %v3246 = vsub.s32 %v3243, %v3245
        %v3247 = vrot.slane %v3239, %v3246
        %v3249 = vunpack.c.l.s4 1983009808
        %v3250 = vunpack.c.0.s8 %v3249
        %v3251 = vlaneseq
        %v3252 = vshrl.u32 %v3251, 7
        %v3253 = vsub.s32 %v3250, %v3252
        %v3254 = vrot.slane %v3240, %v3253
        %v3255 = vcombine.low %v3247, %v3254
        %v3256 = vcombine.low %v2805, %v2806
        %v3257 = vcombine.low %v2807, %v2808
        %v3259 = vunpack.c.l.s4 1983009808
        %v3260 = vunpack.c.0.s8 %v3259
        %v3261 = vlaneseq
        %v3262 = vshrl.u32 %v3261, 7
        %v3263 = vsub.s32 %v3260, %v3262
        %v3264 = vrot.slane %v3256, %v3263
        %v3266 = vunpack.c.l.s4 1983009808
        %v3267 = vunpack.c.0.s8 %v3266
        %v3268 = vlaneseq
        %v3269 = vshrl.u32 %v3268, 7
        %v3270 = vsub.s32 %v3267, %v3269
        %v3271 = vrot.slane %v3257, %v3270
        %v3272 = vcombine.low %v3264, %v3271
        %v3273 = vcombine.low %v2809, %v2810
        %v3274 = vcombine.low %v2811, %v2812
        %v3276 = vunpack.c.l.s4 1983009808
        %v3277 = vunpack.c.0.s8 %v3276
        %v3278 = vlaneseq
        %v3279 = vshrl.u32 %v3278, 7
        %v3280 = vsub.s32 %v3277, %v3279
        %v3281 = vrot.slane %v3273, %v3280
        %v3283 = vunpack.c.l.s4 1983009808
        %v3284 = vunpack.c.0.s8 %v3283
        %v3285 = vlaneseq
        %v3286 = vshrl.u32 %v3285, 7
        %v3287 = vsub.s32 %v3284, %v3286
        %v3288 = vrot.slane %v3274, %v3287
        %v3289 = vcombine.low %v3281, %v3288
        %v3290 = vcombine.low %v2813, %v2814
        %v3291 = vcombine.low %v2815, %v2816
        %v3293 = vunpack.c.l.s4 1983009808
        %v3294 = vunpack.c.0.s8 %v3293
        %v3295 = vlaneseq
        %v3296 = vshrl.u32 %v3295, 7
        %v3297 = vsub.s32 %v3294, %v3296
        %v3298 = vrot.slane %v3290, %v3297
        %v3300 = vunpack.c.l.s4 1983009808
        %v3301 = vunpack.c.0.s8 %v3300
        %v3302 = vlaneseq
        %v3303 = vshrl.u32 %v3302, 7
        %v3304 = vsub.s32 %v3301, %v3303
        %v3305 = vrot.slane %v3291, %v3304
        %v3306 = vcombine.low %v3298, %v3305
        %v3307 = vcombine.low %v2817, %v2818
        %v3308 = vcombine.low %v2819, %v2820
        %v3310 = vunpack.c.l.s4 1983009808
        %v3311 = vunpack.c.0.s8 %v3310
        %v3312 = vlaneseq
        %v3313 = vshrl.u32 %v3312, 7
        %v3314 = vsub.s32 %v3311, %v3313
        %v3315 = vrot.slane %v3307, %v3314
        %v3317 = vunpack.c.l.s4 1983009808
        %v3318 = vunpack.c.0.s8 %v3317
        %v3319 = vlaneseq
        %v3320 = vshrl.u32 %v3319, 7
        %v3321 = vsub.s32 %v3318, %v3320
        %v3322 = vrot.slane %v3308, %v3321
        %v3323 = vcombine.low %v3315, %v3322
        %v3324 = vcombine.low %v2821, %v2822
        %v3325 = vcombine.low %v2823, %v2824
        %v3327 = vunpack.c.l.s4 1983009808
        %v3328 = vunpack.c.0.s8 %v3327
        %v3329 = vlaneseq
        %v3330 = vshrl.u32 %v3329, 7
        %v3331 = vsub.s32 %v3328, %v3330
        %v3332 = vrot.slane %v3324, %v3331
        %v3334 = vunpack.c.l.s4 1983009808
        %v3335 = vunpack.c.0.s8 %v3334
        %v3336 = vlaneseq
        %v3337 = vshrl.u32 %v3336, 7
        %v3338 = vsub.s32 %v3335, %v3337
        %v3339 = vrot.slane %v3325, %v3338
        %v3340 = vcombine.low %v3332, %v3339
        %v3341 = vcombine.low %v2825, %v2826
        %v3342 = vcombine.low %v2827, %v2828
        %v3344 = vunpack.c.l.s4 1983009808
        %v3345 = vunpack.c.0.s8 %v3344
        %v3346 = vlaneseq
        %v3347 = vshrl.u32 %v3346, 7
        %v3348 = vsub.s32 %v3345, %v3347
        %v3349 = vrot.slane %v3341, %v3348
        %v3351 = vunpack.c.l.s4 1983009808
        %v3352 = vunpack.c.0.s8 %v3351
        %v3353 = vlaneseq
        %v3354 = vshrl.u32 %v3353, 7
        %v3355 = vsub.s32 %v3352, %v3354
        %v3356 = vrot.slane %v3342, %v3355
        %v3357 = vcombine.low %v3349, %v3356
        %v3358 = vcombine.low %v2829, %v2830
        %v3359 = vcombine.low %v2831, %v2832
        %v3361 = vunpack.c.l.s4 1983009808
        %v3362 = vunpack.c.0.s8 %v3361
        %v3363 = vlaneseq
        %v3364 = vshrl.u32 %v3363, 7
        %v3365 = vsub.s32 %v3362, %v3364
        %v3366 = vrot.slane %v3358, %v3365
        %v3368 = vunpack.c.l.s4 1983009808
        %v3369 = vunpack.c.0.s8 %v3368
        %v3370 = vlaneseq
        %v3371 = vshrl.u32 %v3370, 7
        %v3372 = vsub.s32 %v3369, %v3371
        %v3373 = vrot.slane %v3359, %v3372
        %v3374 = vcombine.low %v3366, %v3373
        %v3375 = vcombine.low %v2833, %v2834
        %v3376 = vcombine.low %v2835, %v2836
        %v3378 = vunpack.c.l.s4 1983009808
        %v3379 = vunpack.c.0.s8 %v3378
        %v3380 = vlaneseq
        %v3381 = vshrl.u32 %v3380, 7
        %v3382 = vsub.s32 %v3379, %v3381
        %v3383 = vrot.slane %v3375, %v3382
        %v3385 = vunpack.c.l.s4 1983009808
        %v3386 = vunpack.c.0.s8 %v3385
        %v3387 = vlaneseq
        %v3388 = vshrl.u32 %v3387, 7
        %v3389 = vsub.s32 %v3386, %v3388
        %v3390 = vrot.slane %v3376, %v3389
        %v3391 = vcombine.low %v3383, %v3390
        %v3392 = vcombine.low %v2837, %v2838
        %v3393 = vcombine.low %v2839, %v2840
        %v3395 = vunpack.c.l.s4 1983009808
        %v3396 = vunpack.c.0.s8 %v3395
        %v3397 = vlaneseq
        %v3398 = vshrl.u32 %v3397, 7
        %v3399 = vsub.s32 %v3396, %v3398
        %v3400 = vrot.slane %v3392, %v3399
        %v3402 = vunpack.c.l.s4 1983009808
        %v3403 = vunpack.c.0.s8 %v3402
        %v3404 = vlaneseq
        %v3405 = vshrl.u32 %v3404, 7
        %v3406 = vsub.s32 %v3403, %v3405
        %v3407 = vrot.slane %v3393, %v3406
        %v3408 = vcombine.low %v3400, %v3407
        %v3409 = vcombine.low %v2841, %v2842
        %v3410 = vcombine.low %v2843, %v2844
        %v3412 = vunpack.c.l.s4 1983009808
        %v3413 = vunpack.c.0.s8 %v3412
        %v3414 = vlaneseq
        %v3415 = vshrl.u32 %v3414, 7
        %v3416 = vsub.s32 %v3413, %v3415
        %v3417 = vrot.slane %v3409, %v3416
        %v3419 = vunpack.c.l.s4 1983009808
        %v3420 = vunpack.c.0.s8 %v3419
        %v3421 = vlaneseq
        %v3422 = vshrl.u32 %v3421, 7
        %v3423 = vsub.s32 %v3420, %v3422
        %v3424 = vrot.slane %v3410, %v3423
        %v3425 = vcombine.low %v3417, %v3424
        %v3426 = vcombine.low %v2845, %v2846
        %v3427 = vcombine.low %v2847, %v2848
        %v3429 = vunpack.c.l.s4 1983009808
        %v3430 = vunpack.c.0.s8 %v3429
        %v3431 = vlaneseq
        %v3432 = vshrl.u32 %v3431, 7
        %v3433 = vsub.s32 %v3430, %v3432
        %v3434 = vrot.slane %v3426, %v3433
        %v3436 = vunpack.c.l.s4 1983009808
        %v3437 = vunpack.c.0.s8 %v3436
        %v3438 = vlaneseq
        %v3439 = vshrl.u32 %v3438, 7
        %v3440 = vsub.s32 %v3437, %v3439
        %v3441 = vrot.slane %v3427, %v3440
        %v3442 = vcombine.low %v3434, %v3441
        %v3443 = vcombine.low %v2849, %v2850
        %v3444 = vcombine.low %v2851, %v2852
        %v3446 = vunpack.c.l.s4 1983009808
        %v3447 = vunpack.c.0.s8 %v3446
        %v3448 = vlaneseq
        %v3449 = vshrl.u32 %v3448, 7
        %v3450 = vsub.s32 %v3447, %v3449
        %v3451 = vrot.slane %v3443, %v3450
        %v3453 = vunpack.c.l.s4 1983009808
        %v3454 = vunpack.c.0.s8 %v3453
        %v3455 = vlaneseq
        %v3456 = vshrl.u32 %v3455, 7
        %v3457 = vsub.s32 %v3454, %v3456
        %v3458 = vrot.slane %v3444, %v3457
        %v3459 = vcombine.low %v3451, %v3458
        %v3460 = vcombine.low %v2853, %v2854
        %v3461 = vcombine.low %v2855, %v2856
        %v3463 = vunpack.c.l.s4 1983009808
        %v3464 = vunpack.c.0.s8 %v3463
        %v3465 = vlaneseq
        %v3466 = vshrl.u32 %v3465, 7
        %v3467 = vsub.s32 %v3464, %v3466
        %v3468 = vrot.slane %v3460, %v3467
        %v3470 = vunpack.c.l.s4 1983009808
        %v3471 = vunpack.c.0.s8 %v3470
        %v3472 = vlaneseq
        %v3473 = vshrl.u32 %v3472, 7
        %v3474 = vsub.s32 %v3471, %v3473
        %v3475 = vrot.slane %v3461, %v3474
        %v3476 = vcombine.low %v3468, %v3475
        %v3477 = vcombine.low %v2857, %v2858
        %v3478 = vcombine.low %v2859, %v2860
        %v3480 = vunpack.c.l.s4 1983009808
        %v3481 = vunpack.c.0.s8 %v3480
        %v3482 = vlaneseq
        %v3483 = vshrl.u32 %v3482, 7
        %v3484 = vsub.s32 %v3481, %v3483
        %v3485 = vrot.slane %v3477, %v3484
        %v3487 = vunpack.c.l.s4 1983009808
        %v3488 = vunpack.c.0.s8 %v3487
        %v3489 = vlaneseq
        %v3490 = vshrl.u32 %v3489, 7
        %v3491 = vsub.s32 %v3488, %v3490
        %v3492 = vrot.slane %v3478, %v3491
        %v3493 = vcombine.low %v3485, %v3492
        %v3494 = vcombine.low %v2861, %v2862
        %v3495 = vcombine.low %v2863, %v2864
        %v3497 = vunpack.c.l.s4 1983009808
        %v3498 = vunpack.c.0.s8 %v3497
        %v3499 = vlaneseq
        %v3500 = vshrl.u32 %v3499, 7
        %v3501 = vsub.s32 %v3498, %v3500
        %v3502 = vrot.slane %v3494, %v3501
        %v3504 = vunpack.c.l.s4 1983009808
        %v3505 = vunpack.c.0.s8 %v3504
        %v3506 = vlaneseq
        %v3507 = vshrl.u32 %v3506, 7
        %v3508 = vsub.s32 %v3505, %v3507
        %v3509 = vrot.slane %v3495, %v3508
        %v3510 = vcombine.low %v3502, %v3509
        %v3511 = vcombine.low %v2865, %v2866
        %v3512 = vcombine.low %v2867, %v2868
        %v3514 = vunpack.c.l.s4 1983009808
        %v3515 = vunpack.c.0.s8 %v3514
        %v3516 = vlaneseq
        %v3517 = vshrl.u32 %v3516, 7
        %v3518 = vsub.s32 %v3515, %v3517
        %v3519 = vrot.slane %v3511, %v3518
        %v3521 = vunpack.c.l.s4 1983009808
        %v3522 = vunpack.c.0.s8 %v3521
        %v3523 = vlaneseq
        %v3524 = vshrl.u32 %v3523, 7
        %v3525 = vsub.s32 %v3522, %v3524
        %v3526 = vrot.slane %v3512, %v3525
        %v3527 = vcombine.low %v3519, %v3526
        %v3528 = vcombine.low %v2869, %v2870
        %v3529 = vcombine.low %v2871, %v2872
        %v3531 = vunpack.c.l.s4 1983009808
        %v3532 = vunpack.c.0.s8 %v3531
        %v3533 = vlaneseq
        %v3534 = vshrl.u32 %v3533, 7
        %v3535 = vsub.s32 %v3532, %v3534
        %v3536 = vrot.slane %v3528, %v3535
        %v3538 = vunpack.c.l.s4 1983009808
        %v3539 = vunpack.c.0.s8 %v3538
        %v3540 = vlaneseq
        %v3541 = vshrl.u32 %v3540, 7
        %v3542 = vsub.s32 %v3539, %v3541
        %v3543 = vrot.slane %v3529, %v3542
        %v3544 = vcombine.low %v3536, %v3543
        %v3577 = vpack.c.bf16 %v3034, %v3017
        %v3578 = vpack.c.bf16 %v3068, %v3051
        %v3579 = vpack.c.bf16 %v3102, %v3085
        %v3580 = vpack.c.bf16 %v3136, %v3119
        %v3581 = vpack.c.bf16 %v3170, %v3153
        %v3582 = vpack.c.bf16 %v3204, %v3187
        %v3583 = vpack.c.bf16 %v3238, %v3221
        %v3584 = vpack.c.bf16 %v3272, %v3255
        %v3585 = vpack.c.bf16 %v3306, %v3289
        %v3586 = vpack.c.bf16 %v3340, %v3323
        %v3587 = vpack.c.bf16 %v3374, %v3357
        %v3588 = vpack.c.bf16 %v3408, %v3391
        %v3589 = vpack.c.bf16 %v3442, %v3425
        %v3590 = vpack.c.bf16 %v3476, %v3459
        %v3591 = vpack.c.bf16 %v3510, %v3493
        %v3592 = vpack.c.bf16 %v3544, %v3527
        %3593 = vst [vmem:[#allocation2] sm:$0xff] 0
        %3594 = vst [vmem:[#allocation2 + $0x8] sm:$0xff] 0
        %3595 = vst [vmem:[#allocation2 + $0x10] sm:$0xff] 0
        %s3596 = scalar_lea.vmem [#allocation2], 408
        %3597 = vst [vmem:[%s3596] sm:$0xff] 0
        %3598 = vst [vmem:[%s3596 + $0x8] sm:$0xff] 0
        %3599 = vst [vmem:[%s3596 + $0x10] sm:$0xff] 0
        %v3601 = vshrl.u32 %v3577, 16
        %v3603 = vrot.slane %v3601, 7
        %v3604 = vshll.u32 %v3577, 16
        %v3606 = vor.u32 %v3603, %v3604
        %v3608 = vshrl.u32 %v3578, 16
        %v3610 = vrot.slane %v3608, 7
        %v3611 = vshll.u32 %v3578, 16
        %v3613 = vor.u32 %v3610, %v3611
        %v3615 = vshrl.u32 %v3579, 16
        %v3617 = vrot.slane %v3615, 7
        %v3618 = vshll.u32 %v3579, 16
        %v3620 = vor.u32 %v3617, %v3618
        %v3622 = vshrl.u32 %v3580, 16
        %v3624 = vrot.slane %v3622, 7
        %v3625 = vshll.u32 %v3580, 16
        %v3627 = vor.u32 %v3624, %v3625
        %v3629 = vshrl.u32 %v3581, 16
        %v3631 = vrot.slane %v3629, 7
        %v3632 = vshll.u32 %v3581, 16
        %v3634 = vor.u32 %v3631, %v3632
        %v3636 = vshrl.u32 %v3582, 16
        %v3638 = vrot.slane %v3636, 7
        %v3639 = vshll.u32 %v3582, 16
        %v3641 = vor.u32 %v3638, %v3639
        %v3643 = vshrl.u32 %v3583, 16
        %v3645 = vrot.slane %v3643, 7
        %v3646 = vshll.u32 %v3583, 16
        %v3648 = vor.u32 %v3645, %v3646
        %v3650 = vshrl.u32 %v3584, 16
        %v3652 = vrot.slane %v3650, 7
        %v3653 = vshll.u32 %v3584, 16
        %v3655 = vor.u32 %v3652, %v3653
        %v3657 = vshrl.u32 %v3585, 16
        %v3659 = vrot.slane %v3657, 7
        %v3660 = vshll.u32 %v3585, 16
        %v3662 = vor.u32 %v3659, %v3660
        %v3664 = vshrl.u32 %v3586, 16
        %v3666 = vrot.slane %v3664, 7
        %v3667 = vshll.u32 %v3586, 16
        %v3669 = vor.u32 %v3666, %v3667
        %v3671 = vshrl.u32 %v3587, 16
        %v3673 = vrot.slane %v3671, 7
        %v3674 = vshll.u32 %v3587, 16
        %v3676 = vor.u32 %v3673, %v3674
        %v3678 = vshrl.u32 %v3588, 16
        %v3680 = vrot.slane %v3678, 7
        %v3681 = vshll.u32 %v3588, 16
        %v3683 = vor.u32 %v3680, %v3681
        %v3685 = vshrl.u32 %v3589, 16
        %v3687 = vrot.slane %v3685, 7
        %v3688 = vshll.u32 %v3589, 16
        %v3690 = vor.u32 %v3687, %v3688
        %v3692 = vshrl.u32 %v3590, 16
        %v3694 = vrot.slane %v3692, 7
        %v3695 = vshll.u32 %v3590, 16
        %v3697 = vor.u32 %v3694, %v3695
        %v3699 = vshrl.u32 %v3591, 16
        %v3701 = vrot.slane %v3699, 7
        %v3702 = vshll.u32 %v3591, 16
        %v3704 = vor.u32 %v3701, %v3702
        %v3706 = vshrl.u32 %v3592, 16
        %v3708 = vrot.slane %v3706, 7
        %v3709 = vshll.u32 %v3592, 16
        %v3711 = vor.u32 %v3708, %v3709
        %vm3728 = vcmask 1040384
        %vm3729 = vsmask.f32 256
        %vm3730 = vmand %vm3728, %vm3729
        %v3731 = vsel %vm3730, 0, %v3606
        %v3732 = vsel %vm3730, 0, %v3613
        %v3733 = vsel %vm3730, 0, %v3620
        %v3734 = vsel %vm3730, 0, %v3627
        %v3735 = vsel %vm3730, 0, %v3634
        %v3736 = vsel %vm3730, 0, %v3641
        %v3737 = vsel %vm3730, 0, %v3648
        %v3738 = vsel %vm3730, 0, %v3655
        %v3739 = vsel %vm3730, 0, %v3662
        %v3740 = vsel %vm3730, 0, %v3669
        %v3741 = vsel %vm3730, 0, %v3676
        %v3742 = vsel %vm3730, 0, %v3683
        %v3743 = vsel %vm3730, 0, %v3690
        %v3744 = vsel %vm3730, 0, %v3697
        %v3745 = vsel %vm3730, 0, %v3704
        %v3746 = vsel %vm3730, 0, %v3711
        %s3747 = scalar_lea.vmem [#allocation2], 24
        %3748 = vst [vmem:[%s3747] sm:$0xff] %v3731
        %3749 = vst [vmem:[%s3747 + $0x18] sm:$0xff] %v3732
        %3750 = vst [vmem:[%s3747 + $0x30] sm:$0xff] %v3733
        %3751 = vst [vmem:[%s3747 + $0x48] sm:$0xff] %v3734
        %3752 = vst [vmem:[%s3747 + $0x60] sm:$0xff] %v3735
        %3753 = vst [vmem:[%s3747 + $0x78] sm:$0xff] %v3736
        %3754 = vst [vmem:[%s3747 + $0x90] sm:$0xff] %v3737
        %3755 = vst [vmem:[%s3747 + $0xa8] sm:$0xff] %v3738
        %3756 = vst [vmem:[%s3747 + $0xc0] sm:$0xff] %v3739
        %3757 = vst [vmem:[%s3747 + $0xd8] sm:$0xff] %v3740
        %3758 = vst [vmem:[%s3747 + $0xf0] sm:$0xff] %v3741
        %3759 = vst [vmem:[%s3747 + $0x108] sm:$0xff] %v3742
        %3760 = vst [vmem:[%s3747 + $0x120] sm:$0xff] %v3743
        %3761 = vst [vmem:[%s3747 + $0x138] sm:$0xff] %v3744
        %3762 = vst [vmem:[%s3747 + $0x150] sm:$0xff] %v3745
        %3763 = vst [vmem:[%s3747 + $0x168] sm:$0xff] %v3746
        %3764 = vst [vmem:[%s3747 + $0x8] sm:$0xff] %v3577
        %3765 = vst [vmem:[%s3747 + $0x20] sm:$0xff] %v3578
        %3766 = vst [vmem:[%s3747 + $0x38] sm:$0xff] %v3579
        %3767 = vst [vmem:[%s3747 + $0x50] sm:$0xff] %v3580
        %3768 = vst [vmem:[%s3747 + $0x68] sm:$0xff] %v3581
        %3769 = vst [vmem:[%s3747 + $0x80] sm:$0xff] %v3582
        %3770 = vst [vmem:[%s3747 + $0x98] sm:$0xff] %v3583
        %3771 = vst [vmem:[%s3747 + $0xb0] sm:$0xff] %v3584
        %3772 = vst [vmem:[%s3747 + $0xc8] sm:$0xff] %v3585
        %3773 = vst [vmem:[%s3747 + $0xe0] sm:$0xff] %v3586
        %3774 = vst [vmem:[%s3747 + $0xf8] sm:$0xff] %v3587
        %3775 = vst [vmem:[%s3747 + $0x110] sm:$0xff] %v3588
        %3776 = vst [vmem:[%s3747 + $0x128] sm:$0xff] %v3589
        %3777 = vst [vmem:[%s3747 + $0x140] sm:$0xff] %v3590
        %3778 = vst [vmem:[%s3747 + $0x158] sm:$0xff] %v3591
        %3779 = vst [vmem:[%s3747 + $0x170] sm:$0xff] %v3592
        %v3780 = vrot.slane %v3604, 1
        %v3781 = vor.u32 %v3601, %v3780
        %v3782 = vrot.slane %v3611, 1
        %v3783 = vor.u32 %v3608, %v3782
        %v3784 = vrot.slane %v3618, 1
        %v3785 = vor.u32 %v3615, %v3784
        %v3786 = vrot.slane %v3625, 1
        %v3787 = vor.u32 %v3622, %v3786
        %v3788 = vrot.slane %v3632, 1
        %v3789 = vor.u32 %v3629, %v3788
        %v3790 = vrot.slane %v3639, 1
        %v3791 = vor.u32 %v3636, %v3790
        %v3792 = vrot.slane %v3646, 1
        %v3793 = vor.u32 %v3643, %v3792
        %v3794 = vrot.slane %v3653, 1
        %v3795 = vor.u32 %v3650, %v3794
        %v3796 = vrot.slane %v3660, 1
        %v3797 = vor.u32 %v3657, %v3796
        %v3798 = vrot.slane %v3667, 1
        %v3799 = vor.u32 %v3664, %v3798
        %v3800 = vrot.slane %v3674, 1
        %v3801 = vor.u32 %v3671, %v3800
        %v3802 = vrot.slane %v3681, 1
        %v3803 = vor.u32 %v3678, %v3802
        %v3804 = vrot.slane %v3688, 1
        %v3805 = vor.u32 %v3685, %v3804
        %v3806 = vrot.slane %v3695, 1
        %v3807 = vor.u32 %v3692, %v3806
        %v3808 = vrot.slane %v3702, 1
        %v3809 = vor.u32 %v3699, %v3808
        %v3810 = vrot.slane %v3709, 1
        %v3811 = vor.u32 %v3706, %v3810
        %vm3828 = vcmask 1047552
        %vm3829 = vsmask.f32 7424
        %vm3830 = vmand %vm3828, %vm3829
        %v3831 = vsel %vm3830, %v3781, 0
        %v3832 = vsel %vm3830, %v3783, 0
        %v3833 = vsel %vm3830, %v3785, 0
        %v3834 = vsel %vm3830, %v3787, 0
        %v3835 = vsel %vm3830, %v3789, 0
        %v3836 = vsel %vm3830, %v3791, 0
        %v3837 = vsel %vm3830, %v3793, 0
        %v3838 = vsel %vm3830, %v3795, 0
        %v3839 = vsel %vm3830, %v3797, 0
        %v3840 = vsel %vm3830, %v3799, 0
        %v3841 = vsel %vm3830, %v3801, 0
        %v3842 = vsel %vm3830, %v3803, 0
        %v3843 = vsel %vm3830, %v3805, 0
        %v3844 = vsel %vm3830, %v3807, 0
        %v3845 = vsel %vm3830, %v3809, 0
        %v3846 = vsel %vm3830, %v3811, 0
        %3847 = vst [vmem:[%s3747 + $0x10] sm:$0xff] %v3831
        %3848 = vst [vmem:[%s3747 + $0x28] sm:$0xff] %v3832
        %3849 = vst [vmem:[%s3747 + $0x40] sm:$0xff] %v3833
        %3850 = vst [vmem:[%s3747 + $0x58] sm:$0xff] %v3834
        %3851 = vst [vmem:[%s3747 + $0x70] sm:$0xff] %v3835
        %3852 = vst [vmem:[%s3747 + $0x88] sm:$0xff] %v3836
        %3853 = vst [vmem:[%s3747 + $0xa0] sm:$0xff] %v3837
        %3854 = vst [vmem:[%s3747 + $0xb8] sm:$0xff] %v3838
        %3855 = vst [vmem:[%s3747 + $0xd0] sm:$0xff] %v3839
        %3856 = vst [vmem:[%s3747 + $0xe8] sm:$0xff] %v3840
        %3857 = vst [vmem:[%s3747 + $0x100] sm:$0xff] %v3841
        %3858 = vst [vmem:[%s3747 + $0x118] sm:$0xff] %v3842
        %3859 = vst [vmem:[%s3747 + $0x130] sm:$0xff] %v3843
        %3860 = vst [vmem:[%s3747 + $0x148] sm:$0xff] %v3844
        %3861 = vst [vmem:[%s3747 + $0x160] sm:$0xff] %v3845
        %3862 = vst [vmem:[%s3747 + $0x178] sm:$0xff] %v3846
        %v3863 = vld [vmem:[#allocation2] sm:$0xff]
        %v3864 = vld [vmem:[#allocation2 + $0x8] sm:$0xff]
        %v3865 = vld [vmem:[#allocation2 + $0x10] sm:$0xff]
        %v3866 = vld [vmem:[#allocation2 + $0x18] sm:$0xff]
        %v3867 = vld [vmem:[#allocation2 + $0x20] sm:$0xff]
        %v3868 = vld [vmem:[#allocation2 + $0x28] sm:$0xff]
        %v3869 = vld [vmem:[#allocation2 + $0x30] sm:$0xff]
        %v3870 = vld [vmem:[#allocation2 + $0x38] sm:$0xff]
        %v3871 = vld [vmem:[#allocation2 + $0x40] sm:$0xff]
        %v3872 = vld [vmem:[#allocation2 + $0x48] sm:$0xff]
        %v3873 = vld [vmem:[#allocation2 + $0x50] sm:$0xff]
        %v3874 = vld [vmem:[#allocation2 + $0x58] sm:$0xff]
        %v3875 = vld [vmem:[#allocation2 + $0x60] sm:$0xff]
        %v3876 = vld [vmem:[#allocation2 + $0x68] sm:$0xff]
        %v3877 = vld [vmem:[#allocation2 + $0x70] sm:$0xff]
        %v3878 = vld [vmem:[#allocation2 + $0x78] sm:$0xff]
        %v3879 = vld [vmem:[#allocation2 + $0x80] sm:$0xff]
        %v3880 = vld [vmem:[#allocation2 + $0x88] sm:$0xff]
        %v3881 = vld [vmem:[#allocation2 + $0x90] sm:$0xff]
        %v3882 = vld [vmem:[#allocation2 + $0x98] sm:$0xff]
        %v3883 = vld [vmem:[#allocation2 + $0xa0] sm:$0xff]
        %v3884 = vld [vmem:[#allocation2 + $0xa8] sm:$0xff]
        %v3885 = vld [vmem:[#allocation2 + $0xb0] sm:$0xff]
        %v3886 = vld [vmem:[#allocation2 + $0xb8] sm:$0xff]
        %v3887 = vld [vmem:[#allocation2 + $0xc0] sm:$0xff]
        %v3888 = vld [vmem:[#allocation2 + $0xc8] sm:$0xff]
        %v3889 = vld [vmem:[#allocation2 + $0xd0] sm:$0xff]
        %v3890 = vld [vmem:[#allocation2 + $0xd8] sm:$0xff]
        %v3891 = vld [vmem:[#allocation2 + $0xe0] sm:$0xff]
        %v3892 = vld [vmem:[#allocation2 + $0xe8] sm:$0xff]
        %v3893 = vld [vmem:[#allocation2 + $0xf0] sm:$0xff]
        %v3894 = vld [vmem:[#allocation2 + $0xf8] sm:$0xff]
        %v3895 = vld [vmem:[#allocation2 + $0x100] sm:$0xff]
        %v3896 = vld [vmem:[#allocation2 + $0x108] sm:$0xff]
        %v3897 = vld [vmem:[#allocation2 + $0x110] sm:$0xff]
        %v3898 = vld [vmem:[#allocation2 + $0x118] sm:$0xff]
        %v3899 = vld [vmem:[#allocation2 + $0x120] sm:$0xff]
        %v3900 = vld [vmem:[#allocation2 + $0x128] sm:$0xff]
        %v3901 = vld [vmem:[#allocation2 + $0x130] sm:$0xff]
        %v3902 = vld [vmem:[#allocation2 + $0x138] sm:$0xff]
        %v3903 = vld [vmem:[#allocation2 + $0x140] sm:$0xff]
        %v3904 = vld [vmem:[#allocation2 + $0x148] sm:$0xff]
        %v3905 = vld [vmem:[#allocation2 + $0x150] sm:$0xff]
        %v3906 = vld [vmem:[#allocation2 + $0x158] sm:$0xff]
        %v3907 = vld [vmem:[#allocation2 + $0x160] sm:$0xff]
        %v3908 = vld [vmem:[#allocation2 + $0x168] sm:$0xff]
        %v3909 = vld [vmem:[#allocation2 + $0x170] sm:$0xff]
        %v3910 = vld [vmem:[#allocation2 + $0x178] sm:$0xff]
        %v3911 = vld [vmem:[%s1] sm:$0xf]
        %v3912 = vld [vmem:[%s1 + $0x4] sm:$0xf]
        %v3913 = vld [vmem:[%s1 + $0x8] sm:$0xf]
        %v3914 = vld [vmem:[%s1 + $0xc] sm:$0xf]
        %v3915 = vld [vmem:[%s1 + $0x10] sm:$0xf]
        %v3916 = vld [vmem:[%s1 + $0x14] sm:$0xf]
        %v3917 = vld [vmem:[%s1 + $0x18] sm:$0xf]
        %v3918 = vld [vmem:[%s1 + $0x1c] sm:$0xf]
        %v3919 = vld [vmem:[%s1 + $0x20] sm:$0xf]
        %v3920 = vld [vmem:[%s1 + $0x24] sm:$0xf]
        %v3921 = vld [vmem:[%s1 + $0x28] sm:$0xf]
        %v3922 = vld [vmem:[%s1 + $0x2c] sm:$0xf]
        %v3923 = vld [vmem:[%s1 + $0x30] sm:$0xf]
        %v3924 = vld [vmem:[%s1 + $0x34] sm:$0xf]
        %v3925 = vld [vmem:[%s1 + $0x38] sm:$0xf]
        %v3926 = vld [vmem:[%s1 + $0x3c] sm:$0xf]
        %v3927 = vld [vmem:[%s1 + $0x40] sm:$0xf]
        %v3928 = vld [vmem:[%s1 + $0x44] sm:$0xf]
        %v3929 = vld [vmem:[%s1 + $0x48] sm:$0xf]
        %v3930 = vld [vmem:[%s1 + $0x4c] sm:$0xf]
        %v3931 = vld [vmem:[%s1 + $0x50] sm:$0xf]
        %v3932 = vld [vmem:[%s1 + $0x54] sm:$0xf]
        %v3933 = vld [vmem:[%s1 + $0x58] sm:$0xf]
        %v3934 = vld [vmem:[%s1 + $0x5c] sm:$0xf]
        %v3935 = vld [vmem:[%s1 + $0x60] sm:$0xf]
        %v3936 = vld [vmem:[%s1 + $0x64] sm:$0xf]
        %v3937 = vld [vmem:[%s1 + $0x68] sm:$0xf]
        %v3938 = vld [vmem:[%s1 + $0x6c] sm:$0xf]
        %v3939 = vld [vmem:[%s1 + $0x70] sm:$0xf]
        %v3940 = vld [vmem:[%s1 + $0x74] sm:$0xf]
        %v3941 = vld [vmem:[%s1 + $0x78] sm:$0xf]
        %v3942 = vld [vmem:[%s1 + $0x7c] sm:$0xf]
        %v3943 = vld [vmem:[%s1 + $0x80] sm:$0xf]
        %v3944 = vld [vmem:[%s1 + $0x84] sm:$0xf]
        %v3945 = vld [vmem:[%s1 + $0x88] sm:$0xf]
        %v3946 = vld [vmem:[%s1 + $0x8c] sm:$0xf]
        %v3947 = vld [vmem:[%s1 + $0x90] sm:$0xf]
        %v3948 = vld [vmem:[%s1 + $0x94] sm:$0xf]
        %v3949 = vld [vmem:[%s1 + $0x98] sm:$0xf]
        %v3950 = vld [vmem:[%s1 + $0x9c] sm:$0xf]
        %v3951 = vld [vmem:[%s1 + $0xa0] sm:$0xf]
        %v3952 = vld [vmem:[%s1 + $0xa4] sm:$0xf]
        %v3953 = vld [vmem:[%s1 + $0xa8] sm:$0xf]
        %v3954 = vld [vmem:[%s1 + $0xac] sm:$0xf]
        %v3955 = vld [vmem:[%s1 + $0xb0] sm:$0xf]
        %v3956 = vld [vmem:[%s1 + $0xb4] sm:$0xf]
        %v3957 = vld [vmem:[%s1 + $0xb8] sm:$0xf]
        %v3958 = vld [vmem:[%s1 + $0xbc] sm:$0xf]
        %v3959 = vld [vmem:[%s3747] sm:$0xff]
        %v3960 = vld [vmem:[%s3747 + $0x8] sm:$0xff]
        %v3961 = vld [vmem:[%s3747 + $0x10] sm:$0xff]
        %v3962 = vld [vmem:[%s3747 + $0x18] sm:$0xff]
        %v3963 = vld [vmem:[%s3747 + $0x20] sm:$0xff]
        %v3964 = vld [vmem:[%s3747 + $0x28] sm:$0xff]
        %v3965 = vld [vmem:[%s3747 + $0x30] sm:$0xff]
        %v3966 = vld [vmem:[%s3747 + $0x38] sm:$0xff]
        %v3967 = vld [vmem:[%s3747 + $0x40] sm:$0xff]
        %v3968 = vld [vmem:[%s3747 + $0x48] sm:$0xff]
        %v3969 = vld [vmem:[%s3747 + $0x50] sm:$0xff]
        %v3970 = vld [vmem:[%s3747 + $0x58] sm:$0xff]
        %v3971 = vld [vmem:[%s3747 + $0x60] sm:$0xff]
        %v3972 = vld [vmem:[%s3747 + $0x68] sm:$0xff]
        %v3973 = vld [vmem:[%s3747 + $0x70] sm:$0xff]
        %v3974 = vld [vmem:[%s3747 + $0x78] sm:$0xff]
        %v3975 = vld [vmem:[%s3747 + $0x80] sm:$0xff]
        %v3976 = vld [vmem:[%s3747 + $0x88] sm:$0xff]
        %v3977 = vld [vmem:[%s3747 + $0x90] sm:$0xff]
        %v3978 = vld [vmem:[%s3747 + $0x98] sm:$0xff]
        %v3979 = vld [vmem:[%s3747 + $0xa0] sm:$0xff]
        %v3980 = vld [vmem:[%s3747 + $0xa8] sm:$0xff]
        %v3981 = vld [vmem:[%s3747 + $0xb0] sm:$0xff]
        %v3982 = vld [vmem:[%s3747 + $0xb8] sm:$0xff]
        %v3983 = vld [vmem:[%s3747 + $0xc0] sm:$0xff]
        %v3984 = vld [vmem:[%s3747 + $0xc8] sm:$0xff]
        %v3985 = vld [vmem:[%s3747 + $0xd0] sm:$0xff]
        %v3986 = vld [vmem:[%s3747 + $0xd8] sm:$0xff]
        %v3987 = vld [vmem:[%s3747 + $0xe0] sm:$0xff]
        %v3988 = vld [vmem:[%s3747 + $0xe8] sm:$0xff]
        %v3989 = vld [vmem:[%s3747 + $0xf0] sm:$0xff]
        %v3990 = vld [vmem:[%s3747 + $0xf8] sm:$0xff]
        %v3991 = vld [vmem:[%s3747 + $0x100] sm:$0xff]
        %v3992 = vld [vmem:[%s3747 + $0x108] sm:$0xff]
        %v3993 = vld [vmem:[%s3747 + $0x110] sm:$0xff]
        %v3994 = vld [vmem:[%s3747 + $0x118] sm:$0xff]
        %v3995 = vld [vmem:[%s3747 + $0x120] sm:$0xff]
        %v3996 = vld [vmem:[%s3747 + $0x128] sm:$0xff]
        %v3997 = vld [vmem:[%s3747 + $0x130] sm:$0xff]
        %v3998 = vld [vmem:[%s3747 + $0x138] sm:$0xff]
        %v3999 = vld [vmem:[%s3747 + $0x140] sm:$0xff]
        %v4000 = vld [vmem:[%s3747 + $0x148] sm:$0xff]
        %v4001 = vld [vmem:[%s3747 + $0x150] sm:$0xff]
        %v4002 = vld [vmem:[%s3747 + $0x158] sm:$0xff]
        %v4003 = vld [vmem:[%s3747 + $0x160] sm:$0xff]
        %v4004 = vld [vmem:[%s3747 + $0x168] sm:$0xff]
        %v4005 = vld [vmem:[%s3747 + $0x170] sm:$0xff]
        %v4006 = vld [vmem:[%s3747 + $0x178] sm:$0xff]
        %s4007 = scalar_lea.vmem %s1, 192
        %v4008 = vld [vmem:[%s4007] sm:$0xf]
        %v4009 = vld [vmem:[%s4007 + $0x4] sm:$0xf]
        %v4010 = vld [vmem:[%s4007 + $0x8] sm:$0xf]
        %v4011 = vld [vmem:[%s4007 + $0xc] sm:$0xf]
        %v4012 = vld [vmem:[%s4007 + $0x10] sm:$0xf]
        %v4013 = vld [vmem:[%s4007 + $0x14] sm:$0xf]
        %v4014 = vld [vmem:[%s4007 + $0x18] sm:$0xf]
        %v4015 = vld [vmem:[%s4007 + $0x1c] sm:$0xf]
        %v4016 = vld [vmem:[%s4007 + $0x20] sm:$0xf]
        %v4017 = vld [vmem:[%s4007 + $0x24] sm:$0xf]
        %v4018 = vld [vmem:[%s4007 + $0x28] sm:$0xf]
        %v4019 = vld [vmem:[%s4007 + $0x2c] sm:$0xf]
        %v4020 = vld [vmem:[%s4007 + $0x30] sm:$0xf]
        %v4021 = vld [vmem:[%s4007 + $0x34] sm:$0xf]
        %v4022 = vld [vmem:[%s4007 + $0x38] sm:$0xf]
        %v4023 = vld [vmem:[%s4007 + $0x3c] sm:$0xf]
        %v4024 = vld [vmem:[%s4007 + $0x40] sm:$0xf]
        %v4025 = vld [vmem:[%s4007 + $0x44] sm:$0xf]
        %v4026 = vld [vmem:[%s4007 + $0x48] sm:$0xf]
        %v4027 = vld [vmem:[%s4007 + $0x4c] sm:$0xf]
        %v4028 = vld [vmem:[%s4007 + $0x50] sm:$0xf]
        %v4029 = vld [vmem:[%s4007 + $0x54] sm:$0xf]
        %v4030 = vld [vmem:[%s4007 + $0x58] sm:$0xf]
        %v4031 = vld [vmem:[%s4007 + $0x5c] sm:$0xf]
        %v4032 = vld [vmem:[%s4007 + $0x60] sm:$0xf]
        %v4033 = vld [vmem:[%s4007 + $0x64] sm:$0xf]
        %v4034 = vld [vmem:[%s4007 + $0x68] sm:$0xf]
        %v4035 = vld [vmem:[%s4007 + $0x6c] sm:$0xf]
        %v4036 = vld [vmem:[%s4007 + $0x70] sm:$0xf]
        %v4037 = vld [vmem:[%s4007 + $0x74] sm:$0xf]
        %v4038 = vld [vmem:[%s4007 + $0x78] sm:$0xf]
        %v4039 = vld [vmem:[%s4007 + $0x7c] sm:$0xf]
        %v4040 = vld [vmem:[%s4007 + $0x80] sm:$0xf]
        %v4041 = vld [vmem:[%s4007 + $0x84] sm:$0xf]
        %v4042 = vld [vmem:[%s4007 + $0x88] sm:$0xf]
        %v4043 = vld [vmem:[%s4007 + $0x8c] sm:$0xf]
        %v4044 = vld [vmem:[%s4007 + $0x90] sm:$0xf]
        %v4045 = vld [vmem:[%s4007 + $0x94] sm:$0xf]
        %v4046 = vld [vmem:[%s4007 + $0x98] sm:$0xf]
        %v4047 = vld [vmem:[%s4007 + $0x9c] sm:$0xf]
        %v4048 = vld [vmem:[%s4007 + $0xa0] sm:$0xf]
        %v4049 = vld [vmem:[%s4007 + $0xa4] sm:$0xf]
        %v4050 = vld [vmem:[%s4007 + $0xa8] sm:$0xf]
        %v4051 = vld [vmem:[%s4007 + $0xac] sm:$0xf]
        %v4052 = vld [vmem:[%s4007 + $0xb0] sm:$0xf]
        %v4053 = vld [vmem:[%s4007 + $0xb4] sm:$0xf]
        %v4054 = vld [vmem:[%s4007 + $0xb8] sm:$0xf]
        %v4055 = vld [vmem:[%s4007 + $0xbc] sm:$0xf]
        %v4104 = vunpack.c.l.b16 %v4008
        %v4105 = vunpack.c.l.b16 %v4009
        %v4106 = vunpack.c.l.b16 %v4010
        %v4107 = vunpack.c.l.b16 %v4011
        %v4108 = vunpack.c.l.b16 %v4012
        %v4109 = vunpack.c.l.b16 %v4013
        %v4110 = vunpack.c.l.b16 %v4014
        %v4111 = vunpack.c.l.b16 %v4015
        %v4112 = vunpack.c.l.b16 %v4016
        %v4113 = vunpack.c.l.b16 %v4017
        %v4114 = vunpack.c.l.b16 %v4018
        %v4115 = vunpack.c.l.b16 %v4019
        %v4116 = vunpack.c.l.b16 %v4020
        %v4117 = vunpack.c.l.b16 %v4021
        %v4118 = vunpack.c.l.b16 %v4022
        %v4119 = vunpack.c.l.b16 %v4023
        %v4120 = vunpack.c.l.b16 %v4024
        %v4121 = vunpack.c.l.b16 %v4025
        %v4122 = vunpack.c.l.b16 %v4026
        %v4123 = vunpack.c.l.b16 %v4027
        %v4124 = vunpack.c.l.b16 %v4028
        %v4125 = vunpack.c.l.b16 %v4029
        %v4126 = vunpack.c.l.b16 %v4030
        %v4127 = vunpack.c.l.b16 %v4031
        %v4128 = vunpack.c.l.b16 %v4032
        %v4129 = vunpack.c.l.b16 %v4033
        %v4130 = vunpack.c.l.b16 %v4034
        %v4131 = vunpack.c.l.b16 %v4035
        %v4132 = vunpack.c.l.b16 %v4036
        %v4133 = vunpack.c.l.b16 %v4037
        %v4134 = vunpack.c.l.b16 %v4038
        %v4135 = vunpack.c.l.b16 %v4039
        %v4136 = vunpack.c.l.b16 %v4040
        %v4137 = vunpack.c.l.b16 %v4041
        %v4138 = vunpack.c.l.b16 %v4042
        %v4139 = vunpack.c.l.b16 %v4043
        %v4140 = vunpack.c.l.b16 %v4044
        %v4141 = vunpack.c.l.b16 %v4045
        %v4142 = vunpack.c.l.b16 %v4046
        %v4143 = vunpack.c.l.b16 %v4047
        %v4144 = vunpack.c.l.b16 %v4048
        %v4145 = vunpack.c.l.b16 %v4049
        %v4146 = vunpack.c.l.b16 %v4050
        %v4147 = vunpack.c.l.b16 %v4051
        %v4148 = vunpack.c.l.b16 %v4052
        %v4149 = vunpack.c.l.b16 %v4053
        %v4150 = vunpack.c.l.b16 %v4054
        %v4151 = vunpack.c.l.b16 %v4055
        %v4152 = vpack.c.b16 %v4105, %v4104
        %v4153 = vpack.c.b16 %v4107, %v4106
        %v4154 = vpack.c.b16 %v4109, %v4108
        %v4155 = vpack.c.b16 %v4111, %v4110
        %v4156 = vpack.c.b16 %v4113, %v4112
        %v4157 = vpack.c.b16 %v4115, %v4114
        %v4158 = vpack.c.b16 %v4117, %v4116
        %v4159 = vpack.c.b16 %v4119, %v4118
        %v4160 = vpack.c.b16 %v4121, %v4120
        %v4161 = vpack.c.b16 %v4123, %v4122
        %v4162 = vpack.c.b16 %v4125, %v4124
        %v4163 = vpack.c.b16 %v4127, %v4126
        %v4164 = vpack.c.b16 %v4129, %v4128
        %v4165 = vpack.c.b16 %v4131, %v4130
        %v4166 = vpack.c.b16 %v4133, %v4132
        %v4167 = vpack.c.b16 %v4135, %v4134
        %v4168 = vpack.c.b16 %v4137, %v4136
        %v4169 = vpack.c.b16 %v4139, %v4138
        %v4170 = vpack.c.b16 %v4141, %v4140
        %v4171 = vpack.c.b16 %v4143, %v4142
        %v4172 = vpack.c.b16 %v4145, %v4144
        %v4173 = vpack.c.b16 %v4147, %v4146
        %v4174 = vpack.c.b16 %v4149, %v4148
        %v4175 = vpack.c.b16 %v4151, %v4150
        %4200 = vmatprep.subr.bf16.mxu0 0
        %4201 = vmatpush1.bf16.msra.mxu0 %v4152
        %4202 = vmatprep.subr.bf16.mxu0 0
        %4203 = vmatpush1.bf16.msra.mxu0 %v4153
        %4204 = vmatprep.subr.bf16.mxu0 0
        %4205 = vmatpush1.bf16.msra.mxu0 %v4154
        %4206 = vmatprep.subr.bf16.mxu0 0
        %4207 = vmatpush1.bf16.msra.mxu0 %v4155
        %4208 = vmatprep.subr.bf16.mxu0 0
        %4209 = vmatpush1.bf16.msra.mxu0 %v4156
        %4210 = vmatprep.subr.bf16.mxu0 0
        %4211 = vmatpush1.bf16.msra.mxu0 %v4157
        %4212 = vmatprep.subr.bf16.mxu0 0
        %4213 = vmatpush1.bf16.msra.mxu0 %v4158
        %4214 = vmatprep.subr.bf16.mxu0 0
        %4215 = vmatpush1.bf16.msra.mxu0 %v4159
        %4216 = vmatprep.subr.bf16.mxu0 0
        %4217 = vmatpush1.bf16.msra.mxu0 %v4160
        %4218 = vmatprep.subr.bf16.mxu0 0
        %4219 = vmatpush1.bf16.msra.mxu0 %v4161
        %4220 = vmatprep.subr.bf16.mxu0 0
        %4221 = vmatpush1.bf16.msra.mxu0 %v4162
        %4222 = vmatprep.subr.bf16.mxu0 0
        %4223 = vmatpush1.bf16.msra.mxu0 %v4163
        %4224 = vmatprep.subr.bf16.mxu0 0
        %4225 = vmatpush1.bf16.msra.mxu0 %v4164
        %4226 = vmatprep.subr.bf16.mxu0 0
        %4227 = vmatpush1.bf16.msra.mxu0 %v4165
        %4228 = vmatprep.subr.bf16.mxu0 0
        %4229 = vmatpush1.bf16.msra.mxu0 %v4166
        %4230 = vmatprep.subr.bf16.mxu0 0
        %4231 = vmatpush1.bf16.msra.mxu0 %v4167
        %4232 = vmatprep.mubr.bf16.mxu0 %v3960
        %4233 = vmatmul.mubr.bf16.gmra.mrb[0].mxu0 %v3959
        %v4234 = vpop.f32.mrb[0].mxu0
        %v4235 = vadd.f32 0.0, %v4234
        %v4236 = vpop.f32.mrb[0].mxu0
        %v4237 = vpop.f32.mrb[0].mxu0
        %v4238 = vadd.f32 0.0, %v4237
        %v4239 = vpop.f32.mrb[0].mxu0
        %4240 = vmatprep.mubr.bf16.mxu0 %v3963
        %4241 = vmatmul.mubr.bf16.gmra.mrb[0].mxu0 %v3962
        %v4242 = vpop.f32.mrb[0].mxu0
        %v4243 = vadd.f32 0.0, %v4242
        %v4244 = vpop.f32.mrb[0].mxu0
        %v4245 = vpop.f32.mrb[0].mxu0
        %v4246 = vadd.f32 0.0, %v4245
        %v4247 = vpop.f32.mrb[0].mxu0
        %4248 = vmatprep.mubr.bf16.mxu0 %v3966
        %4249 = vmatmul.mubr.bf16.gmra.mrb[0].mxu0 %v3965
        %v4250 = vpop.f32.mrb[0].mxu0
        %v4251 = vadd.f32 0.0, %v4250
        %v4252 = vpop.f32.mrb[0].mxu0
        %v4253 = vpop.f32.mrb[0].mxu0
        %v4254 = vadd.f32 0.0, %v4253
        %v4255 = vpop.f32.mrb[0].mxu0
        %4256 = vmatprep.mubr.bf16.mxu0 %v3969
        %4257 = vmatmul.mubr.bf16.gmra.mrb[0].mxu0 %v3968
        %v4258 = vpop.f32.mrb[0].mxu0
        %v4259 = vadd.f32 0.0, %v4258
        %v4260 = vpop.f32.mrb[0].mxu0
        %v4261 = vpop.f32.mrb[0].mxu0
        %v4262 = vadd.f32 0.0, %v4261
        %v4263 = vpop.f32.mrb[0].mxu0
        %4264 = vmatprep.mubr.bf16.mxu0 %v3972
        %4265 = vmatmul.mubr.bf16.gmra.mrb[0].mxu0 %v3971
        %v4266 = vpop.f32.mrb[0].mxu0
        %v4267 = vadd.f32 0.0, %v4266
        %v4268 = vpop.f32.mrb[0].mxu0
        %v4269 = vpop.f32.mrb[0].mxu0
        %v4270 = vadd.f32 0.0, %v4269
        %v4271 = vpop.f32.mrb[0].mxu0
        %4272 = vmatprep.mubr.bf16.mxu0 %v3975
        %4273 = vmatmul.mubr.bf16.gmra.mrb[0].mxu0 %v3974
        %v4274 = vpop.f32.mrb[0].mxu0
        %v4275 = vadd.f32 0.0, %v4274
        %v4276 = vpop.f32.mrb[0].mxu0
        %v4277 = vpop.f32.mrb[0].mxu0
        %v4278 = vadd.f32 0.0, %v4277
        %v4279 = vpop.f32.mrb[0].mxu0
        %4280 = vmatprep.mubr.bf16.mxu0 %v3978
        %4281 = vmatmul.mubr.bf16.gmra.mrb[0].mxu0 %v3977
        %v4282 = vpop.f32.mrb[0].mxu0
        %v4283 = vadd.f32 0.0, %v4282
        %v4284 = vpop.f32.mrb[0].mxu0
        %v4285 = vpop.f32.mrb[0].mxu0
        %v4286 = vadd.f32 0.0, %v4285
        %v4287 = vpop.f32.mrb[0].mxu0
        %4288 = vmatprep.mubr.bf16.mxu0 %v3981
        %4289 = vmatmul.mubr.bf16.gmra.mrb[0].mxu0 %v3980
        %v4290 = vpop.f32.mrb[0].mxu0
        %v4291 = vadd.f32 0.0, %v4290
        %v4292 = vpop.f32.mrb[0].mxu0
        %v4293 = vpop.f32.mrb[0].mxu0
        %v4294 = vadd.f32 0.0, %v4293
        %v4295 = vpop.f32.mrb[0].mxu0
        %4296 = vmatprep.mubr.bf16.mxu0 %v3984
        %4297 = vmatmul.mubr.bf16.gmra.mrb[0].mxu0 %v3983
        %v4298 = vpop.f32.mrb[0].mxu0
        %v4299 = vadd.f32 0.0, %v4298
        %v4300 = vpop.f32.mrb[0].mxu0
        %v4301 = vpop.f32.mrb[0].mxu0
        %v4302 = vadd.f32 0.0, %v4301
        %v4303 = vpop.f32.mrb[0].mxu0
        %4304 = vmatprep.mubr.bf16.mxu0 %v3987
        %4305 = vmatmul.mubr.bf16.gmra.mrb[0].mxu0 %v3986
        %v4306 = vpop.f32.mrb[0].mxu0
        %v4307 = vadd.f32 0.0, %v4306
        %v4308 = vpop.f32.mrb[0].mxu0
        %v4309 = vpop.f32.mrb[0].mxu0
        %v4310 = vadd.f32 0.0, %v4309
        %v4311 = vpop.f32.mrb[0].mxu0
        %4312 = vmatprep.mubr.bf16.mxu0 %v3990
        %4313 = vmatmul.mubr.bf16.gmra.mrb[0].mxu0 %v3989
        %v4314 = vpop.f32.mrb[0].mxu0
        %v4315 = vadd.f32 0.0, %v4314
        %v4316 = vpop.f32.mrb[0].mxu0
        %v4317 = vpop.f32.mrb[0].mxu0
        %v4318 = vadd.f32 0.0, %v4317
        %v4319 = vpop.f32.mrb[0].mxu0
        %4320 = vmatprep.mubr.bf16.mxu0 %v3993
        %4321 = vmatmul.mubr.bf16.gmra.mrb[0].mxu0 %v3992
        %v4322 = vpop.f32.mrb[0].mxu0
        %v4323 = vadd.f32 0.0, %v4322
        %v4324 = vpop.f32.mrb[0].mxu0
        %v4325 = vpop.f32.mrb[0].mxu0
        %v4326 = vadd.f32 0.0, %v4325
        %v4327 = vpop.f32.mrb[0].mxu0
        %4328 = vmatprep.mubr.bf16.mxu0 %v3996
        %4329 = vmatmul.mubr.bf16.gmra.mrb[0].mxu0 %v3995
        %v4330 = vpop.f32.mrb[0].mxu0
        %v4331 = vadd.f32 0.0, %v4330
        %v4332 = vpop.f32.mrb[0].mxu0
        %v4333 = vpop.f32.mrb[0].mxu0
        %v4334 = vadd.f32 0.0, %v4333
        %v4335 = vpop.f32.mrb[0].mxu0
        %4336 = vmatprep.mubr.bf16.mxu0 %v3999
        %4337 = vmatmul.mubr.bf16.gmra.mrb[0].mxu0 %v3998
        %v4338 = vpop.f32.mrb[0].mxu0
        %v4339 = vadd.f32 0.0, %v4338
        %v4340 = vpop.f32.mrb[0].mxu0
        %v4341 = vpop.f32.mrb[0].mxu0
        %v4342 = vadd.f32 0.0, %v4341
        %v4343 = vpop.f32.mrb[0].mxu0
        %4344 = vmatprep.mubr.bf16.mxu0 %v4002
        %4345 = vmatmul.mubr.bf16.gmra.mrb[0].mxu0 %v4001
        %v4346 = vpop.f32.mrb[0].mxu0
        %v4347 = vadd.f32 0.0, %v4346
        %v4348 = vpop.f32.mrb[0].mxu0
        %v4349 = vpop.f32.mrb[0].mxu0
        %v4350 = vadd.f32 0.0, %v4349
        %v4351 = vpop.f32.mrb[0].mxu0
        %4352 = vmatprep.mubr.bf16.mxu0 %v4005
        %4353 = vmatmul.mubr.bf16.gmra.mrb[0].mxu0 %v4004
        %v4354 = vpop.f32.mrb[0].mxu0
        %v4355 = vadd.f32 0.0, %v4354
        %v4356 = vpop.f32.mrb[0].mxu0
        %v4357 = vpop.f32.mrb[0].mxu0
        %v4358 = vadd.f32 0.0, %v4357
        %v4359 = vpop.f32.mrb[0].mxu0
        %4360 = vdwg.mxu0
        %4361 = vmatprep.subr.bf16.mxu0 0
        %4362 = vmatpush1.bf16.msra.mxu0 %v4168
        %4363 = vmatprep.subr.bf16.mxu0 0
        %4364 = vmatpush1.bf16.msra.mxu0 %v4169
        %4365 = vmatprep.subr.bf16.mxu0 0
        %4366 = vmatpush1.bf16.msra.mxu0 %v4170
        %4367 = vmatprep.subr.bf16.mxu0 0
        %4368 = vmatpush1.bf16.msra.mxu0 %v4171
        %4369 = vmatprep.subr.bf16.mxu0 0
        %4370 = vmatpush1.bf16.msra.mxu0 %v4172
        %4371 = vmatprep.subr.bf16.mxu0 0
        %4372 = vmatpush1.bf16.msra.mxu0 %v4173
        %4373 = vmatprep.subr.bf16.mxu0 0
        %4374 = vmatpush1.bf16.msra.mxu0 %v4174
        %4375 = vmatprep.subr.bf16.mxu0 0
        %4376 = vmatpush1.bf16.msra.mxu0 %v4175
        %4377 = vmatprep.subr.bf16.mxu0 0
        %4378 = vmatpush1.bf16.msra.mxu0 0
        %4379 = vmatprep.subr.bf16.mxu0 0
        %4380 = vmatpush1.bf16.msra.mxu0 0
        %4381 = vmatprep.subr.bf16.mxu0 0
        %4382 = vmatpush1.bf16.msra.mxu0 0
        %4383 = vmatprep.subr.bf16.mxu0 0
        %4384 = vmatpush1.bf16.msra.mxu0 0
        %4385 = vmatprep.subr.bf16.mxu0 0
        %4386 = vmatpush1.bf16.msra.mxu0 0
        %4387 = vmatprep.subr.bf16.mxu0 0
        %4388 = vmatpush1.bf16.msra.mxu0 0
        %4389 = vmatprep.subr.bf16.mxu0 0
        %4390 = vmatpush1.bf16.msra.mxu0 0
        %4391 = vmatprep.subr.bf16.mxu0 0
        %4392 = vmatpush1.bf16.msra.mxu0 0
        %4393 = vmatprep.mubr.bf16.mxu0 0
        %4394 = vmatmul.mubr.bf16.gmra.mrb[0].mxu0 %v3961
        %v4395 = vpop.f32.mrb[0].mxu0
        %v4396 = vadd.f32 %v4235, %v4395
        %v4397 = vpop.f32.mrb[0].mxu0
        %v4398 = vpop.f32.mrb[0].mxu0
        %v4399 = vadd.f32 %v4238, %v4398
        %v4400 = vpop.f32.mrb[0].mxu0
        %4401 = vmatprep.mubr.bf16.mxu0 0
        %4402 = vmatmul.mubr.bf16.gmra.mrb[0].mxu0 %v3964
        %v4403 = vpop.f32.mrb[0].mxu0
        %v4404 = vadd.f32 %v4243, %v4403
        %v4405 = vpop.f32.mrb[0].mxu0
        %v4406 = vpop.f32.mrb[0].mxu0
        %v4407 = vadd.f32 %v4246, %v4406
        %v4408 = vpop.f32.mrb[0].mxu0
        %4409 = vmatprep.mubr.bf16.mxu0 0
        %4410 = vmatmul.mubr.bf16.gmra.mrb[0].mxu0 %v3967
        %v4411 = vpop.f32.mrb[0].mxu0
        %v4412 = vadd.f32 %v4251, %v4411
        %v4413 = vpop.f32.mrb[0].mxu0
        %v4414 = vpop.f32.mrb[0].mxu0
        %v4415 = vadd.f32 %v4254, %v4414
        %v4416 = vpop.f32.mrb[0].mxu0
        %4417 = vmatprep.mubr.bf16.mxu0 0
        %4418 = vmatmul.mubr.bf16.gmra.mrb[0].mxu0 %v3970
        %v4419 = vpop.f32.mrb[0].mxu0
        %v4420 = vadd.f32 %v4259, %v4419
        %v4421 = vpop.f32.mrb[0].mxu0
        %v4422 = vpop.f32.mrb[0].mxu0
        %v4423 = vadd.f32 %v4262, %v4422
        %v4424 = vpop.f32.mrb[0].mxu0
        %4425 = vmatprep.mubr.bf16.mxu0 0
        %4426 = vmatmul.mubr.bf16.gmra.mrb[0].mxu0 %v3973
        %v4427 = vpop.f32.mrb[0].mxu0
        %v4428 = vadd.f32 %v4267, %v4427
        %v4429 = vpop.f32.mrb[0].mxu0
        %v4430 = vpop.f32.mrb[0].mxu0
        %v4431 = vadd.f32 %v4270, %v4430
        %v4432 = vpop.f32.mrb[0].mxu0
        %4433 = vmatprep.mubr.bf16.mxu0 0
        %4434 = vmatmul.mubr.bf16.gmra.mrb[0].mxu0 %v3976
        %v4435 = vpop.f32.mrb[0].mxu0
        %v4436 = vadd.f32 %v4275, %v4435
        %v4437 = vpop.f32.mrb[0].mxu0
        %v4438 = vpop.f32.mrb[0].mxu0
        %v4439 = vadd.f32 %v4278, %v4438
        %v4440 = vpop.f32.mrb[0].mxu0
        %4441 = vmatprep.mubr.bf16.mxu0 0
        %4442 = vmatmul.mubr.bf16.gmra.mrb[0].mxu0 %v3979
        %v4443 = vpop.f32.mrb[0].mxu0
        %v4444 = vadd.f32 %v4283, %v4443
        %v4445 = vpop.f32.mrb[0].mxu0
        %v4446 = vpop.f32.mrb[0].mxu0
        %v4447 = vadd.f32 %v4286, %v4446
        %v4448 = vpop.f32.mrb[0].mxu0
        %4449 = vmatprep.mubr.bf16.mxu0 0
        %4450 = vmatmul.mubr.bf16.gmra.mrb[0].mxu0 %v3982
        %v4451 = vpop.f32.mrb[0].mxu0
        %v4452 = vadd.f32 %v4291, %v4451
        %v4453 = vpop.f32.mrb[0].mxu0
        %v4454 = vpop.f32.mrb[0].mxu0
        %v4455 = vadd.f32 %v4294, %v4454
        %v4456 = vpop.f32.mrb[0].mxu0
        %4457 = vmatprep.mubr.bf16.mxu0 0
        %4458 = vmatmul.mubr.bf16.gmra.mrb[0].mxu0 %v3985
        %v4459 = vpop.f32.mrb[0].mxu0
        %v4460 = vadd.f32 %v4299, %v4459
        %v4461 = vpop.f32.mrb[0].mxu0
        %v4462 = vpop.f32.mrb[0].mxu0
        %v4463 = vadd.f32 %v4302, %v4462
        %v4464 = vpop.f32.mrb[0].mxu0
        %4465 = vmatprep.mubr.bf16.mxu0 0
        %4466 = vmatmul.mubr.bf16.gmra.mrb[0].mxu0 %v3988
        %v4467 = vpop.f32.mrb[0].mxu0
        %v4468 = vadd.f32 %v4307, %v4467
        %v4469 = vpop.f32.mrb[0].mxu0
        %v4470 = vpop.f32.mrb[0].mxu0
        %v4471 = vadd.f32 %v4310, %v4470
        %v4472 = vpop.f32.mrb[0].mxu0
        %4473 = vmatprep.mubr.bf16.mxu0 0
        %4474 = vmatmul.mubr.bf16.gmra.mrb[0].mxu0 %v3991
        %v4475 = vpop.f32.mrb[0].mxu0
        %v4476 = vadd.f32 %v4315, %v4475
        %v4477 = vpop.f32.mrb[0].mxu0
        %v4478 = vpop.f32.mrb[0].mxu0
        %v4479 = vadd.f32 %v4318, %v4478
        %v4480 = vpop.f32.mrb[0].mxu0
        %4481 = vmatprep.mubr.bf16.mxu0 0
        %4482 = vmatmul.mubr.bf16.gmra.mrb[0].mxu0 %v3994
        %v4483 = vpop.f32.mrb[0].mxu0
        %v4484 = vadd.f32 %v4323, %v4483
        %v4485 = vpop.f32.mrb[0].mxu0
        %v4486 = vpop.f32.mrb[0].mxu0
        %v4487 = vadd.f32 %v4326, %v4486
        %v4488 = vpop.f32.mrb[0].mxu0
        %4489 = vmatprep.mubr.bf16.mxu0 0
        %4490 = vmatmul.mubr.bf16.gmra.mrb[0].mxu0 %v3997
        %v4491 = vpop.f32.mrb[0].mxu0
        %v4492 = vadd.f32 %v4331, %v4491
        %v4493 = vpop.f32.mrb[0].mxu0
        %v4494 = vpop.f32.mrb[0].mxu0
        %v4495 = vadd.f32 %v4334, %v4494
        %v4496 = vpop.f32.mrb[0].mxu0
        %4497 = vmatprep.mubr.bf16.mxu0 0
        %4498 = vmatmul.mubr.bf16.gmra.mrb[0].mxu0 %v4000
        %v4499 = vpop.f32.mrb[0].mxu0
        %v4500 = vadd.f32 %v4339, %v4499
        %v4501 = vpop.f32.mrb[0].mxu0
        %v4502 = vpop.f32.mrb[0].mxu0
        %v4503 = vadd.f32 %v4342, %v4502
        %v4504 = vpop.f32.mrb[0].mxu0
        %4505 = vmatprep.mubr.bf16.mxu0 0
        %4506 = vmatmul.mubr.bf16.gmra.mrb[0].mxu0 %v4003
        %v4507 = vpop.f32.mrb[0].mxu0
        %v4508 = vadd.f32 %v4347, %v4507
        %v4509 = vpop.f32.mrb[0].mxu0
        %v4510 = vpop.f32.mrb[0].mxu0
        %v4511 = vadd.f32 %v4350, %v4510
        %v4512 = vpop.f32.mrb[0].mxu0
        %4513 = vmatprep.mubr.bf16.mxu0 0
        %4514 = vmatmul.mubr.bf16.gmra.mrb[0].mxu0 %v4006
        %v4515 = vpop.f32.mrb[0].mxu0
        %v4516 = vadd.f32 %v4355, %v4515
        %v4517 = vpop.f32.mrb[0].mxu0
        %v4518 = vpop.f32.mrb[0].mxu0
        %v4519 = vadd.f32 %v4358, %v4518
        %v4520 = vpop.f32.mrb[0].mxu0
        %4521 = vdwg.mxu0
        %v4570 = vunpack.c.l.b16 %v3911
        %v4571 = vunpack.c.l.b16 %v3912
        %v4572 = vunpack.c.l.b16 %v3913
        %v4573 = vunpack.c.l.b16 %v3914
        %v4574 = vunpack.c.l.b16 %v3915
        %v4575 = vunpack.c.l.b16 %v3916
        %v4576 = vunpack.c.l.b16 %v3917
        %v4577 = vunpack.c.l.b16 %v3918
        %v4578 = vunpack.c.l.b16 %v3919
        %v4579 = vunpack.c.l.b16 %v3920
        %v4580 = vunpack.c.l.b16 %v3921
        %v4581 = vunpack.c.l.b16 %v3922
        %v4582 = vunpack.c.l.b16 %v3923
        %v4583 = vunpack.c.l.b16 %v3924
        %v4584 = vunpack.c.l.b16 %v3925
        %v4585 = vunpack.c.l.b16 %v3926
        %v4586 = vunpack.c.l.b16 %v3927
        %v4587 = vunpack.c.l.b16 %v3928
        %v4588 = vunpack.c.l.b16 %v3929
        %v4589 = vunpack.c.l.b16 %v3930
        %v4590 = vunpack.c.l.b16 %v3931
        %v4591 = vunpack.c.l.b16 %v3932
        %v4592 = vunpack.c.l.b16 %v3933
        %v4593 = vunpack.c.l.b16 %v3934
        %v4594 = vunpack.c.l.b16 %v3935
        %v4595 = vunpack.c.l.b16 %v3936
        %v4596 = vunpack.c.l.b16 %v3937
        %v4597 = vunpack.c.l.b16 %v3938
        %v4598 = vunpack.c.l.b16 %v3939
        %v4599 = vunpack.c.l.b16 %v3940
        %v4600 = vunpack.c.l.b16 %v3941
        %v4601 = vunpack.c.l.b16 %v3942
        %v4602 = vunpack.c.l.b16 %v3943
        %v4603 = vunpack.c.l.b16 %v3944
        %v4604 = vunpack.c.l.b16 %v3945
        %v4605 = vunpack.c.l.b16 %v3946
        %v4606 = vunpack.c.l.b16 %v3947
        %v4607 = vunpack.c.l.b16 %v3948
        %v4608 = vunpack.c.l.b16 %v3949
        %v4609 = vunpack.c.l.b16 %v3950
        %v4610 = vunpack.c.l.b16 %v3951
        %v4611 = vunpack.c.l.b16 %v3952
        %v4612 = vunpack.c.l.b16 %v3953
        %v4613 = vunpack.c.l.b16 %v3954
        %v4614 = vunpack.c.l.b16 %v3955
        %v4615 = vunpack.c.l.b16 %v3956
        %v4616 = vunpack.c.l.b16 %v3957
        %v4617 = vunpack.c.l.b16 %v3958
        %v4618 = vpack.c.b16 %v4571, %v4570
        %v4619 = vpack.c.b16 %v4573, %v4572
        %v4620 = vpack.c.b16 %v4575, %v4574
        %v4621 = vpack.c.b16 %v4577, %v4576
        %v4622 = vpack.c.b16 %v4579, %v4578
        %v4623 = vpack.c.b16 %v4581, %v4580
        %v4624 = vpack.c.b16 %v4583, %v4582
        %v4625 = vpack.c.b16 %v4585, %v4584
        %v4626 = vpack.c.b16 %v4587, %v4586
        %v4627 = vpack.c.b16 %v4589, %v4588
        %v4628 = vpack.c.b16 %v4591, %v4590
        %v4629 = vpack.c.b16 %v4593, %v4592
        %v4630 = vpack.c.b16 %v4595, %v4594
        %v4631 = vpack.c.b16 %v4597, %v4596
        %v4632 = vpack.c.b16 %v4599, %v4598
        %v4633 = vpack.c.b16 %v4601, %v4600
        %v4634 = vpack.c.b16 %v4603, %v4602
        %v4635 = vpack.c.b16 %v4605, %v4604
        %v4636 = vpack.c.b16 %v4607, %v4606
        %v4637 = vpack.c.b16 %v4609, %v4608
        %v4638 = vpack.c.b16 %v4611, %v4610
        %v4639 = vpack.c.b16 %v4613, %v4612
        %v4640 = vpack.c.b16 %v4615, %v4614
        %v4641 = vpack.c.b16 %v4617, %v4616
        %4666 = vmatprep.subr.bf16.mxu0 0
        %4667 = vmatpush1.bf16.msra.mxu0 %v4618
        %4668 = vmatprep.subr.bf16.mxu0 0
        %4669 = vmatpush1.bf16.msra.mxu0 %v4619
        %4670 = vmatprep.subr.bf16.mxu0 0
        %4671 = vmatpush1.bf16.msra.mxu0 %v4620
        %4672 = vmatprep.subr.bf16.mxu0 0
        %4673 = vmatpush1.bf16.msra.mxu0 %v4621
        %4674 = vmatprep.subr.bf16.mxu0 0
        %4675 = vmatpush1.bf16.msra.mxu0 %v4622
        %4676 = vmatprep.subr.bf16.mxu0 0
        %4677 = vmatpush1.bf16.msra.mxu0 %v4623
        %4678 = vmatprep.subr.bf16.mxu0 0
        %4679 = vmatpush1.bf16.msra.mxu0 %v4624
        %4680 = vmatprep.subr.bf16.mxu0 0
        %4681 = vmatpush1.bf16.msra.mxu0 %v4625
        %4682 = vmatprep.subr.bf16.mxu0 0
        %4683 = vmatpush1.bf16.msra.mxu0 %v4626
        %4684 = vmatprep.subr.bf16.mxu0 0
        %4685 = vmatpush1.bf16.msra.mxu0 %v4627
        %4686 = vmatprep.subr.bf16.mxu0 0
        %4687 = vmatpush1.bf16.msra.mxu0 %v4628
        %4688 = vmatprep.subr.bf16.mxu0 0
        %4689 = vmatpush1.bf16.msra.mxu0 %v4629
        %4690 = vmatprep.subr.bf16.mxu0 0
        %4691 = vmatpush1.bf16.msra.mxu0 %v4630
        %4692 = vmatprep.subr.bf16.mxu0 0
        %4693 = vmatpush1.bf16.msra.mxu0 %v4631
        %4694 = vmatprep.subr.bf16.mxu0 0
        %4695 = vmatpush1.bf16.msra.mxu0 %v4632
        %4696 = vmatprep.subr.bf16.mxu0 0
        %4697 = vmatpush1.bf16.msra.mxu0 %v4633
        %4698 = vmatprep.mubr.bf16.mxu0 %v3864
        %4699 = vmatmul.mubr.bf16.gmra.mrb[0].mxu0 %v3863
        %v4700 = vpop.f32.mrb[0].mxu0
        %v4701 = vadd.f32 %v4396, %v4700
        %v4702 = vpop.f32.mrb[0].mxu0
        %v4703 = vpop.f32.mrb[0].mxu0
        %v4704 = vadd.f32 %v4399, %v4703
        %v4705 = vpop.f32.mrb[0].mxu0
        %4706 = vmatprep.mubr.bf16.mxu0 %v3867
        %4707 = vmatmul.mubr.bf16.gmra.mrb[0].mxu0 %v3866
        %v4708 = vpop.f32.mrb[0].mxu0
        %v4709 = vadd.f32 %v4404, %v4708
        %v4710 = vpop.f32.mrb[0].mxu0
        %v4711 = vpop.f32.mrb[0].mxu0
        %v4712 = vadd.f32 %v4407, %v4711
        %v4713 = vpop.f32.mrb[0].mxu0
        %4714 = vmatprep.mubr.bf16.mxu0 %v3870
        %4715 = vmatmul.mubr.bf16.gmra.mrb[0].mxu0 %v3869
        %v4716 = vpop.f32.mrb[0].mxu0
        %v4717 = vadd.f32 %v4412, %v4716
        %v4718 = vpop.f32.mrb[0].mxu0
        %v4719 = vpop.f32.mrb[0].mxu0
        %v4720 = vadd.f32 %v4415, %v4719
        %v4721 = vpop.f32.mrb[0].mxu0
        %4722 = vmatprep.mubr.bf16.mxu0 %v3873
        %4723 = vmatmul.mubr.bf16.gmra.mrb[0].mxu0 %v3872
        %v4724 = vpop.f32.mrb[0].mxu0
        %v4725 = vadd.f32 %v4420, %v4724
        %v4726 = vpop.f32.mrb[0].mxu0
        %v4727 = vpop.f32.mrb[0].mxu0
        %v4728 = vadd.f32 %v4423, %v4727
        %v4729 = vpop.f32.mrb[0].mxu0
        %4730 = vmatprep.mubr.bf16.mxu0 %v3876
        %4731 = vmatmul.mubr.bf16.gmra.mrb[0].mxu0 %v3875
        %v4732 = vpop.f32.mrb[0].mxu0
        %v4733 = vadd.f32 %v4428, %v4732
        %v4734 = vpop.f32.mrb[0].mxu0
        %v4735 = vpop.f32.mrb[0].mxu0
        %v4736 = vadd.f32 %v4431, %v4735
        %v4737 = vpop.f32.mrb[0].mxu0
        %4738 = vmatprep.mubr.bf16.mxu0 %v3879
        %4739 = vmatmul.mubr.bf16.gmra.mrb[0].mxu0 %v3878
        %v4740 = vpop.f32.mrb[0].mxu0
        %v4741 = vadd.f32 %v4436, %v4740
        %v4742 = vpop.f32.mrb[0].mxu0
        %v4743 = vpop.f32.mrb[0].mxu0
        %v4744 = vadd.f32 %v4439, %v4743
        %v4745 = vpop.f32.mrb[0].mxu0
        %4746 = vmatprep.mubr.bf16.mxu0 %v3882
        %4747 = vmatmul.mubr.bf16.gmra.mrb[0].mxu0 %v3881
        %v4748 = vpop.f32.mrb[0].mxu0
        %v4749 = vadd.f32 %v4444, %v4748
        %v4750 = vpop.f32.mrb[0].mxu0
        %v4751 = vpop.f32.mrb[0].mxu0
        %v4752 = vadd.f32 %v4447, %v4751
        %v4753 = vpop.f32.mrb[0].mxu0
        %4754 = vmatprep.mubr.bf16.mxu0 %v3885
        %4755 = vmatmul.mubr.bf16.gmra.mrb[0].mxu0 %v3884
        %v4756 = vpop.f32.mrb[0].mxu0
        %v4757 = vadd.f32 %v4452, %v4756
        %v4758 = vpop.f32.mrb[0].mxu0
        %v4759 = vpop.f32.mrb[0].mxu0
        %v4760 = vadd.f32 %v4455, %v4759
        %v4761 = vpop.f32.mrb[0].mxu0
        %4762 = vmatprep.mubr.bf16.mxu0 %v3888
        %4763 = vmatmul.mubr.bf16.gmra.mrb[0].mxu0 %v3887
        %v4764 = vpop.f32.mrb[0].mxu0
        %v4765 = vadd.f32 %v4460, %v4764
        %v4766 = vpop.f32.mrb[0].mxu0
        %v4767 = vpop.f32.mrb[0].mxu0
        %v4768 = vadd.f32 %v4463, %v4767
        %v4769 = vpop.f32.mrb[0].mxu0
        %4770 = vmatprep.mubr.bf16.mxu0 %v3891
        %4771 = vmatmul.mubr.bf16.gmra.mrb[0].mxu0 %v3890
        %v4772 = vpop.f32.mrb[0].mxu0
        %v4773 = vadd.f32 %v4468, %v4772
        %v4774 = vpop.f32.mrb[0].mxu0
        %v4775 = vpop.f32.mrb[0].mxu0
        %v4776 = vadd.f32 %v4471, %v4775
        %v4777 = vpop.f32.mrb[0].mxu0
        %4778 = vmatprep.mubr.bf16.mxu0 %v3894
        %4779 = vmatmul.mubr.bf16.gmra.mrb[0].mxu0 %v3893
        %v4780 = vpop.f32.mrb[0].mxu0
        %v4781 = vadd.f32 %v4476, %v4780
        %v4782 = vpop.f32.mrb[0].mxu0
        %v4783 = vpop.f32.mrb[0].mxu0
        %v4784 = vadd.f32 %v4479, %v4783
        %v4785 = vpop.f32.mrb[0].mxu0
        %4786 = vmatprep.mubr.bf16.mxu0 %v3897
        %4787 = vmatmul.mubr.bf16.gmra.mrb[0].mxu0 %v3896
        %v4788 = vpop.f32.mrb[0].mxu0
        %v4789 = vadd.f32 %v4484, %v4788
        %v4790 = vpop.f32.mrb[0].mxu0
        %v4791 = vpop.f32.mrb[0].mxu0
        %v4792 = vadd.f32 %v4487, %v4791
        %v4793 = vpop.f32.mrb[0].mxu0
        %4794 = vmatprep.mubr.bf16.mxu0 %v3900
        %4795 = vmatmul.mubr.bf16.gmra.mrb[0].mxu0 %v3899
        %v4796 = vpop.f32.mrb[0].mxu0
        %v4797 = vadd.f32 %v4492, %v4796
        %v4798 = vpop.f32.mrb[0].mxu0
        %v4799 = vpop.f32.mrb[0].mxu0
        %v4800 = vadd.f32 %v4495, %v4799
        %v4801 = vpop.f32.mrb[0].mxu0
        %4802 = vmatprep.mubr.bf16.mxu0 %v3903
        %4803 = vmatmul.mubr.bf16.gmra.mrb[0].mxu0 %v3902
        %v4804 = vpop.f32.mrb[0].mxu0
        %v4805 = vadd.f32 %v4500, %v4804
        %v4806 = vpop.f32.mrb[0].mxu0
        %v4807 = vpop.f32.mrb[0].mxu0
        %v4808 = vadd.f32 %v4503, %v4807
        %v4809 = vpop.f32.mrb[0].mxu0
        %4810 = vmatprep.mubr.bf16.mxu0 %v3906
        %4811 = vmatmul.mubr.bf16.gmra.mrb[0].mxu0 %v3905
        %v4812 = vpop.f32.mrb[0].mxu0
        %v4813 = vadd.f32 %v4508, %v4812
        %v4814 = vpop.f32.mrb[0].mxu0
        %v4815 = vpop.f32.mrb[0].mxu0
        %v4816 = vadd.f32 %v4511, %v4815
        %v4817 = vpop.f32.mrb[0].mxu0
        %4818 = vmatprep.mubr.bf16.mxu0 %v3909
        %4819 = vmatmul.mubr.bf16.gmra.mrb[0].mxu0 %v3908
        %v4820 = vpop.f32.mrb[0].mxu0
        %v4821 = vadd.f32 %v4516, %v4820
        %v4822 = vpop.f32.mrb[0].mxu0
        %v4823 = vpop.f32.mrb[0].mxu0
        %v4824 = vadd.f32 %v4519, %v4823
        %v4825 = vpop.f32.mrb[0].mxu0
        %4826 = vdwg.mxu0
        %4827 = vmatprep.subr.bf16.mxu0 0
        %4828 = vmatpush1.bf16.msra.mxu0 %v4634
        %4829 = vmatprep.subr.bf16.mxu0 0
        %4830 = vmatpush1.bf16.msra.mxu0 %v4635
        %4831 = vmatprep.subr.bf16.mxu0 0
        %4832 = vmatpush1.bf16.msra.mxu0 %v4636
        %4833 = vmatprep.subr.bf16.mxu0 0
        %4834 = vmatpush1.bf16.msra.mxu0 %v4637
        %4835 = vmatprep.subr.bf16.mxu0 0
        %4836 = vmatpush1.bf16.msra.mxu0 %v4638
        %4837 = vmatprep.subr.bf16.mxu0 0
        %4838 = vmatpush1.bf16.msra.mxu0 %v4639
        %4839 = vmatprep.subr.bf16.mxu0 0
        %4840 = vmatpush1.bf16.msra.mxu0 %v4640
        %4841 = vmatprep.subr.bf16.mxu0 0
        %4842 = vmatpush1.bf16.msra.mxu0 %v4641
        %4843 = vmatprep.subr.bf16.mxu0 0
        %4844 = vmatpush1.bf16.msra.mxu0 0
        %4845 = vmatprep.subr.bf16.mxu0 0
        %4846 = vmatpush1.bf16.msra.mxu0 0
        %4847 = vmatprep.subr.bf16.mxu0 0
        %4848 = vmatpush1.bf16.msra.mxu0 0
        %4849 = vmatprep.subr.bf16.mxu0 0
        %4850 = vmatpush1.bf16.msra.mxu0 0
        %4851 = vmatprep.subr.bf16.mxu0 0
        %4852 = vmatpush1.bf16.msra.mxu0 0
        %4853 = vmatprep.subr.bf16.mxu0 0
        %4854 = vmatpush1.bf16.msra.mxu0 0
        %4855 = vmatprep.subr.bf16.mxu0 0
        %4856 = vmatpush1.bf16.msra.mxu0 0
        %4857 = vmatprep.subr.bf16.mxu0 0
        %4858 = vmatpush1.bf16.msra.mxu0 0
        %4859 = vmatprep.mubr.bf16.mxu0 0
        %4860 = vmatmul.mubr.bf16.gmra.mrb[0].mxu0 %v3865
        %v4861 = vpop.f32.mrb[0].mxu0
        %v4862 = vadd.f32 %v4701, %v4861
        %v4863 = vpop.f32.mrb[0].mxu0
        %v4864 = vpop.f32.mrb[0].mxu0
        %v4865 = vadd.f32 %v4704, %v4864
        %v4866 = vpop.f32.mrb[0].mxu0
        %4867 = vmatprep.mubr.bf16.mxu0 0
        %4868 = vmatmul.mubr.bf16.gmra.mrb[0].mxu0 %v3868
        %v4869 = vpop.f32.mrb[0].mxu0
        %v4870 = vadd.f32 %v4709, %v4869
        %v4871 = vpop.f32.mrb[0].mxu0
        %v4872 = vpop.f32.mrb[0].mxu0
        %v4873 = vadd.f32 %v4712, %v4872
        %v4874 = vpop.f32.mrb[0].mxu0
        %4875 = vmatprep.mubr.bf16.mxu0 0
        %4876 = vmatmul.mubr.bf16.gmra.mrb[0].mxu0 %v3871
        %v4877 = vpop.f32.mrb[0].mxu0
        %v4878 = vadd.f32 %v4717, %v4877
        %v4879 = vpop.f32.mrb[0].mxu0
        %v4880 = vpop.f32.mrb[0].mxu0
        %v4881 = vadd.f32 %v4720, %v4880
        %v4882 = vpop.f32.mrb[0].mxu0
        %4883 = vmatprep.mubr.bf16.mxu0 0
        %4884 = vmatmul.mubr.bf16.gmra.mrb[0].mxu0 %v3874
        %v4885 = vpop.f32.mrb[0].mxu0
        %v4886 = vadd.f32 %v4725, %v4885
        %v4887 = vpop.f32.mrb[0].mxu0
        %v4888 = vpop.f32.mrb[0].mxu0
        %v4889 = vadd.f32 %v4728, %v4888
        %v4890 = vpop.f32.mrb[0].mxu0
        %4891 = vmatprep.mubr.bf16.mxu0 0
        %4892 = vmatmul.mubr.bf16.gmra.mrb[0].mxu0 %v3877
        %v4893 = vpop.f32.mrb[0].mxu0
        %v4894 = vadd.f32 %v4733, %v4893
        %v4895 = vpop.f32.mrb[0].mxu0
        %v4896 = vpop.f32.mrb[0].mxu0
        %v4897 = vadd.f32 %v4736, %v4896
        %v4898 = vpop.f32.mrb[0].mxu0
        %4899 = vmatprep.mubr.bf16.mxu0 0
        %4900 = vmatmul.mubr.bf16.gmra.mrb[0].mxu0 %v3880
        %v4901 = vpop.f32.mrb[0].mxu0
        %v4902 = vadd.f32 %v4741, %v4901
        %v4903 = vpop.f32.mrb[0].mxu0
        %v4904 = vpop.f32.mrb[0].mxu0
        %v4905 = vadd.f32 %v4744, %v4904
        %v4906 = vpop.f32.mrb[0].mxu0
        %4907 = vmatprep.mubr.bf16.mxu0 0
        %4908 = vmatmul.mubr.bf16.gmra.mrb[0].mxu0 %v3883
        %v4909 = vpop.f32.mrb[0].mxu0
        %v4910 = vadd.f32 %v4749, %v4909
        %v4911 = vpop.f32.mrb[0].mxu0
        %v4912 = vpop.f32.mrb[0].mxu0
        %v4913 = vadd.f32 %v4752, %v4912
        %v4914 = vpop.f32.mrb[0].mxu0
        %4915 = vmatprep.mubr.bf16.mxu0 0
        %4916 = vmatmul.mubr.bf16.gmra.mrb[0].mxu0 %v3886
        %v4917 = vpop.f32.mrb[0].mxu0
        %v4918 = vadd.f32 %v4757, %v4917
        %v4919 = vpop.f32.mrb[0].mxu0
        %v4920 = vpop.f32.mrb[0].mxu0
        %v4921 = vadd.f32 %v4760, %v4920
        %v4922 = vpop.f32.mrb[0].mxu0
        %4923 = vmatprep.mubr.bf16.mxu0 0
        %4924 = vmatmul.mubr.bf16.gmra.mrb[0].mxu0 %v3889
        %v4925 = vpop.f32.mrb[0].mxu0
        %v4926 = vadd.f32 %v4765, %v4925
        %v4927 = vpop.f32.mrb[0].mxu0
        %v4928 = vpop.f32.mrb[0].mxu0
        %v4929 = vadd.f32 %v4768, %v4928
        %v4930 = vpop.f32.mrb[0].mxu0
        %4931 = vmatprep.mubr.bf16.mxu0 0
        %4932 = vmatmul.mubr.bf16.gmra.mrb[0].mxu0 %v3892
        %v4933 = vpop.f32.mrb[0].mxu0
        %v4934 = vadd.f32 %v4773, %v4933
        %v4935 = vpop.f32.mrb[0].mxu0
        %v4936 = vpop.f32.mrb[0].mxu0
        %v4937 = vadd.f32 %v4776, %v4936
        %v4938 = vpop.f32.mrb[0].mxu0
        %4939 = vmatprep.mubr.bf16.mxu0 0
        %4940 = vmatmul.mubr.bf16.gmra.mrb[0].mxu0 %v3895
        %v4941 = vpop.f32.mrb[0].mxu0
        %v4942 = vadd.f32 %v4781, %v4941
        %v4943 = vpop.f32.mrb[0].mxu0
        %v4944 = vpop.f32.mrb[0].mxu0
        %v4945 = vadd.f32 %v4784, %v4944
        %v4946 = vpop.f32.mrb[0].mxu0
        %4947 = vmatprep.mubr.bf16.mxu0 0
        %4948 = vmatmul.mubr.bf16.gmra.mrb[0].mxu0 %v3898
        %v4949 = vpop.f32.mrb[0].mxu0
        %v4950 = vadd.f32 %v4789, %v4949
        %v4951 = vpop.f32.mrb[0].mxu0
        %v4952 = vpop.f32.mrb[0].mxu0
        %v4953 = vadd.f32 %v4792, %v4952
        %v4954 = vpop.f32.mrb[0].mxu0
        %4955 = vmatprep.mubr.bf16.mxu0 0
        %4956 = vmatmul.mubr.bf16.gmra.mrb[0].mxu0 %v3901
        %v4957 = vpop.f32.mrb[0].mxu0
        %v4958 = vadd.f32 %v4797, %v4957
        %v4959 = vpop.f32.mrb[0].mxu0
        %v4960 = vpop.f32.mrb[0].mxu0
        %v4961 = vadd.f32 %v4800, %v4960
        %v4962 = vpop.f32.mrb[0].mxu0
        %4963 = vmatprep.mubr.bf16.mxu0 0
        %4964 = vmatmul.mubr.bf16.gmra.mrb[0].mxu0 %v3904
        %v4965 = vpop.f32.mrb[0].mxu0
        %v4966 = vadd.f32 %v4805, %v4965
        %v4967 = vpop.f32.mrb[0].mxu0
        %v4968 = vpop.f32.mrb[0].mxu0
        %v4969 = vadd.f32 %v4808, %v4968
        %v4970 = vpop.f32.mrb[0].mxu0
        %4971 = vmatprep.mubr.bf16.mxu0 0
        %4972 = vmatmul.mubr.bf16.gmra.mrb[0].mxu0 %v3907
        %v4973 = vpop.f32.mrb[0].mxu0
        %v4974 = vadd.f32 %v4813, %v4973
        %v4975 = vpop.f32.mrb[0].mxu0
        %v4976 = vpop.f32.mrb[0].mxu0
        %v4977 = vadd.f32 %v4816, %v4976
        %v4978 = vpop.f32.mrb[0].mxu0
        %4979 = vmatprep.mubr.bf16.mxu0 0
        %4980 = vmatmul.mubr.bf16.gmra.mrb[0].mxu0 %v3910
        %v4981 = vpop.f32.mrb[0].mxu0
        %v4982 = vadd.f32 %v4821, %v4981
        %v4983 = vpop.f32.mrb[0].mxu0
        %v4984 = vpop.f32.mrb[0].mxu0
        %v4985 = vadd.f32 %v4824, %v4984
        %v4986 = vpop.f32.mrb[0].mxu0
        %4987 = vdwg.mxu0
        %s4988 = scalar_lea.vmem [#allocation2], 48
        %v4989 = vld [vmem:[%s4988] sm:$0xff]
        %v4990 = vld [vmem:[%s4988 + $0x8] sm:$0xff]
        %v4991 = vld [vmem:[%s4988 + $0x10] sm:$0xff]
        %v4992 = vld [vmem:[%s4988 + $0x18] sm:$0xff]
        %v4993 = vld [vmem:[%s4988 + $0x20] sm:$0xff]
        %v4994 = vld [vmem:[%s4988 + $0x28] sm:$0xff]
        %v4995 = vld [vmem:[%s4988 + $0x30] sm:$0xff]
        %v4996 = vld [vmem:[%s4988 + $0x38] sm:$0xff]
        %v4997 = vld [vmem:[%s4988 + $0x40] sm:$0xff]
        %v4998 = vld [vmem:[%s4988 + $0x48] sm:$0xff]
        %v4999 = vld [vmem:[%s4988 + $0x50] sm:$0xff]
        %v5000 = vld [vmem:[%s4988 + $0x58] sm:$0xff]
        %v5001 = vld [vmem:[%s4988 + $0x60] sm:$0xff]
        %v5002 = vld [vmem:[%s4988 + $0x68] sm:$0xff]
        %v5003 = vld [vmem:[%s4988 + $0x70] sm:$0xff]
        %v5004 = vld [vmem:[%s4988 + $0x78] sm:$0xff]
        %v5005 = vld [vmem:[%s4988 + $0x80] sm:$0xff]
        %v5006 = vld [vmem:[%s4988 + $0x88] sm:$0xff]
        %v5007 = vld [vmem:[%s4988 + $0x90] sm:$0xff]
        %v5008 = vld [vmem:[%s4988 + $0x98] sm:$0xff]
        %v5009 = vld [vmem:[%s4988 + $0xa0] sm:$0xff]
        %v5010 = vld [vmem:[%s4988 + $0xa8] sm:$0xff]
        %v5011 = vld [vmem:[%s4988 + $0xb0] sm:$0xff]
        %v5012 = vld [vmem:[%s4988 + $0xb8] sm:$0xff]
        %v5013 = vld [vmem:[%s4988 + $0xc0] sm:$0xff]
        %v5014 = vld [vmem:[%s4988 + $0xc8] sm:$0xff]
        %v5015 = vld [vmem:[%s4988 + $0xd0] sm:$0xff]
        %v5016 = vld [vmem:[%s4988 + $0xd8] sm:$0xff]
        %v5017 = vld [vmem:[%s4988 + $0xe0] sm:$0xff]
        %v5018 = vld [vmem:[%s4988 + $0xe8] sm:$0xff]
        %v5019 = vld [vmem:[%s4988 + $0xf0] sm:$0xff]
        %v5020 = vld [vmem:[%s4988 + $0xf8] sm:$0xff]
        %v5021 = vld [vmem:[%s4988 + $0x100] sm:$0xff]
        %v5022 = vld [vmem:[%s4988 + $0x108] sm:$0xff]
        %v5023 = vld [vmem:[%s4988 + $0x110] sm:$0xff]
        %v5024 = vld [vmem:[%s4988 + $0x118] sm:$0xff]
        %v5025 = vld [vmem:[%s4988 + $0x120] sm:$0xff]
        %v5026 = vld [vmem:[%s4988 + $0x128] sm:$0xff]
        %v5027 = vld [vmem:[%s4988 + $0x130] sm:$0xff]
        %v5028 = vld [vmem:[%s4988 + $0x138] sm:$0xff]
        %v5029 = vld [vmem:[%s4988 + $0x140] sm:$0xff]
        %v5030 = vld [vmem:[%s4988 + $0x148] sm:$0xff]
        %v5031 = vld [vmem:[%s4988 + $0x150] sm:$0xff]
        %v5032 = vld [vmem:[%s4988 + $0x158] sm:$0xff]
        %v5033 = vld [vmem:[%s4988 + $0x160] sm:$0xff]
        %v5034 = vld [vmem:[%s4988 + $0x168] sm:$0xff]
        %v5035 = vld [vmem:[%s4988 + $0x170] sm:$0xff]
        %v5036 = vld [vmem:[%s4988 + $0x178] sm:$0xff]
        %s5037 = scalar_lea.vmem %s1, 384
        %v5038 = vld [vmem:[%s5037] sm:$0xf]
        %v5039 = vld [vmem:[%s5037 + $0x4] sm:$0xf]
        %v5040 = vld [vmem:[%s5037 + $0x8] sm:$0xf]
        %v5041 = vld [vmem:[%s5037 + $0xc] sm:$0xf]
        %v5042 = vld [vmem:[%s5037 + $0x10] sm:$0xf]
        %v5043 = vld [vmem:[%s5037 + $0x14] sm:$0xf]
        %v5044 = vld [vmem:[%s5037 + $0x18] sm:$0xf]
        %v5045 = vld [vmem:[%s5037 + $0x1c] sm:$0xf]
        %v5046 = vld [vmem:[%s5037 + $0x20] sm:$0xf]
        %v5047 = vld [vmem:[%s5037 + $0x24] sm:$0xf]
        %v5048 = vld [vmem:[%s5037 + $0x28] sm:$0xf]
        %v5049 = vld [vmem:[%s5037 + $0x2c] sm:$0xf]
        %v5050 = vld [vmem:[%s5037 + $0x30] sm:$0xf]
        %v5051 = vld [vmem:[%s5037 + $0x34] sm:$0xf]
        %v5052 = vld [vmem:[%s5037 + $0x38] sm:$0xf]
        %v5053 = vld [vmem:[%s5037 + $0x3c] sm:$0xf]
        %v5054 = vld [vmem:[%s5037 + $0x40] sm:$0xf]
        %v5055 = vld [vmem:[%s5037 + $0x44] sm:$0xf]
        %v5056 = vld [vmem:[%s5037 + $0x48] sm:$0xf]
        %v5057 = vld [vmem:[%s5037 + $0x4c] sm:$0xf]
        %v5058 = vld [vmem:[%s5037 + $0x50] sm:$0xf]
        %v5059 = vld [vmem:[%s5037 + $0x54] sm:$0xf]
        %v5060 = vld [vmem:[%s5037 + $0x58] sm:$0xf]
        %v5061 = vld [vmem:[%s5037 + $0x5c] sm:$0xf]
        %v5062 = vld [vmem:[%s5037 + $0x60] sm:$0xf]
        %v5063 = vld [vmem:[%s5037 + $0x64] sm:$0xf]
        %v5064 = vld [vmem:[%s5037 + $0x68] sm:$0xf]
        %v5065 = vld [vmem:[%s5037 + $0x6c] sm:$0xf]
        %v5066 = vld [vmem:[%s5037 + $0x70] sm:$0xf]
        %v5067 = vld [vmem:[%s5037 + $0x74] sm:$0xf]
        %v5068 = vld [vmem:[%s5037 + $0x78] sm:$0xf]
        %v5069 = vld [vmem:[%s5037 + $0x7c] sm:$0xf]
        %v5070 = vld [vmem:[%s5037 + $0x80] sm:$0xf]
        %v5071 = vld [vmem:[%s5037 + $0x84] sm:$0xf]
        %v5072 = vld [vmem:[%s5037 + $0x88] sm:$0xf]
        %v5073 = vld [vmem:[%s5037 + $0x8c] sm:$0xf]
        %v5074 = vld [vmem:[%s5037 + $0x90] sm:$0xf]
        %v5075 = vld [vmem:[%s5037 + $0x94] sm:$0xf]
        %v5076 = vld [vmem:[%s5037 + $0x98] sm:$0xf]
        %v5077 = vld [vmem:[%s5037 + $0x9c] sm:$0xf]
        %v5078 = vld [vmem:[%s5037 + $0xa0] sm:$0xf]
        %v5079 = vld [vmem:[%s5037 + $0xa4] sm:$0xf]
        %v5080 = vld [vmem:[%s5037 + $0xa8] sm:$0xf]
        %v5081 = vld [vmem:[%s5037 + $0xac] sm:$0xf]
        %v5082 = vld [vmem:[%s5037 + $0xb0] sm:$0xf]
        %v5083 = vld [vmem:[%s5037 + $0xb4] sm:$0xf]
        %v5084 = vld [vmem:[%s5037 + $0xb8] sm:$0xf]
        %v5085 = vld [vmem:[%s5037 + $0xbc] sm:$0xf]
        %v5134 = vunpack.c.l.b16 %v5038
        %v5135 = vunpack.c.l.b16 %v5039
        %v5136 = vunpack.c.l.b16 %v5040
        %v5137 = vunpack.c.l.b16 %v5041
        %v5138 = vunpack.c.l.b16 %v5042
        %v5139 = vunpack.c.l.b16 %v5043
        %v5140 = vunpack.c.l.b16 %v5044
        %v5141 = vunpack.c.l.b16 %v5045
        %v5142 = vunpack.c.l.b16 %v5046
        %v5143 = vunpack.c.l.b16 %v5047
        %v5144 = vunpack.c.l.b16 %v5048
        %v5145 = vunpack.c.l.b16 %v5049
        %v5146 = vunpack.c.l.b16 %v5050
        %v5147 = vunpack.c.l.b16 %v5051
        %v5148 = vunpack.c.l.b16 %v5052
        %v5149 = vunpack.c.l.b16 %v5053
        %v5150 = vunpack.c.l.b16 %v5054
        %v5151 = vunpack.c.l.b16 %v5055
        %v5152 = vunpack.c.l.b16 %v5056
        %v5153 = vunpack.c.l.b16 %v5057
        %v5154 = vunpack.c.l.b16 %v5058
        %v5155 = vunpack.c.l.b16 %v5059
        %v5156 = vunpack.c.l.b16 %v5060
        %v5157 = vunpack.c.l.b16 %v5061
        %v5158 = vunpack.c.l.b16 %v5062
        %v5159 = vunpack.c.l.b16 %v5063
        %v5160 = vunpack.c.l.b16 %v5064
        %v5161 = vunpack.c.l.b16 %v5065
        %v5162 = vunpack.c.l.b16 %v5066
        %v5163 = vunpack.c.l.b16 %v5067
        %v5164 = vunpack.c.l.b16 %v5068
        %v5165 = vunpack.c.l.b16 %v5069
        %v5166 = vunpack.c.l.b16 %v5070
        %v5167 = vunpack.c.l.b16 %v5071
        %v5168 = vunpack.c.l.b16 %v5072
        %v5169 = vunpack.c.l.b16 %v5073
        %v5170 = vunpack.c.l.b16 %v5074
        %v5171 = vunpack.c.l.b16 %v5075
        %v5172 = vunpack.c.l.b16 %v5076
        %v5173 = vunpack.c.l.b16 %v5077
        %v5174 = vunpack.c.l.b16 %v5078
        %v5175 = vunpack.c.l.b16 %v5079
        %v5176 = vunpack.c.l.b16 %v5080
        %v5177 = vunpack.c.l.b16 %v5081
        %v5178 = vunpack.c.l.b16 %v5082
        %v5179 = vunpack.c.l.b16 %v5083
        %v5180 = vunpack.c.l.b16 %v5084
        %v5181 = vunpack.c.l.b16 %v5085
        %v5182 = vpack.c.b16 %v5135, %v5134
        %v5183 = vpack.c.b16 %v5137, %v5136
        %v5184 = vpack.c.b16 %v5139, %v5138
        %v5185 = vpack.c.b16 %v5141, %v5140
        %v5186 = vpack.c.b16 %v5143, %v5142
        %v5187 = vpack.c.b16 %v5145, %v5144
        %v5188 = vpack.c.b16 %v5147, %v5146
        %v5189 = vpack.c.b16 %v5149, %v5148
        %v5190 = vpack.c.b16 %v5151, %v5150
        %v5191 = vpack.c.b16 %v5153, %v5152
        %v5192 = vpack.c.b16 %v5155, %v5154
        %v5193 = vpack.c.b16 %v5157, %v5156
        %v5194 = vpack.c.b16 %v5159, %v5158
        %v5195 = vpack.c.b16 %v5161, %v5160
        %v5196 = vpack.c.b16 %v5163, %v5162
        %v5197 = vpack.c.b16 %v5165, %v5164
        %v5198 = vpack.c.b16 %v5167, %v5166
        %v5199 = vpack.c.b16 %v5169, %v5168
        %v5200 = vpack.c.b16 %v5171, %v5170
        %v5201 = vpack.c.b16 %v5173, %v5172
        %v5202 = vpack.c.b16 %v5175, %v5174
        %v5203 = vpack.c.b16 %v5177, %v5176
        %v5204 = vpack.c.b16 %v5179, %v5178
        %v5205 = vpack.c.b16 %v5181, %v5180
        %5230 = vmatprep.subr.bf16.mxu0 0
        %5231 = vmatpush1.bf16.msra.mxu0 %v5182
        %5232 = vmatprep.subr.bf16.mxu0 0
        %5233 = vmatpush1.bf16.msra.mxu0 %v5183
        %5234 = vmatprep.subr.bf16.mxu0 0
        %5235 = vmatpush1.bf16.msra.mxu0 %v5184
        %5236 = vmatprep.subr.bf16.mxu0 0
        %5237 = vmatpush1.bf16.msra.mxu0 %v5185
        %5238 = vmatprep.subr.bf16.mxu0 0
        %5239 = vmatpush1.bf16.msra.mxu0 %v5186
        %5240 = vmatprep.subr.bf16.mxu0 0
        %5241 = vmatpush1.bf16.msra.mxu0 %v5187
        %5242 = vmatprep.subr.bf16.mxu0 0
        %5243 = vmatpush1.bf16.msra.mxu0 %v5188
        %5244 = vmatprep.subr.bf16.mxu0 0
        %5245 = vmatpush1.bf16.msra.mxu0 %v5189
        %5246 = vmatprep.subr.bf16.mxu0 0
        %5247 = vmatpush1.bf16.msra.mxu0 %v5190
        %5248 = vmatprep.subr.bf16.mxu0 0
        %5249 = vmatpush1.bf16.msra.mxu0 %v5191
        %5250 = vmatprep.subr.bf16.mxu0 0
        %5251 = vmatpush1.bf16.msra.mxu0 %v5192
        %5252 = vmatprep.subr.bf16.mxu0 0
        %5253 = vmatpush1.bf16.msra.mxu0 %v5193
        %5254 = vmatprep.subr.bf16.mxu0 0
        %5255 = vmatpush1.bf16.msra.mxu0 %v5194
        %5256 = vmatprep.subr.bf16.mxu0 0
        %5257 = vmatpush1.bf16.msra.mxu0 %v5195
        %5258 = vmatprep.subr.bf16.mxu0 0
        %5259 = vmatpush1.bf16.msra.mxu0 %v5196
        %5260 = vmatprep.subr.bf16.mxu0 0
        %5261 = vmatpush1.bf16.msra.mxu0 %v5197
        %5262 = vmatprep.mubr.bf16.mxu0 %v4990
        %5263 = vmatmul.mubr.bf16.gmra.mrb[0].mxu0 %v4989
        %v5264 = vpop.f32.mrb[0].mxu0
        %v5265 = vadd.f32 0.0, %v5264
        %v5266 = vpop.f32.mrb[0].mxu0
        %v5267 = vpop.f32.mrb[0].mxu0
        %v5268 = vadd.f32 0.0, %v5267
        %v5269 = vpop.f32.mrb[0].mxu0
        %5270 = vmatprep.mubr.bf16.mxu0 %v4993
        %5271 = vmatmul.mubr.bf16.gmra.mrb[0].mxu0 %v4992
        %v5272 = vpop.f32.mrb[0].mxu0
        %v5273 = vadd.f32 0.0, %v5272
        %v5274 = vpop.f32.mrb[0].mxu0
        %v5275 = vpop.f32.mrb[0].mxu0
        %v5276 = vadd.f32 0.0, %v5275
        %v5277 = vpop.f32.mrb[0].mxu0
        %5278 = vmatprep.mubr.bf16.mxu0 %v4996
        %5279 = vmatmul.mubr.bf16.gmra.mrb[0].mxu0 %v4995
        %v5280 = vpop.f32.mrb[0].mxu0
        %v5281 = vadd.f32 0.0, %v5280
        %v5282 = vpop.f32.mrb[0].mxu0
        %v5283 = vpop.f32.mrb[0].mxu0
        %v5284 = vadd.f32 0.0, %v5283
        %v5285 = vpop.f32.mrb[0].mxu0
        %5286 = vmatprep.mubr.bf16.mxu0 %v4999
        %5287 = vmatmul.mubr.bf16.gmra.mrb[0].mxu0 %v4998
        %v5288 = vpop.f32.mrb[0].mxu0
        %v5289 = vadd.f32 0.0, %v5288
        %v5290 = vpop.f32.mrb[0].mxu0
        %v5291 = vpop.f32.mrb[0].mxu0
        %v5292 = vadd.f32 0.0, %v5291
        %v5293 = vpop.f32.mrb[0].mxu0
        %5294 = vmatprep.mubr.bf16.mxu0 %v5002
        %5295 = vmatmul.mubr.bf16.gmra.mrb[0].mxu0 %v5001
        %v5296 = vpop.f32.mrb[0].mxu0
        %v5297 = vadd.f32 0.0, %v5296
        %v5298 = vpop.f32.mrb[0].mxu0
        %v5299 = vpop.f32.mrb[0].mxu0
        %v5300 = vadd.f32 0.0, %v5299
        %v5301 = vpop.f32.mrb[0].mxu0
        %5302 = vmatprep.mubr.bf16.mxu0 %v5005
        %5303 = vmatmul.mubr.bf16.gmra.mrb[0].mxu0 %v5004
        %v5304 = vpop.f32.mrb[0].mxu0
        %v5305 = vadd.f32 0.0, %v5304
        %v5306 = vpop.f32.mrb[0].mxu0
        %v5307 = vpop.f32.mrb[0].mxu0
        %v5308 = vadd.f32 0.0, %v5307
        %v5309 = vpop.f32.mrb[0].mxu0
        %5310 = vmatprep.mubr.bf16.mxu0 %v5008
        %5311 = vmatmul.mubr.bf16.gmra.mrb[0].mxu0 %v5007
        %v5312 = vpop.f32.mrb[0].mxu0
        %v5313 = vadd.f32 0.0, %v5312
        %v5314 = vpop.f32.mrb[0].mxu0
        %v5315 = vpop.f32.mrb[0].mxu0
        %v5316 = vadd.f32 0.0, %v5315
        %v5317 = vpop.f32.mrb[0].mxu0
        %5318 = vmatprep.mubr.bf16.mxu0 %v5011
        %5319 = vmatmul.mubr.bf16.gmra.mrb[0].mxu0 %v5010
        %v5320 = vpop.f32.mrb[0].mxu0
        %v5321 = vadd.f32 0.0, %v5320
        %v5322 = vpop.f32.mrb[0].mxu0
        %v5323 = vpop.f32.mrb[0].mxu0
        %v5324 = vadd.f32 0.0, %v5323
        %v5325 = vpop.f32.mrb[0].mxu0
        %5326 = vmatprep.mubr.bf16.mxu0 %v5014
        %5327 = vmatmul.mubr.bf16.gmra.mrb[0].mxu0 %v5013
        %v5328 = vpop.f32.mrb[0].mxu0
        %v5329 = vadd.f32 0.0, %v5328
        %v5330 = vpop.f32.mrb[0].mxu0
        %v5331 = vpop.f32.mrb[0].mxu0
        %v5332 = vadd.f32 0.0, %v5331
        %v5333 = vpop.f32.mrb[0].mxu0
        %5334 = vmatprep.mubr.bf16.mxu0 %v5017
        %5335 = vmatmul.mubr.bf16.gmra.mrb[0].mxu0 %v5016
        %v5336 = vpop.f32.mrb[0].mxu0
        %v5337 = vadd.f32 0.0, %v5336
        %v5338 = vpop.f32.mrb[0].mxu0
        %v5339 = vpop.f32.mrb[0].mxu0
        %v5340 = vadd.f32 0.0, %v5339
        %v5341 = vpop.f32.mrb[0].mxu0
        %5342 = vmatprep.mubr.bf16.mxu0 %v5020
        %5343 = vmatmul.mubr.bf16.gmra.mrb[0].mxu0 %v5019
        %v5344 = vpop.f32.mrb[0].mxu0
        %v5345 = vadd.f32 0.0, %v5344
        %v5346 = vpop.f32.mrb[0].mxu0
        %v5347 = vpop.f32.mrb[0].mxu0
        %v5348 = vadd.f32 0.0, %v5347
        %v5349 = vpop.f32.mrb[0].mxu0
        %5350 = vmatprep.mubr.bf16.mxu0 %v5023
        %5351 = vmatmul.mubr.bf16.gmra.mrb[0].mxu0 %v5022
        %v5352 = vpop.f32.mrb[0].mxu0
        %v5353 = vadd.f32 0.0, %v5352
        %v5354 = vpop.f32.mrb[0].mxu0
        %v5355 = vpop.f32.mrb[0].mxu0
        %v5356 = vadd.f32 0.0, %v5355
        %v5357 = vpop.f32.mrb[0].mxu0
        %5358 = vmatprep.mubr.bf16.mxu0 %v5026
        %5359 = vmatmul.mubr.bf16.gmra.mrb[0].mxu0 %v5025
        %v5360 = vpop.f32.mrb[0].mxu0
        %v5361 = vadd.f32 0.0, %v5360
        %v5362 = vpop.f32.mrb[0].mxu0
        %v5363 = vpop.f32.mrb[0].mxu0
        %v5364 = vadd.f32 0.0, %v5363
        %v5365 = vpop.f32.mrb[0].mxu0
        %5366 = vmatprep.mubr.bf16.mxu0 %v5029
        %5367 = vmatmul.mubr.bf16.gmra.mrb[0].mxu0 %v5028
        %v5368 = vpop.f32.mrb[0].mxu0
        %v5369 = vadd.f32 0.0, %v5368
        %v5370 = vpop.f32.mrb[0].mxu0
        %v5371 = vpop.f32.mrb[0].mxu0
        %v5372 = vadd.f32 0.0, %v5371
        %v5373 = vpop.f32.mrb[0].mxu0
        %5374 = vmatprep.mubr.bf16.mxu0 %v5032
        %5375 = vmatmul.mubr.bf16.gmra.mrb[0].mxu0 %v5031
        %v5376 = vpop.f32.mrb[0].mxu0
        %v5377 = vadd.f32 0.0, %v5376
        %v5378 = vpop.f32.mrb[0].mxu0
        %v5379 = vpop.f32.mrb[0].mxu0
        %v5380 = vadd.f32 0.0, %v5379
        %v5381 = vpop.f32.mrb[0].mxu0
        %5382 = vmatprep.mubr.bf16.mxu0 %v5035
        %5383 = vmatmul.mubr.bf16.gmra.mrb[0].mxu0 %v5034
        %v5384 = vpop.f32.mrb[0].mxu0
        %v5385 = vadd.f32 0.0, %v5384
        %v5386 = vpop.f32.mrb[0].mxu0
        %v5387 = vpop.f32.mrb[0].mxu0
        %v5388 = vadd.f32 0.0, %v5387
        %v5389 = vpop.f32.mrb[0].mxu0
        %5390 = vdwg.mxu0
        %5391 = vmatprep.subr.bf16.mxu0 0
        %5392 = vmatpush1.bf16.msra.mxu0 %v5198
        %5393 = vmatprep.subr.bf16.mxu0 0
        %5394 = vmatpush1.bf16.msra.mxu0 %v5199
        %5395 = vmatprep.subr.bf16.mxu0 0
        %5396 = vmatpush1.bf16.msra.mxu0 %v5200
        %5397 = vmatprep.subr.bf16.mxu0 0
        %5398 = vmatpush1.bf16.msra.mxu0 %v5201
        %5399 = vmatprep.subr.bf16.mxu0 0
        %5400 = vmatpush1.bf16.msra.mxu0 %v5202
        %5401 = vmatprep.subr.bf16.mxu0 0
        %5402 = vmatpush1.bf16.msra.mxu0 %v5203
        %5403 = vmatprep.subr.bf16.mxu0 0
        %5404 = vmatpush1.bf16.msra.mxu0 %v5204
        %5405 = vmatprep.subr.bf16.mxu0 0
        %5406 = vmatpush1.bf16.msra.mxu0 %v5205
        %5407 = vmatprep.subr.bf16.mxu0 0
        %5408 = vmatpush1.bf16.msra.mxu0 0
        %5409 = vmatprep.subr.bf16.mxu0 0
        %5410 = vmatpush1.bf16.msra.mxu0 0
        %5411 = vmatprep.subr.bf16.mxu0 0
        %5412 = vmatpush1.bf16.msra.mxu0 0
        %5413 = vmatprep.subr.bf16.mxu0 0
        %5414 = vmatpush1.bf16.msra.mxu0 0
        %5415 = vmatprep.subr.bf16.mxu0 0
        %5416 = vmatpush1.bf16.msra.mxu0 0
        %5417 = vmatprep.subr.bf16.mxu0 0
        %5418 = vmatpush1.bf16.msra.mxu0 0
        %5419 = vmatprep.subr.bf16.mxu0 0
        %5420 = vmatpush1.bf16.msra.mxu0 0
        %5421 = vmatprep.subr.bf16.mxu0 0
        %5422 = vmatpush1.bf16.msra.mxu0 0
        %5423 = vmatprep.mubr.bf16.mxu0 0
        %5424 = vmatmul.mubr.bf16.gmra.mrb[0].mxu0 %v4991
        %v5425 = vpop.f32.mrb[0].mxu0
        %v5426 = vadd.f32 %v5265, %v5425
        %v5427 = vpop.f32.mrb[0].mxu0
        %v5428 = vpop.f32.mrb[0].mxu0
        %v5429 = vadd.f32 %v5268, %v5428
        %v5430 = vpop.f32.mrb[0].mxu0
        %5431 = vmatprep.mubr.bf16.mxu0 0
        %5432 = vmatmul.mubr.bf16.gmra.mrb[0].mxu0 %v4994
        %v5433 = vpop.f32.mrb[0].mxu0
        %v5434 = vadd.f32 %v5273, %v5433
        %v5435 = vpop.f32.mrb[0].mxu0
        %v5436 = vpop.f32.mrb[0].mxu0
        %v5437 = vadd.f32 %v5276, %v5436
        %v5438 = vpop.f32.mrb[0].mxu0
        %5439 = vmatprep.mubr.bf16.mxu0 0
        %5440 = vmatmul.mubr.bf16.gmra.mrb[0].mxu0 %v4997
        %v5441 = vpop.f32.mrb[0].mxu0
        %v5442 = vadd.f32 %v5281, %v5441
        %v5443 = vpop.f32.mrb[0].mxu0
        %v5444 = vpop.f32.mrb[0].mxu0
        %v5445 = vadd.f32 %v5284, %v5444
        %v5446 = vpop.f32.mrb[0].mxu0
        %5447 = vmatprep.mubr.bf16.mxu0 0
        %5448 = vmatmul.mubr.bf16.gmra.mrb[0].mxu0 %v5000
        %v5449 = vpop.f32.mrb[0].mxu0
        %v5450 = vadd.f32 %v5289, %v5449
        %v5451 = vpop.f32.mrb[0].mxu0
        %v5452 = vpop.f32.mrb[0].mxu0
        %v5453 = vadd.f32 %v5292, %v5452
        %v5454 = vpop.f32.mrb[0].mxu0
        %5455 = vmatprep.mubr.bf16.mxu0 0
        %5456 = vmatmul.mubr.bf16.gmra.mrb[0].mxu0 %v5003
        %v5457 = vpop.f32.mrb[0].mxu0
        %v5458 = vadd.f32 %v5297, %v5457
        %v5459 = vpop.f32.mrb[0].mxu0
        %v5460 = vpop.f32.mrb[0].mxu0
        %v5461 = vadd.f32 %v5300, %v5460
        %v5462 = vpop.f32.mrb[0].mxu0
        %5463 = vmatprep.mubr.bf16.mxu0 0
        %5464 = vmatmul.mubr.bf16.gmra.mrb[0].mxu0 %v5006
        %v5465 = vpop.f32.mrb[0].mxu0
        %v5466 = vadd.f32 %v5305, %v5465
        %v5467 = vpop.f32.mrb[0].mxu0
        %v5468 = vpop.f32.mrb[0].mxu0
        %v5469 = vadd.f32 %v5308, %v5468
        %v5470 = vpop.f32.mrb[0].mxu0
        %5471 = vmatprep.mubr.bf16.mxu0 0
        %5472 = vmatmul.mubr.bf16.gmra.mrb[0].mxu0 %v5009
        %v5473 = vpop.f32.mrb[0].mxu0
        %v5474 = vadd.f32 %v5313, %v5473
        %v5475 = vpop.f32.mrb[0].mxu0
        %v5476 = vpop.f32.mrb[0].mxu0
        %v5477 = vadd.f32 %v5316, %v5476
        %v5478 = vpop.f32.mrb[0].mxu0
        %5479 = vmatprep.mubr.bf16.mxu0 0
        %5480 = vmatmul.mubr.bf16.gmra.mrb[0].mxu0 %v5012
        %v5481 = vpop.f32.mrb[0].mxu0
        %v5482 = vadd.f32 %v5321, %v5481
        %v5483 = vpop.f32.mrb[0].mxu0
        %v5484 = vpop.f32.mrb[0].mxu0
        %v5485 = vadd.f32 %v5324, %v5484
        %v5486 = vpop.f32.mrb[0].mxu0
        %5487 = vmatprep.mubr.bf16.mxu0 0
        %5488 = vmatmul.mubr.bf16.gmra.mrb[0].mxu0 %v5015
        %v5489 = vpop.f32.mrb[0].mxu0
        %v5490 = vadd.f32 %v5329, %v5489
        %v5491 = vpop.f32.mrb[0].mxu0
        %v5492 = vpop.f32.mrb[0].mxu0
        %v5493 = vadd.f32 %v5332, %v5492
        %v5494 = vpop.f32.mrb[0].mxu0
        %5495 = vmatprep.mubr.bf16.mxu0 0
        %5496 = vmatmul.mubr.bf16.gmra.mrb[0].mxu0 %v5018
        %v5497 = vpop.f32.mrb[0].mxu0
        %v5498 = vadd.f32 %v5337, %v5497
        %v5499 = vpop.f32.mrb[0].mxu0
        %v5500 = vpop.f32.mrb[0].mxu0
        %v5501 = vadd.f32 %v5340, %v5500
        %v5502 = vpop.f32.mrb[0].mxu0
        %5503 = vmatprep.mubr.bf16.mxu0 0
        %5504 = vmatmul.mubr.bf16.gmra.mrb[0].mxu0 %v5021
        %v5505 = vpop.f32.mrb[0].mxu0
        %v5506 = vadd.f32 %v5345, %v5505
        %v5507 = vpop.f32.mrb[0].mxu0
        %v5508 = vpop.f32.mrb[0].mxu0
        %v5509 = vadd.f32 %v5348, %v5508
        %v5510 = vpop.f32.mrb[0].mxu0
        %5511 = vmatprep.mubr.bf16.mxu0 0
        %5512 = vmatmul.mubr.bf16.gmra.mrb[0].mxu0 %v5024
        %v5513 = vpop.f32.mrb[0].mxu0
        %v5514 = vadd.f32 %v5353, %v5513
        %v5515 = vpop.f32.mrb[0].mxu0
        %v5516 = vpop.f32.mrb[0].mxu0
        %v5517 = vadd.f32 %v5356, %v5516
        %v5518 = vpop.f32.mrb[0].mxu0
        %5519 = vmatprep.mubr.bf16.mxu0 0
        %5520 = vmatmul.mubr.bf16.gmra.mrb[0].mxu0 %v5027
        %v5521 = vpop.f32.mrb[0].mxu0
        %v5522 = vadd.f32 %v5361, %v5521
        %v5523 = vpop.f32.mrb[0].mxu0
        %v5524 = vpop.f32.mrb[0].mxu0
        %v5525 = vadd.f32 %v5364, %v5524
        %v5526 = vpop.f32.mrb[0].mxu0
        %5527 = vmatprep.mubr.bf16.mxu0 0
        %5528 = vmatmul.mubr.bf16.gmra.mrb[0].mxu0 %v5030
        %v5529 = vpop.f32.mrb[0].mxu0
        %v5530 = vadd.f32 %v5369, %v5529
        %v5531 = vpop.f32.mrb[0].mxu0
        %v5532 = vpop.f32.mrb[0].mxu0
        %v5533 = vadd.f32 %v5372, %v5532
        %v5534 = vpop.f32.mrb[0].mxu0
        %5535 = vmatprep.mubr.bf16.mxu0 0
        %5536 = vmatmul.mubr.bf16.gmra.mrb[0].mxu0 %v5033
        %v5537 = vpop.f32.mrb[0].mxu0
        %v5538 = vadd.f32 %v5377, %v5537
        %v5539 = vpop.f32.mrb[0].mxu0
        %v5540 = vpop.f32.mrb[0].mxu0
        %v5541 = vadd.f32 %v5380, %v5540
        %v5542 = vpop.f32.mrb[0].mxu0
        %5543 = vmatprep.mubr.bf16.mxu0 0
        %5544 = vmatmul.mubr.bf16.gmra.mrb[0].mxu0 %v5036
        %v5545 = vpop.f32.mrb[0].mxu0
        %v5546 = vadd.f32 %v5385, %v5545
        %v5547 = vpop.f32.mrb[0].mxu0
        %v5548 = vpop.f32.mrb[0].mxu0
        %v5549 = vadd.f32 %v5388, %v5548
        %v5550 = vpop.f32.mrb[0].mxu0
        %5551 = vdwg.mxu0
        %v5552 = vadd.f32 %v4862, %v5426
        %v5553 = vadd.f32 %v4865, %v5429
        %v5554 = vadd.f32 %v4870, %v5434
        %v5555 = vadd.f32 %v4873, %v5437
        %v5556 = vadd.f32 %v4878, %v5442
        %v5557 = vadd.f32 %v4881, %v5445
        %v5558 = vadd.f32 %v4886, %v5450
        %v5559 = vadd.f32 %v4889, %v5453
        %v5560 = vadd.f32 %v4894, %v5458
        %v5561 = vadd.f32 %v4897, %v5461
        %v5562 = vadd.f32 %v4902, %v5466
        %v5563 = vadd.f32 %v4905, %v5469
        %v5564 = vadd.f32 %v4910, %v5474
        %v5565 = vadd.f32 %v4913, %v5477
        %v5566 = vadd.f32 %v4918, %v5482
        %v5567 = vadd.f32 %v4921, %v5485
        %v5568 = vadd.f32 %v4926, %v5490
        %v5569 = vadd.f32 %v4929, %v5493
        %v5570 = vadd.f32 %v4934, %v5498
        %v5571 = vadd.f32 %v4937, %v5501
        %v5572 = vadd.f32 %v4942, %v5506
        %v5573 = vadd.f32 %v4945, %v5509
        %v5574 = vadd.f32 %v4950, %v5514
        %v5575 = vadd.f32 %v4953, %v5517
        %v5576 = vadd.f32 %v4958, %v5522
        %v5577 = vadd.f32 %v4961, %v5525
        %v5578 = vadd.f32 %v4966, %v5530
        %v5579 = vadd.f32 %v4969, %v5533
        %v5580 = vadd.f32 %v4974, %v5538
        %v5581 = vadd.f32 %v4977, %v5541
        %v5582 = vadd.f32 %v4982, %v5546
        %v5583 = vadd.f32 %v4985, %v5549
        %v5584 = vmax.f32 %v5552, 0.0
        %v5585 = vmax.f32 %v5553, 0.0
        %v5586 = vmax.f32 %v5554, 0.0
        %v5587 = vmax.f32 %v5555, 0.0
        %v5588 = vmax.f32 %v5556, 0.0
        %v5589 = vmax.f32 %v5557, 0.0
        %v5590 = vmax.f32 %v5558, 0.0
        %v5591 = vmax.f32 %v5559, 0.0
        %v5592 = vmax.f32 %v5560, 0.0
        %v5593 = vmax.f32 %v5561, 0.0
        %v5594 = vmax.f32 %v5562, 0.0
        %v5595 = vmax.f32 %v5563, 0.0
        %v5596 = vmax.f32 %v5564, 0.0
        %v5597 = vmax.f32 %v5565, 0.0
        %v5598 = vmax.f32 %v5566, 0.0
        %v5599 = vmax.f32 %v5567, 0.0
        %v5600 = vmax.f32 %v5568, 0.0
        %v5601 = vmax.f32 %v5569, 0.0
        %v5602 = vmax.f32 %v5570, 0.0
        %v5603 = vmax.f32 %v5571, 0.0
        %v5604 = vmax.f32 %v5572, 0.0
        %v5605 = vmax.f32 %v5573, 0.0
        %v5606 = vmax.f32 %v5574, 0.0
        %v5607 = vmax.f32 %v5575, 0.0
        %v5608 = vmax.f32 %v5576, 0.0
        %v5609 = vmax.f32 %v5577, 0.0
        %v5610 = vmax.f32 %v5578, 0.0
        %v5611 = vmax.f32 %v5579, 0.0
        %v5612 = vmax.f32 %v5580, 0.0
        %v5613 = vmax.f32 %v5581, 0.0
        %v5614 = vmax.f32 %v5582, 0.0
        %v5615 = vmax.f32 %v5583, 0.0
        %5616 = vst [vmem:[%s136] sm:$0xff] %v5584
        %5617 = vst [vmem:[%s136 + $0x8] sm:$0xff] %v5585
        %5618 = vst [vmem:[%s136 + $0x10] sm:$0xff] %v5586
        %5619 = vst [vmem:[%s136 + $0x18] sm:$0xff] %v5587
        %5620 = vst [vmem:[%s136 + $0x20] sm:$0xff] %v5588
        %5621 = vst [vmem:[%s136 + $0x28] sm:$0xff] %v5589
        %5622 = vst [vmem:[%s136 + $0x30] sm:$0xff] %v5590
        %5623 = vst [vmem:[%s136 + $0x38] sm:$0xff] %v5591
        %5624 = vst [vmem:[%s136 + $0x40] sm:$0xff] %v5592
        %5625 = vst [vmem:[%s136 + $0x48] sm:$0xff] %v5593
        %5626 = vst [vmem:[%s136 + $0x50] sm:$0xff] %v5594
        %5627 = vst [vmem:[%s136 + $0x58] sm:$0xff] %v5595
        %5628 = vst [vmem:[%s136 + $0x60] sm:$0xff] %v5596
        %5629 = vst [vmem:[%s136 + $0x68] sm:$0xff] %v5597
        %5630 = vst [vmem:[%s136 + $0x70] sm:$0xff] %v5598
        %5631 = vst [vmem:[%s136 + $0x78] sm:$0xff] %v5599
        %5632 = vst [vmem:[%s136 + $0x80] sm:$0xff] %v5600
        %5633 = vst [vmem:[%s136 + $0x88] sm:$0xff] %v5601
        %5634 = vst [vmem:[%s136 + $0x90] sm:$0xff] %v5602
        %5635 = vst [vmem:[%s136 + $0x98] sm:$0xff] %v5603
        %5636 = vst [vmem:[%s136 + $0xa0] sm:$0xff] %v5604
        %5637 = vst [vmem:[%s136 + $0xa8] sm:$0xff] %v5605
        %5638 = vst [vmem:[%s136 + $0xb0] sm:$0xff] %v5606
        %5639 = vst [vmem:[%s136 + $0xb8] sm:$0xff] %v5607
        %5640 = vst [vmem:[%s136 + $0xc0] sm:$0xff] %v5608
        %5641 = vst [vmem:[%s136 + $0xc8] sm:$0xff] %v5609
        %5642 = vst [vmem:[%s136 + $0xd0] sm:$0xff] %v5610
        %5643 = vst [vmem:[%s136 + $0xd8] sm:$0xff] %v5611
        %5644 = vst [vmem:[%s136 + $0xe0] sm:$0xff] %v5612
        %5645 = vst [vmem:[%s136 + $0xe8] sm:$0xff] %v5613
        %5646 = vst [vmem:[%s136 + $0xf0] sm:$0xff] %v5614
        %5647 = vst [vmem:[%s136 + $0xf8] sm:$0xff] %v5615
        %s5648 = sand.u32 %s71, 1
        %s5649 = scalar_lea.sflag [#allocation4], %s5648
        %s5650 = sand.u32 %s71, 1
        %s5651 = smul.addr %s5650, 256
        %s5652 = scalar_lea.vmem [#allocation3], %s5651
        // Predicated region
        $region29: #{upsample_conv_relu.1} parent=27 // pred_check
          %p5653 = pneg %p81
        $region30: #{upsample_conv_relu.1} parent=27 // pred_check_branch
          %5655 = sbr.rel (%p5653) target = $region32
        $region31: #{upsample_conv_relu.1} parent=27 // pred_region
          %s5657 = ssub.s32 4096, 4096
          %5658 = vsyncadd %s5649, %s5657
          %s5659 = smul.addr %s16, 32
          %s5660 = smul.addr %s5659, 128
          %s5661 = scalar_lea.hbm %s2, %s5660
          %s5662 = sshll.u32 %s5652, 4
          %s5663 = int_to_ptr.vmem [resolvable:$true] %s5662
          %5668 = dma.vmem_to_hbm [thread:$0]  %s5663, 4096, %s5661, %s5649, 128, 128, 8
        $region32: #{upsample_conv_relu.1} parent=27 // pred_fallthru
          _
      $region28: #{upsample_conv_relu.1} parent=5 // pred_fallthru
        _
      %p5669 = scmp.le.s32.totalorder 2, %s11
      // Predicated region
      $region33: #{upsample_conv_relu.1} parent=5 // pred_check
        %p5670 = pneg %p5669
      $region34: #{upsample_conv_relu.1} parent=5 // pred_check_branch
        %5672 = sbr.rel (%p5670) target = $region36
      $region35: #{upsample_conv_relu.1} parent=5 // pred_region
        %s5673 = ssub.s32 %s11, 2
        // Predicated region
        $region37: #{upsample_conv_relu.1} parent=35 // pred_check
          %p5674 = pneg %p87
        $region38: #{upsample_conv_relu.1} parent=35 // pred_check_branch
          %5676 = sbr.rel (%p5674) target = $region40
        $region39: #{upsample_conv_relu.1} parent=35 // pred_region
          %s5677 = sand.u32 %s72, 1
          %s5678 = scalar_lea.sflag [#allocation4], %s5677
          %s5679 = sand.u32 %s72, 1
          %s5680 = smul.addr %s5679, 256
          %s5681 = scalar_lea.vmem [#allocation3], %s5680
          %5682 = dma.done %s5678, 4096
        $region40: #{upsample_conv_relu.1} parent=35 // pred_fallthru
          _
      $region36: #{upsample_conv_relu.1} parent=5 // pred_fallthru
        _
    $region6: #{upsample_conv_relu.1} parent=1 // loop_footer
      %s15 = sadd.s32 1, %s11
    $region7: #{upsample_conv_relu.1} parent=1 // loop_footer_branch
      %10 = sbr.rel target = $region3
    $region8: #{upsample_conv_relu.1} parent=1 // loop_exit
      _
    %5683 = vsyncpa [#allocation4], 1
    %s5684 = scalar_lea.sflag [#allocation4], 1
    %5685 = vsyncpa %s5684, 1

</llo_original>
